<compile_context>
chip_gen: v6e
topology: v6e:2x2x1
jax: 0.10.0
libtpu: 0.0.40
codegen_flags: <defaults>
</compile_context>

<pallas_src>
import functools

import jax
import jax.numpy as jnp
import numpy as np
from jax.experimental import pallas as pl
from jax.experimental.pallas import tpu as pltpu


# ----------------------------------------------------------------------------
# Pallas kernel: full 5-layer GCN forward on one group of G packed graphs.
# ----------------------------------------------------------------------------
def _gcn_forward_kernel(a_ref, x_ref, w1_ref, wh_ref, b_ref, o_ref):
    G, N, _ = a_ref.shape
    C = o_ref.shape[-1]
    GN = G * N

    a = a_ref[...]                      # (G, N, N)  bf16 per-graph adjacency blocks
    h = x_ref[...].reshape(GN, -1)      # (GN, Cin)  bf16 node features (pre-cast)
    b = b_ref[...]                      # (5, C)     f32 biases (layer 5 zero-padded)

    def layer(h_bf16, w, bias_row, relu):
        # GCNConv: A_hat @ (H @ W) + b.  bf16 MXU operands, f32 accumulation,
        # single bf16 cast on the layer output.
        hw = jnp.dot(h_bf16, w, preferred_element_type=jnp.float32)      # (GN, C) f32
        hw3 = hw.astype(jnp.bfloat16).reshape(G, N, C)
        # Block-diagonal aggregation as a batched per-graph matmul (reshapes are
        # (8,128)/bf16-tile aligned: N=16 rows per graph block).
        ah = jnp.einsum('gnm,gmc->gnc', a, hw3,
                        preferred_element_type=jnp.float32).reshape(GN, C)
        out = ah + bias_row
        if relu:
            out = jnp.maximum(out, 0.0)
        return out.astype(jnp.bfloat16)

    h = layer(h, w1_ref[...], b[0:1, :], relu=True)
    h = layer(h, wh_ref[0],   b[1:2, :], relu=True)
    h = layer(h, wh_ref[1],   b[2:3, :], relu=True)
    h = layer(h, wh_ref[2],   b[3:4, :], relu=True)
    h = layer(h, wh_ref[3],   b[4:5, :], relu=False)
    o_ref[...] = h.reshape(G, N, C)     # lane-dense full-width bf16 store


@functools.partial(jax.jit, static_argnames=("out_channels", "group_size"))
def gcn_forward_pallas(a_hat_b, x_b, w1, wh, b_all, *, out_channels, group_size):
    """a_hat_b: [B, N, N] f32, x_b: [B, N, Cin] f32,
    w1: [Cin, C] bf16, wh: [4, C, C] bf16, b_all: [5, C] f32.
    Returns [B, N, out_channels] f32."""
    B, N, _ = a_hat_b.shape
    Cin = x_b.shape[-1]
    C = wh.shape[-1]                     # padded hidden / output width (128)
    G = group_size
    assert B % G == 0, "batch must be a multiple of the group size"
    NG = B // G
    GN = G * N

    # Per-graph adjacency blocks and node features, both bf16 (halves DMA).
    a_blk = a_hat_b.reshape(NG, G, N, N).astype(jnp.bfloat16)
    x_g = x_b.reshape(NG, G, N, Cin).astype(jnp.bfloat16)

    flops = 2 * NG * (GN * Cin * C + 4 * GN * C * C + 5 * G * N * N * C)
    bytes_accessed = (a_blk.size * 2 + x_g.size * 2 + w1.size * 2 +
                      wh.size * 2 + b_all.size * 4 + NG * GN * C * 2)

    # VMEM budget: double-buffered streamed blocks + resident weights.  v7x has
    # only 64 MiB physical / 32 MiB default-scoped VMEM per TensorCore.
    vmem_limit = 32 * 1024 * 1024
    step_bytes = (2 * 2 * (G * N * N + GN * Cin + GN * C)   # A/X/out, 2 buffers, bf16
                  + 2 * (w1.size + wh.size) + 4 * b_all.size)
    assert step_bytes < vmem_limit // 2, "re-derive group_size for this VMEM budget"

    out = pl.pallas_call(
        _gcn_forward_kernel,
        out_shape=jax.ShapeDtypeStruct((NG, G, N, C), jnp.bfloat16),
        grid_spec=pltpu.PrefetchScalarGridSpec(
            num_scalar_prefetch=0,
            grid=(NG,),
            in_specs=[
                pl.BlockSpec((pl.Squeezed(), G, N, N),   lambda g: (g, 0, 0, 0)),  # A blocks
                pl.BlockSpec((pl.Squeezed(), G, N, Cin), lambda g: (g, 0, 0, 0)),  # X
                pl.BlockSpec((Cin, C),   lambda g: (0, 0)),        # W1 (VMEM-resident)
                pl.BlockSpec((4, C, C),  lambda g: (0, 0, 0)),     # W2..W5 (resident)
                pl.BlockSpec((5, C),     lambda g: (0, 0)),        # biases (resident)
            ],
            out_specs=pl.BlockSpec((pl.Squeezed(), G, N, C), lambda g: (g, 0, 0, 0)),
        ),
        compiler_params=pltpu.CompilerParams(
            dimension_semantics=("parallel",),            # v7x dual-TC split
            vmem_limit_bytes=vmem_limit),
        cost_estimate=pl.CostEstimate(
            flops=int(flops), transcendentals=0,
            bytes_accessed=int(bytes_accessed)),
    )(a_blk, x_g, w1, wh, b_all)

    # Un-pack groups, drop the zero-padded output lanes, upcast for downstream.
    return out.reshape(B, N, C)[..., :out_channels].astype(jnp.float32)


# ----------------------------------------------------------------------------
# Plain-JAX glue: GCN normalization (A_hat) and deterministic parameter init.
# TODO(synk): the edge_index -> dense-A_hat scatter (gcn_norm) stays in plain
# JAX; a scalar-prefetch sparse-aggregation kernel would replace it for large N.
# ----------------------------------------------------------------------------
def build_gcn_norm_adjacency(edge_index, num_nodes):
    """Dense normalized adjacency matching PyG GCNConv defaults:
    add self-loops, deg = in-degree, norm = d^-1/2[src] * d^-1/2[dst],
    aggregation out[dst] += norm * x[src]."""
    row, col = edge_index[0], edge_index[1]          # row = source, col = target
    loop = jnp.arange(num_nodes, dtype=edge_index.dtype)
    row = jnp.concatenate([row, loop])
    col = jnp.concatenate([col, loop])

    deg = jnp.zeros((num_nodes,), jnp.float32).at[col].add(1.0)
    deg_inv_sqrt = jnp.where(deg > 0, jax.lax.rsqrt(deg), 0.0)
    norm = deg_inv_sqrt[row] * deg_inv_sqrt[col]

    a_hat = jnp.zeros((num_nodes, num_nodes), jnp.float32).at[col, row].add(norm)
    return a_hat


def init_params(key, in_channels=384, out_channels=50, gcn_channels=128):
    """Packed params: W1 [Cin,128] bf16, W_hidden [4,128,128] bf16 (W5 zero-padded
    from 50 to 128 cols), biases [5,128] f32 (b5 zero-padded).
    NOTE: if weights are ever loaded from a checkpoint instead, the zero-padding
    of W5/b5 to 128 output lanes must be re-applied."""
    c_pad = gcn_channels
    dims = [(in_channels, gcn_channels)] + \
           [(gcn_channels, gcn_channels)] * 3 + \
           [(gcn_channels, out_channels)]
    ws, bs = [], []
    for cin, cout in dims:
        key, kw, kb = jax.random.split(key, 3)
        limit = jnp.sqrt(6.0 / (cin + cout))          # glorot-uniform-ish
        ws.append(jax.random.uniform(kw, (cin, cout), jnp.float32, -limit, limit))
        bs.append(0.1 * jax.random.normal(kb, (cout,), jnp.float32))
    ws[-1] = jnp.pad(ws[-1], ((0, 0), (0, c_pad - out_channels)))
    bs[-1] = jnp.pad(bs[-1], ((0, c_pad - out_channels),))

    w1 = ws[0].astype(jnp.bfloat16)                   # [Cin, 128]
    wh = jnp.stack(ws[1:]).astype(jnp.bfloat16)       # [4, 128, 128]
    b_all = jnp.stack(bs).astype(jnp.float32)         # [5, 128]
    return w1, wh, b_all


def reference_forward_bf16(a_hat, x, w1, wh, b_all):
    """Per-graph reference mirroring the kernel's bf16 casts (A, X, HW, layer
    outputs and the final store)."""
    a = a_hat.astype(jnp.bfloat16)
    h = x.astype(jnp.bfloat16)
    weights = [w1] + [wh[i] for i in range(4)]
    for i, w in enumerate(weights):
        hw = jnp.dot(h, w, preferred_element_type=jnp.float32).astype(jnp.bfloat16)
        out = jnp.dot(a, hw, preferred_element_type=jnp.float32) + b_all[i][None, :]
        if i < 4:
            out = jnp.maximum(out, 0.0)
        h = out.astype(jnp.bfloat16)
    return h.astype(jnp.float32)


def reference_forward_f32(a_hat, x, w1, wh, b_all):
    """Full-f32 reference (weights upcast) — fidelity check for the bf16 path."""
    weights = [w1.astype(jnp.float32)] + [wh[i].astype(jnp.float32) for i in range(4)]
    h = x
    for i, w in enumerate(weights):
        h = a_hat @ (h @ w) + b_all[i][None, :]
        if i < 4:
            h = jnp.maximum(h, 0.0)
    return h


# ----------------------------------------------------------------------------
# Main
# ----------------------------------------------------------------------------
if __name__ == "__main__":
    key = jax.random.PRNGKey(0)

    num_graphs = 16          # B residue graphs (multi-protein inference batch)
    num_nodes = 16           # L residues per graph
    group_size = 8           # graphs per grid step (G=8 -> NG=2: both v7x TCs busy;
                             # raise to 16 on v6e for a single 256-tall step)
    in_channels = 384        # single-representation width (module default)
    out_channels = 50
    gcn_channels = 128

    kx, kp = jax.random.split(key)
    x_b = jax.random.normal(kx, (num_graphs, num_nodes, in_channels), jnp.float32)

    # Deterministic "contact" edges per graph: bidirectional ring + 3 shifted
    # long-range contacts (shift varies per graph so graphs differ).
    def make_edges(n, shift):
        src, dst = [], []
        for i in range(n):
            j = (i + 1) % n
            src += [i, j]
            dst += [j, i]
        for (i, j) in [(0, 7), (3, 12), (5, 10)]:
            i2, j2 = (i + shift) % n, (j + shift) % n
            src += [i2, j2]
            dst += [j2, i2]
        return np.array([src, dst], dtype=np.int32)

    edge_index_b = jnp.asarray(
        np.stack([make_edges(num_nodes, g) for g in range(num_graphs)]))  # [B,2,E]

    a_hat_b = jax.vmap(lambda e: build_gcn_norm_adjacency(e, num_nodes))(edge_index_b)
    w1, wh, b_all = init_params(kp, in_channels, out_channels, gcn_channels)

    out = gcn_forward_pallas(a_hat_b, x_b, w1, wh, b_all,
                             out_channels=out_channels, group_size=group_size)
    out = jax.block_until_ready(out)                    # [B, N, 50] f32

    # Tight check vs. a reference that mirrors the kernel's bf16 casts
    # (tolerance covers 1-ulp bf16 differences from accumulation order).
    ref_bf16 = jax.vmap(lambda a, x: reference_forward_bf16(a, x, w1, wh, b_all))(
        a_hat_b, x_b)[..., :out_channels]
    np.testing.assert_allclose(np.asarray(out), np.asarray(ref_bf16),
                               rtol=2e-2, atol=2e-2)

    # Loose fidelity check vs. the full-f32 GCNConv math (module semantics).
    ref_f32 = jax.vmap(lambda a, x: reference_forward_f32(a, x, w1, wh, b_all))(
        a_hat_b, x_b)[..., :out_channels]
    np.testing.assert_allclose(np.asarray(out), np.asarray(ref_f32),
                               rtol=1e-1, atol=1e-1)

    print("KERNEL_OK")
</pallas_src>

<mosaic_0001>
module attributes {stable_mosaic.version = 11 : i64} {
  func.func @_gcn_forward_kernel(%arg0: i32, %arg1: memref<1x8x16x16xbf16, #tpu.memory_space<vmem>>, %arg2: memref<1x8x16x384xbf16, #tpu.memory_space<vmem>>, %arg3: memref<384x128xbf16, #tpu.memory_space<vmem>>, %arg4: memref<4x128x128xbf16, #tpu.memory_space<vmem>>, %arg5: memref<5x128xf32, #tpu.memory_space<vmem>>, %arg6: memref<1x8x16x128xbf16, #tpu.memory_space<vmem>>) attributes {dimension_semantics = [#tpu.dimension_semantics<parallel>], iteration_bounds = array<i64: 2>, scalar_prefetch = 0 : i64, scratch_operands = 0 : i64, tpu.core_type = #tpu.core_type<tc>, window_params = [{transform_indices = @transform_0, window_bounds = array<i64: 1, 8, 16, 16>}, {transform_indices = @transform_1, window_bounds = array<i64: 1, 8, 16, 384>}, {pipeline_mode = #tpu.pipeline_mode<synchronous>, transform_indices = @transform_2, window_bounds = array<i64: 384, 128>}, {pipeline_mode = #tpu.pipeline_mode<synchronous>, transform_indices = @transform_3, window_bounds = array<i64: 4, 128, 128>}, {pipeline_mode = #tpu.pipeline_mode<synchronous>, transform_indices = @transform_4, window_bounds = array<i64: 5, 128>}, {transform_indices = @transform_5, window_bounds = array<i64: 1, 8, 16, 128>}]} {
    %c0 = arith.constant 0 : index
    %c0_0 = arith.constant 0 : index
    %c0_1 = arith.constant 0 : index
    %c0_2 = arith.constant 0 : index
    %0 = vector.load %arg1[%c0, %c0_0, %c0_1, %c0_2] : memref<1x8x16x16xbf16, #tpu.memory_space<vmem>>, vector<1x8x16x16xbf16>
    %1 = vector.shape_cast %0 : vector<1x8x16x16xbf16> to vector<8x16x16xbf16>
    %c0_3 = arith.constant 0 : index
    %c0_4 = arith.constant 0 : index
    %c0_5 = arith.constant 0 : index
    %c0_6 = arith.constant 0 : index
    %2 = vector.load %arg2[%c0_3, %c0_4, %c0_5, %c0_6] : memref<1x8x16x384xbf16, #tpu.memory_space<vmem>>, vector<1x8x16x384xbf16>
    %3 = vector.shape_cast %2 : vector<1x8x16x384xbf16> to vector<8x16x384xbf16>
    %4 = vector.shape_cast %3 : vector<8x16x384xbf16> to vector<128x384xbf16>
    %c0_7 = arith.constant 0 : index
    %c0_8 = arith.constant 0 : index
    %5 = vector.load %arg5[%c0_7, %c0_8] : memref<5x128xf32, #tpu.memory_space<vmem>>, vector<5x128xf32>
    %c0_9 = arith.constant 0 : index
    %c0_10 = arith.constant 0 : index
    %6 = vector.load %arg3[%c0_9, %c0_10] : memref<384x128xbf16, #tpu.memory_space<vmem>>, vector<384x128xbf16>
    %7 = vector.extract_strided_slice %5 {offsets = [0, 0], sizes = [1, 128], strides = [1, 1]} : vector<5x128xf32> to vector<1x128xf32>
    %cst = arith.constant dense<0.000000e+00> : vector<128x128xf32>
    %8 = tpu.matmul %4, %6, %cst {dimension_numbers = #tpu.dot_dimension_numbers<[1], [0], [0], [1], [0, 0, 1, 1], [], []>} : vector<128x384xbf16>, vector<384x128xbf16>, vector<128x128xf32> -> vector<128x128xf32>
    %9 = arith.truncf %8 : vector<128x128xf32> to vector<128x128xbf16>
    %10 = vector.shape_cast %9 : vector<128x128xbf16> to vector<8x16x128xbf16>
    "tpu.trace_start"() <{level = 10 : i32, message = "gnm,gmc->gnc"}> : () -> ()
    %cst_11 = arith.constant dense<0.000000e+00> : vector<8x16x128xf32>
    %11 = tpu.matmul %1, %10, %cst_11 {dimension_numbers = #tpu.dot_dimension_numbers<[2], [1], [1], [2], [0, 0, 0, 1, 1, 2], [0], [0]>} : vector<8x16x16xbf16>, vector<8x16x128xbf16>, vector<8x16x128xf32> -> vector<8x16x128xf32>
    "tpu.trace_stop"() : () -> ()
    %12 = vector.shape_cast %11 : vector<8x16x128xf32> to vector<128x128xf32>
    %13 = vector.broadcast %7 : vector<1x128xf32> to vector<128x128xf32>
    %14 = arith.addf %12, %13 : vector<128x128xf32>
    %cst_12 = arith.constant 0.000000e+00 : f32
    %15 = vector.broadcast %cst_12 : f32 to vector<128x128xf32>
    %16 = arith.maximumf %14, %15 : vector<128x128xf32>
    %17 = arith.truncf %16 : vector<128x128xf32> to vector<128x128xbf16>
    %c0_13 = arith.constant 0 : index
    %c0_14 = arith.constant 0 : index
    %c0_15 = arith.constant 0 : index
    %18 = vector.load %arg4[%c0_13, %c0_14, %c0_15] : memref<4x128x128xbf16, #tpu.memory_space<vmem>>, vector<1x128x128xbf16>
    %19 = vector.shape_cast %18 : vector<1x128x128xbf16> to vector<128x128xbf16>
    %20 = vector.extract_strided_slice %5 {offsets = [1, 0], sizes = [1, 128], strides = [1, 1]} : vector<5x128xf32> to vector<1x128xf32>
    %cst_16 = arith.constant dense<0.000000e+00> : vector<128x128xf32>
    %21 = tpu.matmul %17, %19, %cst_16 {dimension_numbers = #tpu.dot_dimension_numbers<[1], [0], [0], [1], [0, 0, 1, 1], [], []>} : vector<128x128xbf16>, vector<128x128xbf16>, vector<128x128xf32> -> vector<128x128xf32>
    %22 = arith.truncf %21 : vector<128x128xf32> to vector<128x128xbf16>
    %23 = vector.shape_cast %22 : vector<128x128xbf16> to vector<8x16x128xbf16>
    "tpu.trace_start"() <{level = 10 : i32, message = "gnm,gmc->gnc"}> : () -> ()
    %cst_17 = arith.constant dense<0.000000e+00> : vector<8x16x128xf32>
    %24 = tpu.matmul %1, %23, %cst_17 {dimension_numbers = #tpu.dot_dimension_numbers<[2], [1], [1], [2], [0, 0, 0, 1, 1, 2], [0], [0]>} : vector<8x16x16xbf16>, vector<8x16x128xbf16>, vector<8x16x128xf32> -> vector<8x16x128xf32>
    "tpu.trace_stop"() : () -> ()
    %25 = vector.shape_cast %24 : vector<8x16x128xf32> to vector<128x128xf32>
    %26 = vector.broadcast %20 : vector<1x128xf32> to vector<128x128xf32>
    %27 = arith.addf %25, %26 : vector<128x128xf32>
    %cst_18 = arith.constant 0.000000e+00 : f32
    %28 = vector.broadcast %cst_18 : f32 to vector<128x128xf32>
    %29 = arith.maximumf %27, %28 : vector<128x128xf32>
    %30 = arith.truncf %29 : vector<128x128xf32> to vector<128x128xbf16>
    %c1 = arith.constant 1 : index
    %c0_19 = arith.constant 0 : index
    %c0_20 = arith.constant 0 : index
    %31 = vector.load %arg4[%c1, %c0_19, %c0_20] : memref<4x128x128xbf16, #tpu.memory_space<vmem>>, vector<1x128x128xbf16>
    %32 = vector.shape_cast %31 : vector<1x128x128xbf16> to vector<128x128xbf16>
    %33 = vector.extract_strided_slice %5 {offsets = [2, 0], sizes = [1, 128], strides = [1, 1]} : vector<5x128xf32> to vector<1x128xf32>
    %cst_21 = arith.constant dense<0.000000e+00> : vector<128x128xf32>
    %34 = tpu.matmul %30, %32, %cst_21 {dimension_numbers = #tpu.dot_dimension_numbers<[1], [0], [0], [1], [0, 0, 1, 1], [], []>} : vector<128x128xbf16>, vector<128x128xbf16>, vector<128x128xf32> -> vector<128x128xf32>
    %35 = arith.truncf %34 : vector<128x128xf32> to vector<128x128xbf16>
    %36 = vector.shape_cast %35 : vector<128x128xbf16> to vector<8x16x128xbf16>
    "tpu.trace_start"() <{level = 10 : i32, message = "gnm,gmc->gnc"}> : () -> ()
    %cst_22 = arith.constant dense<0.000000e+00> : vector<8x16x128xf32>
    %37 = tpu.matmul %1, %36, %cst_22 {dimension_numbers = #tpu.dot_dimension_numbers<[2], [1], [1], [2], [0, 0, 0, 1, 1, 2], [0], [0]>} : vector<8x16x16xbf16>, vector<8x16x128xbf16>, vector<8x16x128xf32> -> vector<8x16x128xf32>
    "tpu.trace_stop"() : () -> ()
    %38 = vector.shape_cast %37 : vector<8x16x128xf32> to vector<128x128xf32>
    %39 = vector.broadcast %33 : vector<1x128xf32> to vector<128x128xf32>
    %40 = arith.addf %38, %39 : vector<128x128xf32>
    %cst_23 = arith.constant 0.000000e+00 : f32
    %41 = vector.broadcast %cst_23 : f32 to vector<128x128xf32>
    %42 = arith.maximumf %40, %41 : vector<128x128xf32>
    %43 = arith.truncf %42 : vector<128x128xf32> to vector<128x128xbf16>
    %c2 = arith.constant 2 : index
    %c0_24 = arith.constant 0 : index
    %c0_25 = arith.constant 0 : index
    %44 = vector.load %arg4[%c2, %c0_24, %c0_25] : memref<4x128x128xbf16, #tpu.memory_space<vmem>>, vector<1x128x128xbf16>
    %45 = vector.shape_cast %44 : vector<1x128x128xbf16> to vector<128x128xbf16>
    %46 = vector.extract_strided_slice %5 {offsets = [3, 0], sizes = [1, 128], strides = [1, 1]} : vector<5x128xf32> to vector<1x128xf32>
    %cst_26 = arith.constant dense<0.000000e+00> : vector<128x128xf32>
    %47 = tpu.matmul %43, %45, %cst_26 {dimension_numbers = #tpu.dot_dimension_numbers<[1], [0], [0], [1], [0, 0, 1, 1], [], []>} : vector<128x128xbf16>, vector<128x128xbf16>, vector<128x128xf32> -> vector<128x128xf32>
    %48 = arith.truncf %47 : vector<128x128xf32> to vector<128x128xbf16>
    %49 = vector.shape_cast %48 : vector<128x128xbf16> to vector<8x16x128xbf16>
    "tpu.trace_start"() <{level = 10 : i32, message = "gnm,gmc->gnc"}> : () -> ()
    %cst_27 = arith.constant dense<0.000000e+00> : vector<8x16x128xf32>
    %50 = tpu.matmul %1, %49, %cst_27 {dimension_numbers = #tpu.dot_dimension_numbers<[2], [1], [1], [2], [0, 0, 0, 1, 1, 2], [0], [0]>} : vector<8x16x16xbf16>, vector<8x16x128xbf16>, vector<8x16x128xf32> -> vector<8x16x128xf32>
    "tpu.trace_stop"() : () -> ()
    %51 = vector.shape_cast %50 : vector<8x16x128xf32> to vector<128x128xf32>
    %52 = vector.broadcast %46 : vector<1x128xf32> to vector<128x128xf32>
    %53 = arith.addf %51, %52 : vector<128x128xf32>
    %cst_28 = arith.constant 0.000000e+00 : f32
    %54 = vector.broadcast %cst_28 : f32 to vector<128x128xf32>
    %55 = arith.maximumf %53, %54 : vector<128x128xf32>
    %56 = arith.truncf %55 : vector<128x128xf32> to vector<128x128xbf16>
    %c3 = arith.constant 3 : index
    %c0_29 = arith.constant 0 : index
    %c0_30 = arith.constant 0 : index
    %57 = vector.load %arg4[%c3, %c0_29, %c0_30] : memref<4x128x128xbf16, #tpu.memory_space<vmem>>, vector<1x128x128xbf16>
    %58 = vector.shape_cast %57 : vector<1x128x128xbf16> to vector<128x128xbf16>
    %59 = vector.extract_strided_slice %5 {offsets = [4, 0], sizes = [1, 128], strides = [1, 1]} : vector<5x128xf32> to vector<1x128xf32>
    %cst_31 = arith.constant dense<0.000000e+00> : vector<128x128xf32>
    %60 = tpu.matmul %56, %58, %cst_31 {dimension_numbers = #tpu.dot_dimension_numbers<[1], [0], [0], [1], [0, 0, 1, 1], [], []>} : vector<128x128xbf16>, vector<128x128xbf16>, vector<128x128xf32> -> vector<128x128xf32>
    %61 = arith.truncf %60 : vector<128x128xf32> to vector<128x128xbf16>
    %62 = vector.shape_cast %61 : vector<128x128xbf16> to vector<8x16x128xbf16>
    "tpu.trace_start"() <{level = 10 : i32, message = "gnm,gmc->gnc"}> : () -> ()
    %cst_32 = arith.constant dense<0.000000e+00> : vector<8x16x128xf32>
    %63 = tpu.matmul %1, %62, %cst_32 {dimension_numbers = #tpu.dot_dimension_numbers<[2], [1], [1], [2], [0, 0, 0, 1, 1, 2], [0], [0]>} : vector<8x16x16xbf16>, vector<8x16x128xbf16>, vector<8x16x128xf32> -> vector<8x16x128xf32>
    "tpu.trace_stop"() : () -> ()
    %64 = vector.shape_cast %63 : vector<8x16x128xf32> to vector<128x128xf32>
    %65 = vector.broadcast %59 : vector<1x128xf32> to vector<128x128xf32>
    %66 = arith.addf %64, %65 : vector<128x128xf32>
    %67 = arith.truncf %66 : vector<128x128xf32> to vector<128x128xbf16>
    %68 = vector.shape_cast %67 : vector<128x128xbf16> to vector<8x16x128xbf16>
    %c0_33 = arith.constant 0 : index
    %c0_34 = arith.constant 0 : index
    %c0_35 = arith.constant 0 : index
    %c0_36 = arith.constant 0 : index
    %69 = vector.load %arg6[%c0_33, %c0_34, %c0_35, %c0_36] : memref<1x8x16x128xbf16, #tpu.memory_space<vmem>>, vector<1x8x16x128xbf16>
    %70 = vector.shape_cast %69 : vector<1x8x16x128xbf16> to vector<8x16x128xbf16>
    %71 = vector.shape_cast %68 : vector<8x16x128xbf16> to vector<1x8x16x128xbf16>
    tpu.vector_store %arg6[%c0_33, %c0_34, %c0_35, %c0_36], %71 {strides = array<i32>} : memref<1x8x16x128xbf16, #tpu.memory_space<vmem>>, vector<1x8x16x128xbf16>,
    return
  }
  func.func @transform_0(%arg0: i32) -> (i32, i32, i32, i32) {
    %c0_i32 = arith.constant 0 : i32
    %c0_i32_0 = arith.constant 0 : i32
    %c0_i32_1 = arith.constant 0 : i32
    %c0_i32_2 = arith.constant 0 : i32
    return %arg0, %c0_i32, %c0_i32_0, %c0_i32_1 : i32, i32, i32, i32
  }
  func.func @transform_1(%arg0: i32) -> (i32, i32, i32, i32) {
    %c0_i32 = arith.constant 0 : i32
    %c0_i32_0 = arith.constant 0 : i32
    %c0_i32_1 = arith.constant 0 : i32
    %c0_i32_2 = arith.constant 0 : i32
    return %arg0, %c0_i32, %c0_i32_0, %c0_i32_1 : i32, i32, i32, i32
  }
  func.func @transform_2(%arg0: i32) -> (i32, i32) {
    %c0_i32 = arith.constant 0 : i32
    %c0_i32_0 = arith.constant 0 : i32
    %c0_i32_1 = arith.constant 0 : i32
    return %c0_i32, %c0_i32_0 : i32, i32
  }
  func.func @transform_3(%arg0: i32) -> (i32, i32, i32) {
    %c0_i32 = arith.constant 0 : i32
    %c0_i32_0 = arith.constant 0 : i32
    %c0_i32_1 = arith.constant 0 : i32
    %c0_i32_2 = arith.constant 0 : i32
    return %c0_i32, %c0_i32_0, %c0_i32_1 : i32, i32, i32
  }
  func.func @transform_4(%arg0: i32) -> (i32, i32) {
    %c0_i32 = arith.constant 0 : i32
    %c0_i32_0 = arith.constant 0 : i32
    %c0_i32_1 = arith.constant 0 : i32
    return %c0_i32, %c0_i32_0 : i32, i32
  }
  func.func @transform_5(%arg0: i32) -> (i32, i32, i32, i32) {
    %c0_i32 = arith.constant 0 : i32
    %c0_i32_0 = arith.constant 0 : i32
    %c0_i32_1 = arith.constant 0 : i32
    %c0_i32_2 = arith.constant 0 : i32
    return %arg0, %c0_i32, %c0_i32_0, %c0_i32_1 : i32, i32, i32, i32
  }
}

</mosaic_0001>

<llo_original>
// kernel: gcn_forward_pallas.1
$region0: #{gcn_forward_pallas.1}
  #allocation0 [shape = 'u32[]', space=smem, size = 0x4, offset = 0x4, fixed_abs, tag = 'smem constant byte address 0x4 - core index']
  #allocation1 [shape = 'u32[144,128]{1,0:T(1,128)}', space=vmem, size = 0x12000, scoped, tag = 'internal scratch']
  %s0 = inlined_call_operand.vmem [shape: bf16[2,8,16,16], index: 0, kind: input, shape index: {}]
  %s1 = inlined_call_operand.vmem [shape: bf16[2,8,16,384], index: 1, kind: input, shape index: {}]
  %s2 = inlined_call_operand.vmem [shape: bf16[384,128], index: 2, kind: input, shape index: {}]
  %s3 = inlined_call_operand.vmem [shape: bf16[4,128,128], index: 3, kind: input, shape index: {}]
  %s4 = inlined_call_operand.vmem [shape: f32[5,128], index: 4, kind: input, shape index: {}]
  %s5 = inlined_call_operand.vmem [shape: bf16[2,8,16,128], index: 5, kind: output, shape index: {}]
  %s6 = sld [smem:[#allocation0]]
  $region53: #{gcn_forward_pallas.1} parent=0
    _
  %s8 = ssub.s32 1, %s6
  %s9 = scalar_select 0, %s8, %s6
  loop: start=0, step=1, limit=4
  $region2: #{gcn_forward_pallas.1} parent=0 // loop_pre_header
    _
  $region3: #{gcn_forward_pallas.1} parent=0 // loop_header
    %s11 = sphi 0, %s15
    %p12 = scmp.ge.s32.totalorder %s11, 4
    %s21 = sphi 0, %s23
    %s24 = sphi 0, %s21
    %s25 = sphi 0, %s24
    %s41 = sphi 0, %s25
    %s47 = sphi 0, %s49
    %s50 = sphi 0, %s47
    %s51 = sphi 0, %s50
    %s67 = sphi 0, %s51
    %s71 = sphi 0, %s71
    %s73 = sphi 0, %s71
    %s74 = sphi 0, %s73
    %s88 = sphi 0, %s74
    %s92 = sphi 0, %s92
    %s94 = sphi 0, %s92
    %s95 = sphi 0, %s94
    %s109 = sphi 0, %s95
    %s113 = sphi 0, %s113
    %s115 = sphi 0, %s113
    %s116 = sphi 0, %s115
    %s130 = sphi 0, %s116
    %s136 = sphi 0, %s138
    %s139 = sphi 0, %s136
    %s140 = sphi 0, %s139
    %s156 = sphi 0, %s140
  $region4: #{gcn_forward_pallas.1} parent=0 // loop_header_branch
    %14 = sbr.rel (%p12) target = $region8
  $region5: #{gcn_forward_pallas.1} parent=0 // loop_body
    %s16 = ssub.s32 %s11, 1
    %s17 = ssub.s32 %s11, 2
    %s18 = sadd.s32 %s11, 1
    %s19 = ssub.s32 %s11, %s18
    %p20 = scmp.eq.s32.totalorder %s19, 0
    %s22 = sadd.s32 %s21, 1
    %s23 = scalar_select %p20, %s21, %s22
    %p26 = pneg %p20
    %p27 = scmp.eq.s32.totalorder %s11, 1
    %p28 = por %p26, %p27
    %p29 = scmp.ne.s32.totalorder %s21, %s24
    %p30 = scmp.eq.s32.totalorder %s11, 0
    %p31 = por %p29, %p30
    %p32 = scmp.ne.s32.totalorder %s21, %s24
    %p33 = scmp.eq.s32.totalorder %s16, 1
    %p34 = por %p32, %p33
    %p35 = scmp.ne.s32.totalorder %s24, %s25
    %p36 = scmp.eq.s32.totalorder %s16, 0
    %p37 = por %p35, %p36
    %p38 = scmp.ne.s32.totalorder %s24, %s25
    %p39 = scmp.eq.s32.totalorder %s17, 1
    %p40 = por %p38, %p39
    %p42 = scmp.ne.s32.totalorder %s25, %s41
    %p43 = scmp.eq.s32.totalorder %s17, 0
    %p44 = por %p42, %p43
    %s45 = ssub.s32 %s11, %s18
    %p46 = scmp.eq.s32.totalorder %s45, 0
    %s48 = sadd.s32 %s47, 1
    %s49 = scalar_select %p46, %s47, %s48
    %p52 = pneg %p46
    %p53 = scmp.eq.s32.totalorder %s11, 1
    %p54 = por %p52, %p53
    %p55 = scmp.ne.s32.totalorder %s47, %s50
    %p56 = scmp.eq.s32.totalorder %s11, 0
    %p57 = por %p55, %p56
    %p58 = scmp.ne.s32.totalorder %s47, %s50
    %p59 = scmp.eq.s32.totalorder %s16, 1
    %p60 = por %p58, %p59
    %p61 = scmp.ne.s32.totalorder %s50, %s51
    %p62 = scmp.eq.s32.totalorder %s16, 0
    %p63 = por %p61, %p62
    %p64 = scmp.ne.s32.totalorder %s50, %s51
    %p65 = scmp.eq.s32.totalorder %s17, 1
    %p66 = por %p64, %p65
    %p68 = scmp.ne.s32.totalorder %s51, %s67
    %p69 = scmp.eq.s32.totalorder %s17, 0
    %p70 = por %p68, %p69
    %s72 = sadd.s32 %s71, 1
    %p75 = scmp.eq.s32.totalorder %s11, 1
    %p76 = scmp.ne.s32.totalorder %s71, %s73
    %p77 = scmp.eq.s32.totalorder %s11, 0
    %p78 = por %p76, %p77
    %p79 = scmp.ne.s32.totalorder %s71, %s73
    %p80 = scmp.eq.s32.totalorder %s16, 1
    %p81 = por %p79, %p80
    %p82 = scmp.ne.s32.totalorder %s73, %s74
    %p83 = scmp.eq.s32.totalorder %s16, 0
    %p84 = por %p82, %p83
    %p85 = scmp.ne.s32.totalorder %s73, %s74
    %p86 = scmp.eq.s32.totalorder %s17, 1
    %p87 = por %p85, %p86
    %p89 = scmp.ne.s32.totalorder %s74, %s88
    %p90 = scmp.eq.s32.totalorder %s17, 0
    %p91 = por %p89, %p90
    %s93 = sadd.s32 %s92, 1
    %p96 = scmp.eq.s32.totalorder %s11, 1
    %p97 = scmp.ne.s32.totalorder %s92, %s94
    %p98 = scmp.eq.s32.totalorder %s11, 0
    %p99 = por %p97, %p98
    %p100 = scmp.ne.s32.totalorder %s92, %s94
    %p101 = scmp.eq.s32.totalorder %s16, 1
    %p102 = por %p100, %p101
    %p103 = scmp.ne.s32.totalorder %s94, %s95
    %p104 = scmp.eq.s32.totalorder %s16, 0
    %p105 = por %p103, %p104
    %p106 = scmp.ne.s32.totalorder %s94, %s95
    %p107 = scmp.eq.s32.totalorder %s17, 1
    %p108 = por %p106, %p107
    %p110 = scmp.ne.s32.totalorder %s95, %s109
    %p111 = scmp.eq.s32.totalorder %s17, 0
    %p112 = por %p110, %p111
    %s114 = sadd.s32 %s113, 1
    %p117 = scmp.eq.s32.totalorder %s11, 1
    %p118 = scmp.ne.s32.totalorder %s113, %s115
    %p119 = scmp.eq.s32.totalorder %s11, 0
    %p120 = por %p118, %p119
    %p121 = scmp.ne.s32.totalorder %s113, %s115
    %p122 = scmp.eq.s32.totalorder %s16, 1
    %p123 = por %p121, %p122
    %p124 = scmp.ne.s32.totalorder %s115, %s116
    %p125 = scmp.eq.s32.totalorder %s16, 0
    %p126 = por %p124, %p125
    %p127 = scmp.ne.s32.totalorder %s115, %s116
    %p128 = scmp.eq.s32.totalorder %s17, 1
    %p129 = por %p127, %p128
    %p131 = scmp.ne.s32.totalorder %s116, %s130
    %p132 = scmp.eq.s32.totalorder %s17, 0
    %p133 = por %p131, %p132
    %s134 = ssub.s32 %s11, %s18
    %p135 = scmp.eq.s32.totalorder %s134, 0
    %s137 = sadd.s32 %s136, 1
    %s138 = scalar_select %p135, %s136, %s137
    %p141 = pneg %p135
    %p142 = scmp.eq.s32.totalorder %s11, 1
    %p143 = por %p141, %p142
    %p144 = scmp.ne.s32.totalorder %s136, %s139
    %p145 = scmp.eq.s32.totalorder %s11, 0
    %p146 = por %p144, %p145
    %p147 = scmp.ne.s32.totalorder %s136, %s139
    %p148 = scmp.eq.s32.totalorder %s16, 1
    %p149 = por %p147, %p148
    %p150 = scmp.ne.s32.totalorder %s139, %s140
    %p151 = scmp.eq.s32.totalorder %s16, 0
    %p152 = por %p150, %p151
    %p153 = scmp.ne.s32.totalorder %s139, %s140
    %p154 = scmp.eq.s32.totalorder %s17, 1
    %p155 = por %p153, %p154
    %p157 = scmp.ne.s32.totalorder %s140, %s156
    %p158 = scmp.eq.s32.totalorder %s17, 0
    %p159 = por %p157, %p158
    %p160 = scmp.le.s32.totalorder 1, %s11
    %p161 = scmp.lt.s32.totalorder %s11, 3
    %p162 = pnand %p160, %p161
    %p163 = pneg %p162
    // Predicated region
    $region9: #{gcn_forward_pallas.1} parent=5 // pred_check
      _
    $region10: #{gcn_forward_pallas.1} parent=5 // pred_check_branch
      %165 = sbr.rel (%p162) target = $region12
    $region11: #{gcn_forward_pallas.1} parent=5 // pred_region
      %s166 = ssub.s32 %s11, 1
      // Predicated region
      $region13: #{gcn_forward_pallas.1} parent=11 // pred_check
        %p167 = pneg %p84
      $region14: #{gcn_forward_pallas.1} parent=11 // pred_check_branch
        %169 = sbr.rel (%p167) target = $region16
      $region15: #{gcn_forward_pallas.1} parent=11 // pred_region
        _
      $region16: #{gcn_forward_pallas.1} parent=11 // pred_fallthru
        _
      // Predicated region
      $region17: #{gcn_forward_pallas.1} parent=11 // pred_check
        %p170 = pneg %p105
      $region18: #{gcn_forward_pallas.1} parent=11 // pred_check_branch
        %172 = sbr.rel (%p170) target = $region20
      $region19: #{gcn_forward_pallas.1} parent=11 // pred_region
        _
      $region20: #{gcn_forward_pallas.1} parent=11 // pred_fallthru
        _
      // Predicated region
      $region21: #{gcn_forward_pallas.1} parent=11 // pred_check
        %p173 = pneg %p126
      $region22: #{gcn_forward_pallas.1} parent=11 // pred_check_branch
        %175 = sbr.rel (%p173) target = $region24
      $region23: #{gcn_forward_pallas.1} parent=11 // pred_region
        _
      $region24: #{gcn_forward_pallas.1} parent=11 // pred_fallthru
        _
    $region12: #{gcn_forward_pallas.1} parent=5 // pred_fallthru
      _
    %p176 = scmp.lt.s32.totalorder %s11, 2
    // Predicated region
    $region25: #{gcn_forward_pallas.1} parent=5 // pred_check
      %p177 = pneg %p176
    $region26: #{gcn_forward_pallas.1} parent=5 // pred_check_branch
      %179 = sbr.rel (%p177) target = $region28
    $region27: #{gcn_forward_pallas.1} parent=5 // pred_region
      // Predicated region
      $region29: #{gcn_forward_pallas.1} parent=27 // pred_check
        %p180 = pneg %p31
      $region30: #{gcn_forward_pallas.1} parent=27 // pred_check_branch
        %182 = sbr.rel (%p180) target = $region32
      $region31: #{gcn_forward_pallas.1} parent=27 // pred_region
        %p183 = scmp.lt.s32.totalorder %s11, 1
        %s184 = scalar_select %p183, %s11, 1
        %s185 = smul.addr %s184, 16
        %s186 = smul.addr %s185, 4
        %s187 = scalar_lea.vmem %s0, %s186
      $region32: #{gcn_forward_pallas.1} parent=27 // pred_fallthru
        _
      // Predicated region
      $region33: #{gcn_forward_pallas.1} parent=27 // pred_check
        %p188 = pneg %p57
      $region34: #{gcn_forward_pallas.1} parent=27 // pred_check_branch
        %190 = sbr.rel (%p188) target = $region36
      $region35: #{gcn_forward_pallas.1} parent=27 // pred_region
        %p191 = scmp.lt.s32.totalorder %s11, 1
        %s192 = scalar_select %p191, %s11, 1
        %s193 = smul.addr %s192, 48
        %s194 = smul.addr %s193, 4
        %s195 = scalar_lea.vmem %s1, %s194
      $region36: #{gcn_forward_pallas.1} parent=27 // pred_fallthru
        _
    $region28: #{gcn_forward_pallas.1} parent=5 // pred_fallthru
      _
    %p196 = scmp.le.s32.totalorder 1, %s11
    %p197 = scmp.lt.s32.totalorder %s11, 3
    %p198 = pnand %p196, %p197
    %p199 = pneg %p198
    // Predicated region
    $region37: #{gcn_forward_pallas.1} parent=5 // pred_check
      _
    $region38: #{gcn_forward_pallas.1} parent=5 // pred_check_branch
      %201 = sbr.rel (%p198) target = $region40
    $region39: #{gcn_forward_pallas.1} parent=5 // pred_region
      %s202 = ssub.s32 %s11, 1
      %p203 = scmp.lt.s32.totalorder %s16, 1
      %s204 = scalar_select %p203, %s16, 1
      %s205 = smul.addr %s204, 16
      %s206 = smul.addr %s205, 4
      %s207 = scalar_lea.vmem %s0, %s206
      %p208 = pneg %p37
      %p209 = pneg %p34
      %p210 = scmp.lt.s32.totalorder %s16, 1
      %s211 = scalar_select %p210, %s16, 1
      %s212 = smul.addr %s211, 48
      %s213 = smul.addr %s212, 4
      %s214 = scalar_lea.vmem %s1, %s213
      %p215 = pneg %p63
      %p216 = pneg %p60
      %p217 = pneg %p84
      %p218 = pneg %p81
      %p219 = pneg %p105
      %p220 = pneg %p102
      %p221 = pneg %p126
      %p222 = pneg %p123
      %p223 = pneg %p152
      %p224 = pneg %p149
      %p225 = scmp.lt.s32.totalorder %s16, 1
      %s226 = scalar_select %p225, %s16, 1
      %s227 = smul.addr %s226, 16
      %s228 = smul.addr %s227, 4
      %s229 = scalar_lea.vmem %s5, %s228
      %p230 = scmp.lt.s32.totalorder %s16, 1
      %s231 = scalar_select %p230, %s16, 1
      %s232 = smul.addr %s231, 16
      %s233 = smul.addr %s232, 4
      %s234 = scalar_lea.vmem %s0, %s233
      %p235 = scmp.lt.s32.totalorder %s16, 1
      %s236 = scalar_select %p235, %s16, 1
      %s237 = smul.addr %s236, 48
      %s238 = smul.addr %s237, 4
      %s239 = scalar_lea.vmem %s1, %s238
      %p240 = scmp.lt.s32.totalorder %s16, 1
      %s241 = scalar_select %p240, %s16, 1
      %s242 = smul.addr %s241, 16
      %s243 = smul.addr %s242, 4
      %s244 = scalar_lea.vmem %s5, %s243
      %v246 = vld [vmem:[%s234] sm:$0xf]
      %v247 = vld [vmem:[%s234 + $0x4] sm:$0xf]
      %v248 = vld [vmem:[%s234 + $0x8] sm:$0xf]
      %v249 = vld [vmem:[%s234 + $0xc] sm:$0xf]
      %v250 = vld [vmem:[%s234 + $0x10] sm:$0xf]
      %v251 = vld [vmem:[%s234 + $0x14] sm:$0xf]
      %v252 = vld [vmem:[%s234 + $0x18] sm:$0xf]
      %v253 = vld [vmem:[%s234 + $0x1c] sm:$0xf]
      %v254 = vld [vmem:[%s234 + $0x20] sm:$0xf]
      %v255 = vld [vmem:[%s234 + $0x24] sm:$0xf]
      %v256 = vld [vmem:[%s234 + $0x28] sm:$0xf]
      %v257 = vld [vmem:[%s234 + $0x2c] sm:$0xf]
      %v258 = vld [vmem:[%s234 + $0x30] sm:$0xf]
      %v259 = vld [vmem:[%s234 + $0x34] sm:$0xf]
      %v260 = vld [vmem:[%s234 + $0x38] sm:$0xf]
      %v261 = vld [vmem:[%s234 + $0x3c] sm:$0xf]
      %v262 = vld [vmem:[%s239] sm:$0xff]
      %v263 = vld [vmem:[%s239 + $0x8] sm:$0xf]
      %v264 = vld [vmem:[%s239 + $0xc] sm:$0xff]
      %v265 = vld [vmem:[%s239 + $0x14] sm:$0xf]
      %v266 = vld [vmem:[%s239 + $0x18] sm:$0xff]
      %v267 = vld [vmem:[%s239 + $0x20] sm:$0xf]
      %v268 = vld [vmem:[%s239 + $0x24] sm:$0xff]
      %v269 = vld [vmem:[%s239 + $0x2c] sm:$0xf]
      %v270 = vld [vmem:[%s239 + $0x30] sm:$0xff]
      %v271 = vld [vmem:[%s239 + $0x38] sm:$0xf]
      %v272 = vld [vmem:[%s239 + $0x3c] sm:$0xff]
      %v273 = vld [vmem:[%s239 + $0x44] sm:$0xf]
      %v274 = vld [vmem:[%s239 + $0x48] sm:$0xff]
      %v275 = vld [vmem:[%s239 + $0x50] sm:$0xf]
      %v276 = vld [vmem:[%s239 + $0x54] sm:$0xff]
      %v277 = vld [vmem:[%s239 + $0x5c] sm:$0xf]
      %v278 = vld [vmem:[%s239 + $0x60] sm:$0xff]
      %v279 = vld [vmem:[%s239 + $0x68] sm:$0xf]
      %v280 = vld [vmem:[%s239 + $0x6c] sm:$0xff]
      %v281 = vld [vmem:[%s239 + $0x74] sm:$0xf]
      %v282 = vld [vmem:[%s239 + $0x78] sm:$0xff]
      %v283 = vld [vmem:[%s239 + $0x80] sm:$0xf]
      %v284 = vld [vmem:[%s239 + $0x84] sm:$0xff]
      %v285 = vld [vmem:[%s239 + $0x8c] sm:$0xf]
      %v286 = vld [vmem:[%s239 + $0x90] sm:$0xff]
      %v287 = vld [vmem:[%s239 + $0x98] sm:$0xf]
      %v288 = vld [vmem:[%s239 + $0x9c] sm:$0xff]
      %v289 = vld [vmem:[%s239 + $0xa4] sm:$0xf]
      %v290 = vld [vmem:[%s239 + $0xa8] sm:$0xff]
      %v291 = vld [vmem:[%s239 + $0xb0] sm:$0xf]
      %v292 = vld [vmem:[%s239 + $0xb4] sm:$0xff]
      %v293 = vld [vmem:[%s239 + $0xbc] sm:$0xf]
      %v294 = vld [vmem:[%s4] sm:$0x1f]
      %v295 = vld [vmem:[%s2] sm:$0xf]
      %v296 = vld [vmem:[%s2 + $0x4] sm:$0xf]
      %v297 = vld [vmem:[%s2 + $0x8] sm:$0xf]
      %v298 = vld [vmem:[%s2 + $0xc] sm:$0xf]
      %v299 = vld [vmem:[%s2 + $0x10] sm:$0xf]
      %v300 = vld [vmem:[%s2 + $0x14] sm:$0xf]
      %v301 = vld [vmem:[%s2 + $0x18] sm:$0xf]
      %v302 = vld [vmem:[%s2 + $0x1c] sm:$0xf]
      %v303 = vld [vmem:[%s2 + $0x20] sm:$0xf]
      %v304 = vld [vmem:[%s2 + $0x24] sm:$0xf]
      %v305 = vld [vmem:[%s2 + $0x28] sm:$0xf]
      %v306 = vld [vmem:[%s2 + $0x2c] sm:$0xf]
      %v307 = vld [vmem:[%s2 + $0x30] sm:$0xf]
      %v308 = vld [vmem:[%s2 + $0x34] sm:$0xf]
      %v309 = vld [vmem:[%s2 + $0x38] sm:$0xf]
      %v310 = vld [vmem:[%s2 + $0x3c] sm:$0xf]
      %v311 = vld [vmem:[%s2 + $0x40] sm:$0xf]
      %v312 = vld [vmem:[%s2 + $0x44] sm:$0xf]
      %v313 = vld [vmem:[%s2 + $0x48] sm:$0xf]
      %v314 = vld [vmem:[%s2 + $0x4c] sm:$0xf]
      %v315 = vld [vmem:[%s2 + $0x50] sm:$0xf]
      %v316 = vld [vmem:[%s2 + $0x54] sm:$0xf]
      %v317 = vld [vmem:[%s2 + $0x58] sm:$0xf]
      %v318 = vld [vmem:[%s2 + $0x5c] sm:$0xf]
      %v319 = vld [vmem:[%s2 + $0x60] sm:$0xf]
      %v320 = vld [vmem:[%s2 + $0x64] sm:$0xf]
      %v321 = vld [vmem:[%s2 + $0x68] sm:$0xf]
      %v322 = vld [vmem:[%s2 + $0x6c] sm:$0xf]
      %v323 = vld [vmem:[%s2 + $0x70] sm:$0xf]
      %v324 = vld [vmem:[%s2 + $0x74] sm:$0xf]
      %v325 = vld [vmem:[%s2 + $0x78] sm:$0xf]
      %v326 = vld [vmem:[%s2 + $0x7c] sm:$0xf]
      %v327 = vld [vmem:[%s2 + $0x80] sm:$0xf]
      %v328 = vld [vmem:[%s2 + $0x84] sm:$0xf]
      %v329 = vld [vmem:[%s2 + $0x88] sm:$0xf]
      %v330 = vld [vmem:[%s2 + $0x8c] sm:$0xf]
      %v331 = vld [vmem:[%s2 + $0x90] sm:$0xf]
      %v332 = vld [vmem:[%s2 + $0x94] sm:$0xf]
      %v333 = vld [vmem:[%s2 + $0x98] sm:$0xf]
      %v334 = vld [vmem:[%s2 + $0x9c] sm:$0xf]
      %v335 = vld [vmem:[%s2 + $0xa0] sm:$0xf]
      %v336 = vld [vmem:[%s2 + $0xa4] sm:$0xf]
      %v337 = vld [vmem:[%s2 + $0xa8] sm:$0xf]
      %v338 = vld [vmem:[%s2 + $0xac] sm:$0xf]
      %v339 = vld [vmem:[%s2 + $0xb0] sm:$0xf]
      %v340 = vld [vmem:[%s2 + $0xb4] sm:$0xf]
      %v341 = vld [vmem:[%s2 + $0xb8] sm:$0xf]
      %v342 = vld [vmem:[%s2 + $0xbc] sm:$0xf]
      %v375 = vunpack.c.l.b16 %v262
      %v376 = vunpack.c.h.b16 %v262
      %v377 = vunpack.c.l.b16 %v263
      %v378 = vunpack.c.l.b16 %v264
      %v379 = vunpack.c.h.b16 %v264
      %v380 = vunpack.c.l.b16 %v265
      %v381 = vunpack.c.l.b16 %v266
      %v382 = vunpack.c.h.b16 %v266
      %v383 = vunpack.c.l.b16 %v267
      %v384 = vunpack.c.l.b16 %v268
      %v385 = vunpack.c.h.b16 %v268
      %v386 = vunpack.c.l.b16 %v269
      %v387 = vunpack.c.l.b16 %v270
      %v388 = vunpack.c.h.b16 %v270
      %v389 = vunpack.c.l.b16 %v271
      %v390 = vunpack.c.l.b16 %v272
      %v391 = vunpack.c.h.b16 %v272
      %v392 = vunpack.c.l.b16 %v273
      %v393 = vunpack.c.l.b16 %v274
      %v394 = vunpack.c.h.b16 %v274
      %v395 = vunpack.c.l.b16 %v275
      %v396 = vunpack.c.l.b16 %v276
      %v397 = vunpack.c.h.b16 %v276
      %v398 = vunpack.c.l.b16 %v277
      %v399 = vunpack.c.l.b16 %v278
      %v400 = vunpack.c.h.b16 %v278
      %v401 = vunpack.c.l.b16 %v279
      %v402 = vunpack.c.l.b16 %v280
      %v403 = vunpack.c.h.b16 %v280
      %v404 = vunpack.c.l.b16 %v281
      %v405 = vunpack.c.l.b16 %v282
      %v406 = vunpack.c.h.b16 %v282
      %v407 = vunpack.c.l.b16 %v283
      %v408 = vunpack.c.l.b16 %v284
      %v409 = vunpack.c.h.b16 %v284
      %v410 = vunpack.c.l.b16 %v285
      %v411 = vunpack.c.l.b16 %v286
      %v412 = vunpack.c.h.b16 %v286
      %v413 = vunpack.c.l.b16 %v287
      %v414 = vunpack.c.l.b16 %v288
      %v415 = vunpack.c.h.b16 %v288
      %v416 = vunpack.c.l.b16 %v289
      %v417 = vunpack.c.l.b16 %v290
      %v418 = vunpack.c.h.b16 %v290
      %v419 = vunpack.c.l.b16 %v291
      %v420 = vunpack.c.l.b16 %v292
      %v421 = vunpack.c.h.b16 %v292
      %v422 = vunpack.c.l.b16 %v293
      %v423 = vpack.c.b16 %v378, %v375
      %v424 = vpack.c.b16 %v379, %v376
      %v425 = vpack.c.b16 %v380, %v377
      %v426 = vpack.c.b16 %v384, %v381
      %v427 = vpack.c.b16 %v385, %v382
      %v428 = vpack.c.b16 %v386, %v383
      %v429 = vpack.c.b16 %v390, %v387
      %v430 = vpack.c.b16 %v391, %v388
      %v431 = vpack.c.b16 %v392, %v389
      %v432 = vpack.c.b16 %v396, %v393
      %v433 = vpack.c.b16 %v397, %v394
      %v434 = vpack.c.b16 %v398, %v395
      %v435 = vpack.c.b16 %v402, %v399
      %v436 = vpack.c.b16 %v403, %v400
      %v437 = vpack.c.b16 %v404, %v401
      %v438 = vpack.c.b16 %v408, %v405
      %v439 = vpack.c.b16 %v409, %v406
      %v440 = vpack.c.b16 %v410, %v407
      %v441 = vpack.c.b16 %v414, %v411
      %v442 = vpack.c.b16 %v415, %v412
      %v443 = vpack.c.b16 %v416, %v413
      %v444 = vpack.c.b16 %v420, %v417
      %v445 = vpack.c.b16 %v421, %v418
      %v446 = vpack.c.b16 %v422, %v419
      %v519 = vunpack.c.l.b16 %v295
      %v520 = vunpack.c.l.b16 %v296
      %v521 = vunpack.c.l.b16 %v297
      %v522 = vunpack.c.l.b16 %v298
      %v523 = vunpack.c.l.b16 %v299
      %v524 = vunpack.c.l.b16 %v300
      %v525 = vunpack.c.l.b16 %v301
      %v526 = vunpack.c.l.b16 %v302
      %v527 = vunpack.c.l.b16 %v303
      %v528 = vunpack.c.l.b16 %v304
      %v529 = vunpack.c.l.b16 %v305
      %v530 = vunpack.c.l.b16 %v306
      %v531 = vunpack.c.l.b16 %v307
      %v532 = vunpack.c.l.b16 %v308
      %v533 = vunpack.c.l.b16 %v309
      %v534 = vunpack.c.l.b16 %v310
      %v535 = vunpack.c.l.b16 %v311
      %v536 = vunpack.c.l.b16 %v312
      %v537 = vunpack.c.l.b16 %v313
      %v538 = vunpack.c.l.b16 %v314
      %v539 = vunpack.c.l.b16 %v315
      %v540 = vunpack.c.l.b16 %v316
      %v541 = vunpack.c.l.b16 %v317
      %v542 = vunpack.c.l.b16 %v318
      %v543 = vunpack.c.l.b16 %v319
      %v544 = vunpack.c.l.b16 %v320
      %v545 = vunpack.c.l.b16 %v321
      %v546 = vunpack.c.l.b16 %v322
      %v547 = vunpack.c.l.b16 %v323
      %v548 = vunpack.c.l.b16 %v324
      %v549 = vunpack.c.l.b16 %v325
      %v550 = vunpack.c.l.b16 %v326
      %v551 = vunpack.c.l.b16 %v327
      %v552 = vunpack.c.l.b16 %v328
      %v553 = vunpack.c.l.b16 %v329
      %v554 = vunpack.c.l.b16 %v330
      %v555 = vunpack.c.l.b16 %v331
      %v556 = vunpack.c.l.b16 %v332
      %v557 = vunpack.c.l.b16 %v333
      %v558 = vunpack.c.l.b16 %v334
      %v559 = vunpack.c.l.b16 %v335
      %v560 = vunpack.c.l.b16 %v336
      %v561 = vunpack.c.l.b16 %v337
      %v562 = vunpack.c.l.b16 %v338
      %v563 = vunpack.c.l.b16 %v339
      %v564 = vunpack.c.l.b16 %v340
      %v565 = vunpack.c.l.b16 %v341
      %v566 = vunpack.c.l.b16 %v342
      %v567 = vpack.c.b16 %v520, %v519
      %v568 = vpack.c.b16 %v522, %v521
      %v569 = vpack.c.b16 %v524, %v523
      %v570 = vpack.c.b16 %v526, %v525
      %v571 = vpack.c.b16 %v528, %v527
      %v572 = vpack.c.b16 %v530, %v529
      %v573 = vpack.c.b16 %v532, %v531
      %v574 = vpack.c.b16 %v534, %v533
      %v575 = vpack.c.b16 %v536, %v535
      %v576 = vpack.c.b16 %v538, %v537
      %v577 = vpack.c.b16 %v540, %v539
      %v578 = vpack.c.b16 %v542, %v541
      %v579 = vpack.c.b16 %v544, %v543
      %v580 = vpack.c.b16 %v546, %v545
      %v581 = vpack.c.b16 %v548, %v547
      %v582 = vpack.c.b16 %v550, %v549
      %v583 = vpack.c.b16 %v552, %v551
      %v584 = vpack.c.b16 %v554, %v553
      %v585 = vpack.c.b16 %v556, %v555
      %v586 = vpack.c.b16 %v558, %v557
      %v587 = vpack.c.b16 %v560, %v559
      %v588 = vpack.c.b16 %v562, %v561
      %v589 = vpack.c.b16 %v564, %v563
      %v590 = vpack.c.b16 %v566, %v565
      %615 = vmatprep.subr.bf16.mxu0 0
      %616 = vmatpush1.bf16.msra.mxu0 %v574
      %617 = vmatprep.subr.bf16.mxu0 0
      %618 = vmatpush1.bf16.msra.mxu0 %v573
      %619 = vmatprep.subr.bf16.mxu0 0
      %620 = vmatpush1.bf16.msra.mxu0 %v572
      %621 = vmatprep.subr.bf16.mxu0 0
      %622 = vmatpush1.bf16.msra.mxu0 %v571
      %623 = vmatprep.subr.bf16.mxu0 0
      %624 = vmatpush1.bf16.msra.mxu0 %v570
      %625 = vmatprep.subr.bf16.mxu0 0
      %626 = vmatpush1.bf16.msra.mxu0 %v569
      %627 = vmatprep.subr.bf16.mxu0 0
      %628 = vmatpush1.bf16.msra.mxu0 %v568
      %629 = vmatprep.subr.bf16.mxu0 0
      %630 = vmatpush1.bf16.msra.mxu0 %v567
      %631 = vmatprep.subr.bf16.mxu0 0
      %632 = vmatpush2.bf16.msra.mxu0 %v582
      %633 = vmatprep.subr.bf16.mxu0 0
      %634 = vmatpush2.bf16.msra.mxu0 %v581
      %635 = vmatprep.subr.bf16.mxu0 0
      %636 = vmatpush2.bf16.msra.mxu0 %v580
      %637 = vmatprep.subr.bf16.mxu0 0
      %638 = vmatpush2.bf16.msra.mxu0 %v579
      %639 = vmatprep.subr.bf16.mxu0 0
      %640 = vmatpush2.bf16.msra.mxu0 %v578
      %641 = vmatprep.subr.bf16.mxu0 0
      %642 = vmatpush2.bf16.msra.mxu0 %v577
      %643 = vmatprep.subr.bf16.mxu0 0
      %644 = vmatpush2.bf16.msra.mxu0 %v576
      %645 = vmatprep.subr.bf16.mxu0 0
      %646 = vmatpush2.bf16.msra.mxu0 %v575
      %647 = vmatprep.mubr.bf16.mxu0 %v424
      %648 = vmatmul.mubr.bf16.gmra.mxu0 %v423
      %v649 = vpop.f32.mrf.mxu0
      %v650 = vadd.f32 0.0, %v649
      %v651 = vpop.f32.mrf.mxu0
      %v652 = vpop.f32.mrf.mxu0
      %v653 = vadd.f32 0.0, %v652
      %v654 = vpop.f32.mrf.mxu0
      %655 = vmatprep.mubr.bf16.mxu0 %v427
      %656 = vmatmul.mubr.bf16.gmra.mxu0 %v426
      %v657 = vpop.f32.mrf.mxu0
      %v658 = vadd.f32 0.0, %v657
      %v659 = vpop.f32.mrf.mxu0
      %v660 = vpop.f32.mrf.mxu0
      %v661 = vadd.f32 0.0, %v660
      %v662 = vpop.f32.mrf.mxu0
      %663 = vmatprep.mubr.bf16.mxu0 %v430
      %664 = vmatmul.mubr.bf16.gmra.mxu0 %v429
      %v665 = vpop.f32.mrf.mxu0
      %v666 = vadd.f32 0.0, %v665
      %v667 = vpop.f32.mrf.mxu0
      %v668 = vpop.f32.mrf.mxu0
      %v669 = vadd.f32 0.0, %v668
      %v670 = vpop.f32.mrf.mxu0
      %671 = vmatprep.mubr.bf16.mxu0 %v433
      %672 = vmatmul.mubr.bf16.gmra.mxu0 %v432
      %v673 = vpop.f32.mrf.mxu0
      %v674 = vadd.f32 0.0, %v673
      %v675 = vpop.f32.mrf.mxu0
      %v676 = vpop.f32.mrf.mxu0
      %v677 = vadd.f32 0.0, %v676
      %v678 = vpop.f32.mrf.mxu0
      %679 = vmatprep.mubr.bf16.mxu0 %v436
      %680 = vmatmul.mubr.bf16.gmra.mxu0 %v435
      %v681 = vpop.f32.mrf.mxu0
      %v682 = vadd.f32 0.0, %v681
      %v683 = vpop.f32.mrf.mxu0
      %v684 = vpop.f32.mrf.mxu0
      %v685 = vadd.f32 0.0, %v684
      %v686 = vpop.f32.mrf.mxu0
      %687 = vmatprep.mubr.bf16.mxu0 %v439
      %688 = vmatmul.mubr.bf16.gmra.mxu0 %v438
      %v689 = vpop.f32.mrf.mxu0
      %v690 = vadd.f32 0.0, %v689
      %v691 = vpop.f32.mrf.mxu0
      %v692 = vpop.f32.mrf.mxu0
      %v693 = vadd.f32 0.0, %v692
      %v694 = vpop.f32.mrf.mxu0
      %695 = vmatprep.mubr.bf16.mxu0 %v442
      %696 = vmatmul.mubr.bf16.gmra.mxu0 %v441
      %v697 = vpop.f32.mrf.mxu0
      %v698 = vadd.f32 0.0, %v697
      %v699 = vpop.f32.mrf.mxu0
      %v700 = vpop.f32.mrf.mxu0
      %v701 = vadd.f32 0.0, %v700
      %v702 = vpop.f32.mrf.mxu0
      %703 = vmatprep.mubr.bf16.mxu0 %v445
      %704 = vmatmul.mubr.bf16.gmra.mxu0 %v444
      %v705 = vpop.f32.mrf.mxu0
      %v706 = vadd.f32 0.0, %v705
      %v707 = vpop.f32.mrf.mxu0
      %v708 = vpop.f32.mrf.mxu0
      %v709 = vadd.f32 0.0, %v708
      %v710 = vpop.f32.mrf.mxu0
      %711 = vdwg.mxu0
      %712 = vmatprep.subr.bf16.mxu0 0
      %713 = vmatpush1.bf16.msra.mxu0 %v590
      %714 = vmatprep.subr.bf16.mxu0 0
      %715 = vmatpush1.bf16.msra.mxu0 %v589
      %716 = vmatprep.subr.bf16.mxu0 0
      %717 = vmatpush1.bf16.msra.mxu0 %v588
      %718 = vmatprep.subr.bf16.mxu0 0
      %719 = vmatpush1.bf16.msra.mxu0 %v587
      %720 = vmatprep.subr.bf16.mxu0 0
      %721 = vmatpush1.bf16.msra.mxu0 %v586
      %722 = vmatprep.subr.bf16.mxu0 0
      %723 = vmatpush1.bf16.msra.mxu0 %v585
      %724 = vmatprep.subr.bf16.mxu0 0
      %725 = vmatpush1.bf16.msra.mxu0 %v584
      %726 = vmatprep.subr.bf16.mxu0 0
      %727 = vmatpush1.bf16.msra.mxu0 %v583
      %728 = vmatprep.subr.bf16.mxu0 0
      %729 = vmatpush2.bf16.msra.mxu0 0
      %730 = vmatprep.subr.bf16.mxu0 0
      %731 = vmatpush2.bf16.msra.mxu0 0
      %732 = vmatprep.subr.bf16.mxu0 0
      %733 = vmatpush2.bf16.msra.mxu0 0
      %734 = vmatprep.subr.bf16.mxu0 0
      %735 = vmatpush2.bf16.msra.mxu0 0
      %736 = vmatprep.subr.bf16.mxu0 0
      %737 = vmatpush2.bf16.msra.mxu0 0
      %738 = vmatprep.subr.bf16.mxu0 0
      %739 = vmatpush2.bf16.msra.mxu0 0
      %740 = vmatprep.subr.bf16.mxu0 0
      %741 = vmatpush2.bf16.msra.mxu0 0
      %742 = vmatprep.subr.bf16.mxu0 0
      %743 = vmatpush2.bf16.msra.mxu0 0
      %744 = vmatprep.mubr.bf16.mxu0 0
      %745 = vmatmul.mubr.bf16.gmra.mxu0 %v425
      %v746 = vpop.f32.mrf.mxu0
      %v747 = vadd.f32 %v650, %v746
      %v748 = vpop.f32.mrf.mxu0
      %v749 = vpop.f32.mrf.mxu0
      %v750 = vadd.f32 %v653, %v749
      %v751 = vpop.f32.mrf.mxu0
      %752 = vmatprep.mubr.bf16.mxu0 0
      %753 = vmatmul.mubr.bf16.gmra.mxu0 %v428
      %v754 = vpop.f32.mrf.mxu0
      %v755 = vadd.f32 %v658, %v754
      %v756 = vpop.f32.mrf.mxu0
      %v757 = vpop.f32.mrf.mxu0
      %v758 = vadd.f32 %v661, %v757
      %v759 = vpop.f32.mrf.mxu0
      %760 = vmatprep.mubr.bf16.mxu0 0
      %761 = vmatmul.mubr.bf16.gmra.mxu0 %v431
      %v762 = vpop.f32.mrf.mxu0
      %v763 = vadd.f32 %v666, %v762
      %v764 = vpop.f32.mrf.mxu0
      %v765 = vpop.f32.mrf.mxu0
      %v766 = vadd.f32 %v669, %v765
      %v767 = vpop.f32.mrf.mxu0
      %768 = vmatprep.mubr.bf16.mxu0 0
      %769 = vmatmul.mubr.bf16.gmra.mxu0 %v434
      %v770 = vpop.f32.mrf.mxu0
      %v771 = vadd.f32 %v674, %v770
      %v772 = vpop.f32.mrf.mxu0
      %v773 = vpop.f32.mrf.mxu0
      %v774 = vadd.f32 %v677, %v773
      %v775 = vpop.f32.mrf.mxu0
      %776 = vmatprep.mubr.bf16.mxu0 0
      %777 = vmatmul.mubr.bf16.gmra.mxu0 %v437
      %v778 = vpop.f32.mrf.mxu0
      %v779 = vadd.f32 %v682, %v778
      %v780 = vpop.f32.mrf.mxu0
      %v781 = vpop.f32.mrf.mxu0
      %v782 = vadd.f32 %v685, %v781
      %v783 = vpop.f32.mrf.mxu0
      %784 = vmatprep.mubr.bf16.mxu0 0
      %785 = vmatmul.mubr.bf16.gmra.mxu0 %v440
      %v786 = vpop.f32.mrf.mxu0
      %v787 = vadd.f32 %v690, %v786
      %v788 = vpop.f32.mrf.mxu0
      %v789 = vpop.f32.mrf.mxu0
      %v790 = vadd.f32 %v693, %v789
      %v791 = vpop.f32.mrf.mxu0
      %792 = vmatprep.mubr.bf16.mxu0 0
      %793 = vmatmul.mubr.bf16.gmra.mxu0 %v443
      %v794 = vpop.f32.mrf.mxu0
      %v795 = vadd.f32 %v698, %v794
      %v796 = vpop.f32.mrf.mxu0
      %v797 = vpop.f32.mrf.mxu0
      %v798 = vadd.f32 %v701, %v797
      %v799 = vpop.f32.mrf.mxu0
      %800 = vmatprep.mubr.bf16.mxu0 0
      %801 = vmatmul.mubr.bf16.gmra.mxu0 %v446
      %v802 = vpop.f32.mrf.mxu0
      %v803 = vadd.f32 %v706, %v802
      %v804 = vpop.f32.mrf.mxu0
      %v805 = vpop.f32.mrf.mxu0
      %v806 = vadd.f32 %v709, %v805
      %v807 = vpop.f32.mrf.mxu0
      %808 = vdwg.mxu0
      %v809 = vpack.c.bf16 %v750, %v747
      %v810 = vpack.c.bf16 %v758, %v755
      %v811 = vpack.c.bf16 %v766, %v763
      %v812 = vpack.c.bf16 %v774, %v771
      %v813 = vpack.c.bf16 %v782, %v779
      %v814 = vpack.c.bf16 %v790, %v787
      %v815 = vpack.c.bf16 %v798, %v795
      %v816 = vpack.c.bf16 %v806, %v803
      %v819 = vunpack.c.l.b16 %v246
      %v820 = vunpack.c.l.b16 %v247
      %v821 = vpack.c.b16 %v820, %v819
      %vm822 = vcmask 130048
      %v824 = vsel %vm822, %v821, 0
      %826 = vmatprep.subr.bf16.mxu0 0
      %827 = vmatpush1.bf16.msra.mxu0 0
      %828 = vmatprep.subr.bf16.mxu0 0
      %829 = vmatpush1.bf16.msra.mxu0 0
      %830 = vmatprep.subr.bf16.mxu0 0
      %831 = vmatpush1.bf16.msra.mxu0 0
      %832 = vmatprep.subr.bf16.mxu0 0
      %833 = vmatpush1.bf16.msra.mxu0 0
      %834 = vmatprep.subr.bf16.mxu0 0
      %835 = vmatpush1.bf16.msra.mxu0 0
      %836 = vmatprep.subr.bf16.mxu0 0
      %837 = vmatpush1.bf16.msra.mxu0 0
      %838 = vmatprep.subr.bf16.mxu0 0
      %839 = vmatpush1.bf16.msra.mxu0 0
      %840 = vmatprep.subr.bf16.mxu0 0
      %841 = vmatpush1.bf16.msra.mxu0 %v809
      %842 = vmatprep.subr.bf16.mxu0 0
      %843 = vmatpush2.bf16.msra.mxu0 0
      %844 = vmatprep.subr.bf16.mxu0 0
      %845 = vmatpush2.bf16.msra.mxu0 0
      %846 = vmatprep.subr.bf16.mxu0 0
      %847 = vmatpush2.bf16.msra.mxu0 0
      %848 = vmatprep.subr.bf16.mxu0 0
      %849 = vmatpush2.bf16.msra.mxu0 0
      %850 = vmatprep.subr.bf16.mxu0 0
      %851 = vmatpush2.bf16.msra.mxu0 0
      %852 = vmatprep.subr.bf16.mxu0 0
      %853 = vmatpush2.bf16.msra.mxu0 0
      %854 = vmatprep.subr.bf16.mxu0 0
      %855 = vmatpush2.bf16.msra.mxu0 0
      %856 = vmatprep.subr.bf16.mxu0 0
      %857 = vmatpush2.bf16.msra.mxu0 0
      %858 = vmatprep.mubr.bf16.mxu0 0
      %859 = vmatmul.mubr.bf16.gmra.mxu0 %v824
      %v860 = vpop.f32.mrf.mxu0
      %v861 = vadd.f32 0.0, %v860
      %v862 = vpop.f32.mrf.mxu0
      %v863 = vpop.f32.mrf.mxu0
      %v864 = vadd.f32 0.0, %v863
      %v865 = vpop.f32.mrf.mxu0
      %866 = vdwg.mxu0
      %v869 = vunpack.c.l.b16 %v248
      %v870 = vunpack.c.l.b16 %v249
      %v871 = vpack.c.b16 %v870, %v869
      %v873 = vsel %vm822, %v871, 0
      %875 = vmatprep.subr.bf16.mxu0 0
      %876 = vmatpush1.bf16.msra.mxu0 0
      %877 = vmatprep.subr.bf16.mxu0 0
      %878 = vmatpush1.bf16.msra.mxu0 0
      %879 = vmatprep.subr.bf16.mxu0 0
      %880 = vmatpush1.bf16.msra.mxu0 0
      %881 = vmatprep.subr.bf16.mxu0 0
      %882 = vmatpush1.bf16.msra.mxu0 0
      %883 = vmatprep.subr.bf16.mxu0 0
      %884 = vmatpush1.bf16.msra.mxu0 0
      %885 = vmatprep.subr.bf16.mxu0 0
      %886 = vmatpush1.bf16.msra.mxu0 0
      %887 = vmatprep.subr.bf16.mxu0 0
      %888 = vmatpush1.bf16.msra.mxu0 0
      %889 = vmatprep.subr.bf16.mxu0 0
      %890 = vmatpush1.bf16.msra.mxu0 %v810
      %891 = vmatprep.subr.bf16.mxu0 0
      %892 = vmatpush2.bf16.msra.mxu0 0
      %893 = vmatprep.subr.bf16.mxu0 0
      %894 = vmatpush2.bf16.msra.mxu0 0
      %895 = vmatprep.subr.bf16.mxu0 0
      %896 = vmatpush2.bf16.msra.mxu0 0
      %897 = vmatprep.subr.bf16.mxu0 0
      %898 = vmatpush2.bf16.msra.mxu0 0
      %899 = vmatprep.subr.bf16.mxu0 0
      %900 = vmatpush2.bf16.msra.mxu0 0
      %901 = vmatprep.subr.bf16.mxu0 0
      %902 = vmatpush2.bf16.msra.mxu0 0
      %903 = vmatprep.subr.bf16.mxu0 0
      %904 = vmatpush2.bf16.msra.mxu0 0
      %905 = vmatprep.subr.bf16.mxu0 0
      %906 = vmatpush2.bf16.msra.mxu0 0
      %907 = vmatprep.mubr.bf16.mxu0 0
      %908 = vmatmul.mubr.bf16.gmra.mxu0 %v873
      %v909 = vpop.f32.mrf.mxu0
      %v910 = vadd.f32 0.0, %v909
      %v911 = vpop.f32.mrf.mxu0
      %v912 = vpop.f32.mrf.mxu0
      %v913 = vadd.f32 0.0, %v912
      %v914 = vpop.f32.mrf.mxu0
      %915 = vdwg.mxu0
      %v918 = vunpack.c.l.b16 %v250
      %v919 = vunpack.c.l.b16 %v251
      %v920 = vpack.c.b16 %v919, %v918
      %v922 = vsel %vm822, %v920, 0
      %924 = vmatprep.subr.bf16.mxu0 0
      %925 = vmatpush1.bf16.msra.mxu0 0
      %926 = vmatprep.subr.bf16.mxu0 0
      %927 = vmatpush1.bf16.msra.mxu0 0
      %928 = vmatprep.subr.bf16.mxu0 0
      %929 = vmatpush1.bf16.msra.mxu0 0
      %930 = vmatprep.subr.bf16.mxu0 0
      %931 = vmatpush1.bf16.msra.mxu0 0
      %932 = vmatprep.subr.bf16.mxu0 0
      %933 = vmatpush1.bf16.msra.mxu0 0
      %934 = vmatprep.subr.bf16.mxu0 0
      %935 = vmatpush1.bf16.msra.mxu0 0
      %936 = vmatprep.subr.bf16.mxu0 0
      %937 = vmatpush1.bf16.msra.mxu0 0
      %938 = vmatprep.subr.bf16.mxu0 0
      %939 = vmatpush1.bf16.msra.mxu0 %v811
      %940 = vmatprep.subr.bf16.mxu0 0
      %941 = vmatpush2.bf16.msra.mxu0 0
      %942 = vmatprep.subr.bf16.mxu0 0
      %943 = vmatpush2.bf16.msra.mxu0 0
      %944 = vmatprep.subr.bf16.mxu0 0
      %945 = vmatpush2.bf16.msra.mxu0 0
      %946 = vmatprep.subr.bf16.mxu0 0
      %947 = vmatpush2.bf16.msra.mxu0 0
      %948 = vmatprep.subr.bf16.mxu0 0
      %949 = vmatpush2.bf16.msra.mxu0 0
      %950 = vmatprep.subr.bf16.mxu0 0
      %951 = vmatpush2.bf16.msra.mxu0 0
      %952 = vmatprep.subr.bf16.mxu0 0
      %953 = vmatpush2.bf16.msra.mxu0 0
      %954 = vmatprep.subr.bf16.mxu0 0
      %955 = vmatpush2.bf16.msra.mxu0 0
      %956 = vmatprep.mubr.bf16.mxu0 0
      %957 = vmatmul.mubr.bf16.gmra.mxu0 %v922
      %v958 = vpop.f32.mrf.mxu0
      %v959 = vadd.f32 0.0, %v958
      %v960 = vpop.f32.mrf.mxu0
      %v961 = vpop.f32.mrf.mxu0
      %v962 = vadd.f32 0.0, %v961
      %v963 = vpop.f32.mrf.mxu0
      %964 = vdwg.mxu0
      %v967 = vunpack.c.l.b16 %v252
      %v968 = vunpack.c.l.b16 %v253
      %v969 = vpack.c.b16 %v968, %v967
      %v971 = vsel %vm822, %v969, 0
      %973 = vmatprep.subr.bf16.mxu0 0
      %974 = vmatpush1.bf16.msra.mxu0 0
      %975 = vmatprep.subr.bf16.mxu0 0
      %976 = vmatpush1.bf16.msra.mxu0 0
      %977 = vmatprep.subr.bf16.mxu0 0
      %978 = vmatpush1.bf16.msra.mxu0 0
      %979 = vmatprep.subr.bf16.mxu0 0
      %980 = vmatpush1.bf16.msra.mxu0 0
      %981 = vmatprep.subr.bf16.mxu0 0
      %982 = vmatpush1.bf16.msra.mxu0 0
      %983 = vmatprep.subr.bf16.mxu0 0
      %984 = vmatpush1.bf16.msra.mxu0 0
      %985 = vmatprep.subr.bf16.mxu0 0
      %986 = vmatpush1.bf16.msra.mxu0 0
      %987 = vmatprep.subr.bf16.mxu0 0
      %988 = vmatpush1.bf16.msra.mxu0 %v812
      %989 = vmatprep.subr.bf16.mxu0 0
      %990 = vmatpush2.bf16.msra.mxu0 0
      %991 = vmatprep.subr.bf16.mxu0 0
      %992 = vmatpush2.bf16.msra.mxu0 0
      %993 = vmatprep.subr.bf16.mxu0 0
      %994 = vmatpush2.bf16.msra.mxu0 0
      %995 = vmatprep.subr.bf16.mxu0 0
      %996 = vmatpush2.bf16.msra.mxu0 0
      %997 = vmatprep.subr.bf16.mxu0 0
      %998 = vmatpush2.bf16.msra.mxu0 0
      %999 = vmatprep.subr.bf16.mxu0 0
      %1000 = vmatpush2.bf16.msra.mxu0 0
      %1001 = vmatprep.subr.bf16.mxu0 0
      %1002 = vmatpush2.bf16.msra.mxu0 0
      %1003 = vmatprep.subr.bf16.mxu0 0
      %1004 = vmatpush2.bf16.msra.mxu0 0
      %1005 = vmatprep.mubr.bf16.mxu0 0
      %1006 = vmatmul.mubr.bf16.gmra.mxu0 %v971
      %v1007 = vpop.f32.mrf.mxu0
      %v1008 = vadd.f32 0.0, %v1007
      %v1009 = vpop.f32.mrf.mxu0
      %v1010 = vpop.f32.mrf.mxu0
      %v1011 = vadd.f32 0.0, %v1010
      %v1012 = vpop.f32.mrf.mxu0
      %1013 = vdwg.mxu0
      %v1016 = vunpack.c.l.b16 %v254
      %v1017 = vunpack.c.l.b16 %v255
      %v1018 = vpack.c.b16 %v1017, %v1016
      %v1020 = vsel %vm822, %v1018, 0
      %1022 = vmatprep.subr.bf16.mxu0 0
      %1023 = vmatpush1.bf16.msra.mxu0 0
      %1024 = vmatprep.subr.bf16.mxu0 0
      %1025 = vmatpush1.bf16.msra.mxu0 0
      %1026 = vmatprep.subr.bf16.mxu0 0
      %1027 = vmatpush1.bf16.msra.mxu0 0
      %1028 = vmatprep.subr.bf16.mxu0 0
      %1029 = vmatpush1.bf16.msra.mxu0 0
      %1030 = vmatprep.subr.bf16.mxu0 0
      %1031 = vmatpush1.bf16.msra.mxu0 0
      %1032 = vmatprep.subr.bf16.mxu0 0
      %1033 = vmatpush1.bf16.msra.mxu0 0
      %1034 = vmatprep.subr.bf16.mxu0 0
      %1035 = vmatpush1.bf16.msra.mxu0 0
      %1036 = vmatprep.subr.bf16.mxu0 0
      %1037 = vmatpush1.bf16.msra.mxu0 %v813
      %1038 = vmatprep.subr.bf16.mxu0 0
      %1039 = vmatpush2.bf16.msra.mxu0 0
      %1040 = vmatprep.subr.bf16.mxu0 0
      %1041 = vmatpush2.bf16.msra.mxu0 0
      %1042 = vmatprep.subr.bf16.mxu0 0
      %1043 = vmatpush2.bf16.msra.mxu0 0
      %1044 = vmatprep.subr.bf16.mxu0 0
      %1045 = vmatpush2.bf16.msra.mxu0 0
      %1046 = vmatprep.subr.bf16.mxu0 0
      %1047 = vmatpush2.bf16.msra.mxu0 0
      %1048 = vmatprep.subr.bf16.mxu0 0
      %1049 = vmatpush2.bf16.msra.mxu0 0
      %1050 = vmatprep.subr.bf16.mxu0 0
      %1051 = vmatpush2.bf16.msra.mxu0 0
      %1052 = vmatprep.subr.bf16.mxu0 0
      %1053 = vmatpush2.bf16.msra.mxu0 0
      %1054 = vmatprep.mubr.bf16.mxu0 0
      %1055 = vmatmul.mubr.bf16.gmra.mxu0 %v1020
      %v1056 = vpop.f32.mrf.mxu0
      %v1057 = vadd.f32 0.0, %v1056
      %v1058 = vpop.f32.mrf.mxu0
      %v1059 = vpop.f32.mrf.mxu0
      %v1060 = vadd.f32 0.0, %v1059
      %v1061 = vpop.f32.mrf.mxu0
      %1062 = vdwg.mxu0
      %v1065 = vunpack.c.l.b16 %v256
      %v1066 = vunpack.c.l.b16 %v257
      %v1067 = vpack.c.b16 %v1066, %v1065
      %v1069 = vsel %vm822, %v1067, 0
      %1071 = vmatprep.subr.bf16.mxu0 0
      %1072 = vmatpush1.bf16.msra.mxu0 0
      %1073 = vmatprep.subr.bf16.mxu0 0
      %1074 = vmatpush1.bf16.msra.mxu0 0
      %1075 = vmatprep.subr.bf16.mxu0 0
      %1076 = vmatpush1.bf16.msra.mxu0 0
      %1077 = vmatprep.subr.bf16.mxu0 0
      %1078 = vmatpush1.bf16.msra.mxu0 0
      %1079 = vmatprep.subr.bf16.mxu0 0
      %1080 = vmatpush1.bf16.msra.mxu0 0
      %1081 = vmatprep.subr.bf16.mxu0 0
      %1082 = vmatpush1.bf16.msra.mxu0 0
      %1083 = vmatprep.subr.bf16.mxu0 0
      %1084 = vmatpush1.bf16.msra.mxu0 0
      %1085 = vmatprep.subr.bf16.mxu0 0
      %1086 = vmatpush1.bf16.msra.mxu0 %v814
      %1087 = vmatprep.subr.bf16.mxu0 0
      %1088 = vmatpush2.bf16.msra.mxu0 0
      %1089 = vmatprep.subr.bf16.mxu0 0
      %1090 = vmatpush2.bf16.msra.mxu0 0
      %1091 = vmatprep.subr.bf16.mxu0 0
      %1092 = vmatpush2.bf16.msra.mxu0 0
      %1093 = vmatprep.subr.bf16.mxu0 0
      %1094 = vmatpush2.bf16.msra.mxu0 0
      %1095 = vmatprep.subr.bf16.mxu0 0
      %1096 = vmatpush2.bf16.msra.mxu0 0
      %1097 = vmatprep.subr.bf16.mxu0 0
      %1098 = vmatpush2.bf16.msra.mxu0 0
      %1099 = vmatprep.subr.bf16.mxu0 0
      %1100 = vmatpush2.bf16.msra.mxu0 0
      %1101 = vmatprep.subr.bf16.mxu0 0
      %1102 = vmatpush2.bf16.msra.mxu0 0
      %1103 = vmatprep.mubr.bf16.mxu0 0
      %1104 = vmatmul.mubr.bf16.gmra.mxu0 %v1069
      %v1105 = vpop.f32.mrf.mxu0
      %v1106 = vadd.f32 0.0, %v1105
      %v1107 = vpop.f32.mrf.mxu0
      %v1108 = vpop.f32.mrf.mxu0
      %v1109 = vadd.f32 0.0, %v1108
      %v1110 = vpop.f32.mrf.mxu0
      %1111 = vdwg.mxu0
      %v1114 = vunpack.c.l.b16 %v258
      %v1115 = vunpack.c.l.b16 %v259
      %v1116 = vpack.c.b16 %v1115, %v1114
      %v1118 = vsel %vm822, %v1116, 0
      %1120 = vmatprep.subr.bf16.mxu0 0
      %1121 = vmatpush1.bf16.msra.mxu0 0
      %1122 = vmatprep.subr.bf16.mxu0 0
      %1123 = vmatpush1.bf16.msra.mxu0 0
      %1124 = vmatprep.subr.bf16.mxu0 0
      %1125 = vmatpush1.bf16.msra.mxu0 0
      %1126 = vmatprep.subr.bf16.mxu0 0
      %1127 = vmatpush1.bf16.msra.mxu0 0
      %1128 = vmatprep.subr.bf16.mxu0 0
      %1129 = vmatpush1.bf16.msra.mxu0 0
      %1130 = vmatprep.subr.bf16.mxu0 0
      %1131 = vmatpush1.bf16.msra.mxu0 0
      %1132 = vmatprep.subr.bf16.mxu0 0
      %1133 = vmatpush1.bf16.msra.mxu0 0
      %1134 = vmatprep.subr.bf16.mxu0 0
      %1135 = vmatpush1.bf16.msra.mxu0 %v815
      %1136 = vmatprep.subr.bf16.mxu0 0
      %1137 = vmatpush2.bf16.msra.mxu0 0
      %1138 = vmatprep.subr.bf16.mxu0 0
      %1139 = vmatpush2.bf16.msra.mxu0 0
      %1140 = vmatprep.subr.bf16.mxu0 0
      %1141 = vmatpush2.bf16.msra.mxu0 0
      %1142 = vmatprep.subr.bf16.mxu0 0
      %1143 = vmatpush2.bf16.msra.mxu0 0
      %1144 = vmatprep.subr.bf16.mxu0 0
      %1145 = vmatpush2.bf16.msra.mxu0 0
      %1146 = vmatprep.subr.bf16.mxu0 0
      %1147 = vmatpush2.bf16.msra.mxu0 0
      %1148 = vmatprep.subr.bf16.mxu0 0
      %1149 = vmatpush2.bf16.msra.mxu0 0
      %1150 = vmatprep.subr.bf16.mxu0 0
      %1151 = vmatpush2.bf16.msra.mxu0 0
      %1152 = vmatprep.mubr.bf16.mxu0 0
      %1153 = vmatmul.mubr.bf16.gmra.mxu0 %v1118
      %v1154 = vpop.f32.mrf.mxu0
      %v1155 = vadd.f32 0.0, %v1154
      %v1156 = vpop.f32.mrf.mxu0
      %v1157 = vpop.f32.mrf.mxu0
      %v1158 = vadd.f32 0.0, %v1157
      %v1159 = vpop.f32.mrf.mxu0
      %1160 = vdwg.mxu0
      %v1163 = vunpack.c.l.b16 %v260
      %v1164 = vunpack.c.l.b16 %v261
      %v1165 = vpack.c.b16 %v1164, %v1163
      %v1167 = vsel %vm822, %v1165, 0
      %1169 = vmatprep.subr.bf16.mxu0 0
      %1170 = vmatpush1.bf16.msra.mxu0 0
      %1171 = vmatprep.subr.bf16.mxu0 0
      %1172 = vmatpush1.bf16.msra.mxu0 0
      %1173 = vmatprep.subr.bf16.mxu0 0
      %1174 = vmatpush1.bf16.msra.mxu0 0
      %1175 = vmatprep.subr.bf16.mxu0 0
      %1176 = vmatpush1.bf16.msra.mxu0 0
      %1177 = vmatprep.subr.bf16.mxu0 0
      %1178 = vmatpush1.bf16.msra.mxu0 0
      %1179 = vmatprep.subr.bf16.mxu0 0
      %1180 = vmatpush1.bf16.msra.mxu0 0
      %1181 = vmatprep.subr.bf16.mxu0 0
      %1182 = vmatpush1.bf16.msra.mxu0 0
      %1183 = vmatprep.subr.bf16.mxu0 0
      %1184 = vmatpush1.bf16.msra.mxu0 %v816
      %1185 = vmatprep.subr.bf16.mxu0 0
      %1186 = vmatpush2.bf16.msra.mxu0 0
      %1187 = vmatprep.subr.bf16.mxu0 0
      %1188 = vmatpush2.bf16.msra.mxu0 0
      %1189 = vmatprep.subr.bf16.mxu0 0
      %1190 = vmatpush2.bf16.msra.mxu0 0
      %1191 = vmatprep.subr.bf16.mxu0 0
      %1192 = vmatpush2.bf16.msra.mxu0 0
      %1193 = vmatprep.subr.bf16.mxu0 0
      %1194 = vmatpush2.bf16.msra.mxu0 0
      %1195 = vmatprep.subr.bf16.mxu0 0
      %1196 = vmatpush2.bf16.msra.mxu0 0
      %1197 = vmatprep.subr.bf16.mxu0 0
      %1198 = vmatpush2.bf16.msra.mxu0 0
      %1199 = vmatprep.subr.bf16.mxu0 0
      %1200 = vmatpush2.bf16.msra.mxu0 0
      %1201 = vmatprep.mubr.bf16.mxu0 0
      %1202 = vmatmul.mubr.bf16.gmra.mxu0 %v1167
      %v1203 = vpop.f32.mrf.mxu0
      %v1204 = vadd.f32 0.0, %v1203
      %v1205 = vpop.f32.mrf.mxu0
      %v1206 = vpop.f32.mrf.mxu0
      %v1207 = vadd.f32 0.0, %v1206
      %v1208 = vpop.f32.mrf.mxu0
      %1209 = vdwg.mxu0
      %v1210 = vlaneseq
      %v1211 = vshrl.u32 %v1210, 7
      %v1212 = vsub.s32 0, %v1211
      %v1213 = vrot.slane %v294, %v1212
      %v1214 = vadd.f32 %v861, %v1213
      %v1215 = vadd.f32 %v864, %v1213
      %v1216 = vadd.f32 %v910, %v1213
      %v1217 = vadd.f32 %v913, %v1213
      %v1218 = vadd.f32 %v959, %v1213
      %v1219 = vadd.f32 %v962, %v1213
      %v1220 = vadd.f32 %v1008, %v1213
      %v1221 = vadd.f32 %v1011, %v1213
      %v1222 = vadd.f32 %v1057, %v1213
      %v1223 = vadd.f32 %v1060, %v1213
      %v1224 = vadd.f32 %v1106, %v1213
      %v1225 = vadd.f32 %v1109, %v1213
      %v1226 = vadd.f32 %v1155, %v1213
      %v1227 = vadd.f32 %v1158, %v1213
      %v1228 = vadd.f32 %v1204, %v1213
      %v1229 = vadd.f32 %v1207, %v1213
      %v1230 = vmax.f32 %v1214, 0.0
      %v1231 = vmax.f32 %v1215, 0.0
      %v1232 = vmax.f32 %v1216, 0.0
      %v1233 = vmax.f32 %v1217, 0.0
      %v1234 = vmax.f32 %v1218, 0.0
      %v1235 = vmax.f32 %v1219, 0.0
      %v1236 = vmax.f32 %v1220, 0.0
      %v1237 = vmax.f32 %v1221, 0.0
      %v1238 = vmax.f32 %v1222, 0.0
      %v1239 = vmax.f32 %v1223, 0.0
      %v1240 = vmax.f32 %v1224, 0.0
      %v1241 = vmax.f32 %v1225, 0.0
      %v1242 = vmax.f32 %v1226, 0.0
      %v1243 = vmax.f32 %v1227, 0.0
      %v1244 = vmax.f32 %v1228, 0.0
      %v1245 = vmax.f32 %v1229, 0.0
      %v1246 = vpack.c.bf16 %v1231, %v1230
      %v1247 = vpack.c.bf16 %v1233, %v1232
      %v1248 = vpack.c.bf16 %v1235, %v1234
      %v1249 = vpack.c.bf16 %v1237, %v1236
      %v1250 = vpack.c.bf16 %v1239, %v1238
      %v1251 = vpack.c.bf16 %v1241, %v1240
      %v1252 = vpack.c.bf16 %v1243, %v1242
      %v1253 = vpack.c.bf16 %v1245, %v1244
      %v1254 = vld [vmem:[%s3] sm:$0xf]
      %v1255 = vld [vmem:[%s3 + $0x4] sm:$0xf]
      %v1256 = vld [vmem:[%s3 + $0x8] sm:$0xf]
      %v1257 = vld [vmem:[%s3 + $0xc] sm:$0xf]
      %v1258 = vld [vmem:[%s3 + $0x10] sm:$0xf]
      %v1259 = vld [vmem:[%s3 + $0x14] sm:$0xf]
      %v1260 = vld [vmem:[%s3 + $0x18] sm:$0xf]
      %v1261 = vld [vmem:[%s3 + $0x1c] sm:$0xf]
      %v1262 = vld [vmem:[%s3 + $0x20] sm:$0xf]
      %v1263 = vld [vmem:[%s3 + $0x24] sm:$0xf]
      %v1264 = vld [vmem:[%s3 + $0x28] sm:$0xf]
      %v1265 = vld [vmem:[%s3 + $0x2c] sm:$0xf]
      %v1266 = vld [vmem:[%s3 + $0x30] sm:$0xf]
      %v1267 = vld [vmem:[%s3 + $0x34] sm:$0xf]
      %v1268 = vld [vmem:[%s3 + $0x38] sm:$0xf]
      %v1269 = vld [vmem:[%s3 + $0x3c] sm:$0xf]
      %v1286 = vunpack.c.l.b16 %v1254
      %v1287 = vunpack.c.l.b16 %v1255
      %v1288 = vunpack.c.l.b16 %v1256
      %v1289 = vunpack.c.l.b16 %v1257
      %v1290 = vunpack.c.l.b16 %v1258
      %v1291 = vunpack.c.l.b16 %v1259
      %v1292 = vunpack.c.l.b16 %v1260
      %v1293 = vunpack.c.l.b16 %v1261
      %v1294 = vunpack.c.l.b16 %v1262
      %v1295 = vunpack.c.l.b16 %v1263
      %v1296 = vunpack.c.l.b16 %v1264
      %v1297 = vunpack.c.l.b16 %v1265
      %v1298 = vunpack.c.l.b16 %v1266
      %v1299 = vunpack.c.l.b16 %v1267
      %v1300 = vunpack.c.l.b16 %v1268
      %v1301 = vunpack.c.l.b16 %v1269
      %v1302 = vpack.c.b16 %v1287, %v1286
      %v1303 = vpack.c.b16 %v1289, %v1288
      %v1304 = vpack.c.b16 %v1291, %v1290
      %v1305 = vpack.c.b16 %v1293, %v1292
      %v1306 = vpack.c.b16 %v1295, %v1294
      %v1307 = vpack.c.b16 %v1297, %v1296
      %v1308 = vpack.c.b16 %v1299, %v1298
      %v1309 = vpack.c.b16 %v1301, %v1300
      %1318 = vmatprep.subr.bf16.mxu0 0
      %1319 = vmatpush1.bf16.msra.mxu0 %v1309
      %1320 = vmatprep.subr.bf16.mxu0 0
      %1321 = vmatpush1.bf16.msra.mxu0 %v1308
      %1322 = vmatprep.subr.bf16.mxu0 0
      %1323 = vmatpush1.bf16.msra.mxu0 %v1307
      %1324 = vmatprep.subr.bf16.mxu0 0
      %1325 = vmatpush1.bf16.msra.mxu0 %v1306
      %1326 = vmatprep.subr.bf16.mxu0 0
      %1327 = vmatpush1.bf16.msra.mxu0 %v1305
      %1328 = vmatprep.subr.bf16.mxu0 0
      %1329 = vmatpush1.bf16.msra.mxu0 %v1304
      %1330 = vmatprep.subr.bf16.mxu0 0
      %1331 = vmatpush1.bf16.msra.mxu0 %v1303
      %1332 = vmatprep.subr.bf16.mxu0 0
      %1333 = vmatpush1.bf16.msra.mxu0 %v1302
      %1334 = vmatprep.subr.bf16.mxu0 0
      %1335 = vmatpush2.bf16.msra.mxu0 0
      %1336 = vmatprep.subr.bf16.mxu0 0
      %1337 = vmatpush2.bf16.msra.mxu0 0
      %1338 = vmatprep.subr.bf16.mxu0 0
      %1339 = vmatpush2.bf16.msra.mxu0 0
      %1340 = vmatprep.subr.bf16.mxu0 0
      %1341 = vmatpush2.bf16.msra.mxu0 0
      %1342 = vmatprep.subr.bf16.mxu0 0
      %1343 = vmatpush2.bf16.msra.mxu0 0
      %1344 = vmatprep.subr.bf16.mxu0 0
      %1345 = vmatpush2.bf16.msra.mxu0 0
      %1346 = vmatprep.subr.bf16.mxu0 0
      %1347 = vmatpush2.bf16.msra.mxu0 0
      %1348 = vmatprep.subr.bf16.mxu0 0
      %1349 = vmatpush2.bf16.msra.mxu0 0
      %1350 = vmatprep.mubr.bf16.mxu0 0
      %1351 = vmatmul.mubr.bf16.gmra.mxu0 %v1246
      %v1352 = vpop.f32.mrf.mxu0
      %v1353 = vadd.f32 0.0, %v1352
      %v1354 = vpop.f32.mrf.mxu0
      %v1355 = vpop.f32.mrf.mxu0
      %v1356 = vadd.f32 0.0, %v1355
      %v1357 = vpop.f32.mrf.mxu0
      %1358 = vmatprep.mubr.bf16.mxu0 0
      %1359 = vmatmul.mubr.bf16.gmra.mxu0 %v1247
      %v1360 = vpop.f32.mrf.mxu0
      %v1361 = vadd.f32 0.0, %v1360
      %v1362 = vpop.f32.mrf.mxu0
      %v1363 = vpop.f32.mrf.mxu0
      %v1364 = vadd.f32 0.0, %v1363
      %v1365 = vpop.f32.mrf.mxu0
      %1366 = vmatprep.mubr.bf16.mxu0 0
      %1367 = vmatmul.mubr.bf16.gmra.mxu0 %v1248
      %v1368 = vpop.f32.mrf.mxu0
      %v1369 = vadd.f32 0.0, %v1368
      %v1370 = vpop.f32.mrf.mxu0
      %v1371 = vpop.f32.mrf.mxu0
      %v1372 = vadd.f32 0.0, %v1371
      %v1373 = vpop.f32.mrf.mxu0
      %1374 = vmatprep.mubr.bf16.mxu0 0
      %1375 = vmatmul.mubr.bf16.gmra.mxu0 %v1249
      %v1376 = vpop.f32.mrf.mxu0
      %v1377 = vadd.f32 0.0, %v1376
      %v1378 = vpop.f32.mrf.mxu0
      %v1379 = vpop.f32.mrf.mxu0
      %v1380 = vadd.f32 0.0, %v1379
      %v1381 = vpop.f32.mrf.mxu0
      %1382 = vmatprep.mubr.bf16.mxu0 0
      %1383 = vmatmul.mubr.bf16.gmra.mxu0 %v1250
      %v1384 = vpop.f32.mrf.mxu0
      %v1385 = vadd.f32 0.0, %v1384
      %v1386 = vpop.f32.mrf.mxu0
      %v1387 = vpop.f32.mrf.mxu0
      %v1388 = vadd.f32 0.0, %v1387
      %v1389 = vpop.f32.mrf.mxu0
      %1390 = vmatprep.mubr.bf16.mxu0 0
      %1391 = vmatmul.mubr.bf16.gmra.mxu0 %v1251
      %v1392 = vpop.f32.mrf.mxu0
      %v1393 = vadd.f32 0.0, %v1392
      %v1394 = vpop.f32.mrf.mxu0
      %v1395 = vpop.f32.mrf.mxu0
      %v1396 = vadd.f32 0.0, %v1395
      %v1397 = vpop.f32.mrf.mxu0
      %1398 = vmatprep.mubr.bf16.mxu0 0
      %1399 = vmatmul.mubr.bf16.gmra.mxu0 %v1252
      %v1400 = vpop.f32.mrf.mxu0
      %v1401 = vadd.f32 0.0, %v1400
      %v1402 = vpop.f32.mrf.mxu0
      %v1403 = vpop.f32.mrf.mxu0
      %v1404 = vadd.f32 0.0, %v1403
      %v1405 = vpop.f32.mrf.mxu0
      %1406 = vmatprep.mubr.bf16.mxu0 0
      %1407 = vmatmul.mubr.bf16.gmra.mxu0 %v1253
      %v1408 = vpop.f32.mrf.mxu0
      %v1409 = vadd.f32 0.0, %v1408
      %v1410 = vpop.f32.mrf.mxu0
      %v1411 = vpop.f32.mrf.mxu0
      %v1412 = vadd.f32 0.0, %v1411
      %v1413 = vpop.f32.mrf.mxu0
      %1414 = vdwg.mxu0
      %v1415 = vpack.c.bf16 %v1356, %v1353
      %v1416 = vpack.c.bf16 %v1364, %v1361
      %v1417 = vpack.c.bf16 %v1372, %v1369
      %v1418 = vpack.c.bf16 %v1380, %v1377
      %v1419 = vpack.c.bf16 %v1388, %v1385
      %v1420 = vpack.c.bf16 %v1396, %v1393
      %v1421 = vpack.c.bf16 %v1404, %v1401
      %v1422 = vpack.c.bf16 %v1412, %v1409
      %1423 = vmatprep.subr.bf16.mxu0 0
      %1424 = vmatpush1.bf16.msra.mxu0 0
      %1425 = vmatprep.subr.bf16.mxu0 0
      %1426 = vmatpush1.bf16.msra.mxu0 0
      %1427 = vmatprep.subr.bf16.mxu0 0
      %1428 = vmatpush1.bf16.msra.mxu0 0
      %1429 = vmatprep.subr.bf16.mxu0 0
      %1430 = vmatpush1.bf16.msra.mxu0 0
      %1431 = vmatprep.subr.bf16.mxu0 0
      %1432 = vmatpush1.bf16.msra.mxu0 0
      %1433 = vmatprep.subr.bf16.mxu0 0
      %1434 = vmatpush1.bf16.msra.mxu0 0
      %1435 = vmatprep.subr.bf16.mxu0 0
      %1436 = vmatpush1.bf16.msra.mxu0 0
      %1437 = vmatprep.subr.bf16.mxu0 0
      %1438 = vmatpush1.bf16.msra.mxu0 %v1415
      %1439 = vmatprep.subr.bf16.mxu0 0
      %1440 = vmatpush2.bf16.msra.mxu0 0
      %1441 = vmatprep.subr.bf16.mxu0 0
      %1442 = vmatpush2.bf16.msra.mxu0 0
      %1443 = vmatprep.subr.bf16.mxu0 0
      %1444 = vmatpush2.bf16.msra.mxu0 0
      %1445 = vmatprep.subr.bf16.mxu0 0
      %1446 = vmatpush2.bf16.msra.mxu0 0
      %1447 = vmatprep.subr.bf16.mxu0 0
      %1448 = vmatpush2.bf16.msra.mxu0 0
      %1449 = vmatprep.subr.bf16.mxu0 0
      %1450 = vmatpush2.bf16.msra.mxu0 0
      %1451 = vmatprep.subr.bf16.mxu0 0
      %1452 = vmatpush2.bf16.msra.mxu0 0
      %1453 = vmatprep.subr.bf16.mxu0 0
      %1454 = vmatpush2.bf16.msra.mxu0 0
      %1455 = vmatprep.mubr.bf16.mxu0 0
      %1456 = vmatmul.mubr.bf16.gmra.mxu0 %v824
      %v1457 = vpop.f32.mrf.mxu0
      %v1458 = vadd.f32 0.0, %v1457
      %v1459 = vpop.f32.mrf.mxu0
      %v1460 = vpop.f32.mrf.mxu0
      %v1461 = vadd.f32 0.0, %v1460
      %v1462 = vpop.f32.mrf.mxu0
      %1463 = vdwg.mxu0
      %1464 = vmatprep.subr.bf16.mxu0 0
      %1465 = vmatpush1.bf16.msra.mxu0 0
      %1466 = vmatprep.subr.bf16.mxu0 0
      %1467 = vmatpush1.bf16.msra.mxu0 0
      %1468 = vmatprep.subr.bf16.mxu0 0
      %1469 = vmatpush1.bf16.msra.mxu0 0
      %1470 = vmatprep.subr.bf16.mxu0 0
      %1471 = vmatpush1.bf16.msra.mxu0 0
      %1472 = vmatprep.subr.bf16.mxu0 0
      %1473 = vmatpush1.bf16.msra.mxu0 0
      %1474 = vmatprep.subr.bf16.mxu0 0
      %1475 = vmatpush1.bf16.msra.mxu0 0
      %1476 = vmatprep.subr.bf16.mxu0 0
      %1477 = vmatpush1.bf16.msra.mxu0 0
      %1478 = vmatprep.subr.bf16.mxu0 0
      %1479 = vmatpush1.bf16.msra.mxu0 %v1416
      %1480 = vmatprep.subr.bf16.mxu0 0
      %1481 = vmatpush2.bf16.msra.mxu0 0
      %1482 = vmatprep.subr.bf16.mxu0 0
      %1483 = vmatpush2.bf16.msra.mxu0 0
      %1484 = vmatprep.subr.bf16.mxu0 0
      %1485 = vmatpush2.bf16.msra.mxu0 0
      %1486 = vmatprep.subr.bf16.mxu0 0
      %1487 = vmatpush2.bf16.msra.mxu0 0
      %1488 = vmatprep.subr.bf16.mxu0 0
      %1489 = vmatpush2.bf16.msra.mxu0 0
      %1490 = vmatprep.subr.bf16.mxu0 0
      %1491 = vmatpush2.bf16.msra.mxu0 0
      %1492 = vmatprep.subr.bf16.mxu0 0
      %1493 = vmatpush2.bf16.msra.mxu0 0
      %1494 = vmatprep.subr.bf16.mxu0 0
      %1495 = vmatpush2.bf16.msra.mxu0 0
      %1496 = vmatprep.mubr.bf16.mxu0 0
      %1497 = vmatmul.mubr.bf16.gmra.mxu0 %v873
      %v1498 = vpop.f32.mrf.mxu0
      %v1499 = vadd.f32 0.0, %v1498
      %v1500 = vpop.f32.mrf.mxu0
      %v1501 = vpop.f32.mrf.mxu0
      %v1502 = vadd.f32 0.0, %v1501
      %v1503 = vpop.f32.mrf.mxu0
      %1504 = vdwg.mxu0
      %1505 = vmatprep.subr.bf16.mxu0 0
      %1506 = vmatpush1.bf16.msra.mxu0 0
      %1507 = vmatprep.subr.bf16.mxu0 0
      %1508 = vmatpush1.bf16.msra.mxu0 0
      %1509 = vmatprep.subr.bf16.mxu0 0
      %1510 = vmatpush1.bf16.msra.mxu0 0
      %1511 = vmatprep.subr.bf16.mxu0 0
      %1512 = vmatpush1.bf16.msra.mxu0 0
      %1513 = vmatprep.subr.bf16.mxu0 0
      %1514 = vmatpush1.bf16.msra.mxu0 0
      %1515 = vmatprep.subr.bf16.mxu0 0
      %1516 = vmatpush1.bf16.msra.mxu0 0
      %1517 = vmatprep.subr.bf16.mxu0 0
      %1518 = vmatpush1.bf16.msra.mxu0 0
      %1519 = vmatprep.subr.bf16.mxu0 0
      %1520 = vmatpush1.bf16.msra.mxu0 %v1417
      %1521 = vmatprep.subr.bf16.mxu0 0
      %1522 = vmatpush2.bf16.msra.mxu0 0
      %1523 = vmatprep.subr.bf16.mxu0 0
      %1524 = vmatpush2.bf16.msra.mxu0 0
      %1525 = vmatprep.subr.bf16.mxu0 0
      %1526 = vmatpush2.bf16.msra.mxu0 0
      %1527 = vmatprep.subr.bf16.mxu0 0
      %1528 = vmatpush2.bf16.msra.mxu0 0
      %1529 = vmatprep.subr.bf16.mxu0 0
      %1530 = vmatpush2.bf16.msra.mxu0 0
      %1531 = vmatprep.subr.bf16.mxu0 0
      %1532 = vmatpush2.bf16.msra.mxu0 0
      %1533 = vmatprep.subr.bf16.mxu0 0
      %1534 = vmatpush2.bf16.msra.mxu0 0
      %1535 = vmatprep.subr.bf16.mxu0 0
      %1536 = vmatpush2.bf16.msra.mxu0 0
      %1537 = vmatprep.mubr.bf16.mxu0 0
      %1538 = vmatmul.mubr.bf16.gmra.mxu0 %v922
      %v1539 = vpop.f32.mrf.mxu0
      %v1540 = vadd.f32 0.0, %v1539
      %v1541 = vpop.f32.mrf.mxu0
      %v1542 = vpop.f32.mrf.mxu0
      %v1543 = vadd.f32 0.0, %v1542
      %v1544 = vpop.f32.mrf.mxu0
      %1545 = vdwg.mxu0
      %1546 = vmatprep.subr.bf16.mxu0 0
      %1547 = vmatpush1.bf16.msra.mxu0 0
      %1548 = vmatprep.subr.bf16.mxu0 0
      %1549 = vmatpush1.bf16.msra.mxu0 0
      %1550 = vmatprep.subr.bf16.mxu0 0
      %1551 = vmatpush1.bf16.msra.mxu0 0
      %1552 = vmatprep.subr.bf16.mxu0 0
      %1553 = vmatpush1.bf16.msra.mxu0 0
      %1554 = vmatprep.subr.bf16.mxu0 0
      %1555 = vmatpush1.bf16.msra.mxu0 0
      %1556 = vmatprep.subr.bf16.mxu0 0
      %1557 = vmatpush1.bf16.msra.mxu0 0
      %1558 = vmatprep.subr.bf16.mxu0 0
      %1559 = vmatpush1.bf16.msra.mxu0 0
      %1560 = vmatprep.subr.bf16.mxu0 0
      %1561 = vmatpush1.bf16.msra.mxu0 %v1418
      %1562 = vmatprep.subr.bf16.mxu0 0
      %1563 = vmatpush2.bf16.msra.mxu0 0
      %1564 = vmatprep.subr.bf16.mxu0 0
      %1565 = vmatpush2.bf16.msra.mxu0 0
      %1566 = vmatprep.subr.bf16.mxu0 0
      %1567 = vmatpush2.bf16.msra.mxu0 0
      %1568 = vmatprep.subr.bf16.mxu0 0
      %1569 = vmatpush2.bf16.msra.mxu0 0
      %1570 = vmatprep.subr.bf16.mxu0 0
      %1571 = vmatpush2.bf16.msra.mxu0 0
      %1572 = vmatprep.subr.bf16.mxu0 0
      %1573 = vmatpush2.bf16.msra.mxu0 0
      %1574 = vmatprep.subr.bf16.mxu0 0
      %1575 = vmatpush2.bf16.msra.mxu0 0
      %1576 = vmatprep.subr.bf16.mxu0 0
      %1577 = vmatpush2.bf16.msra.mxu0 0
      %1578 = vmatprep.mubr.bf16.mxu0 0
      %1579 = vmatmul.mubr.bf16.gmra.mxu0 %v971
      %v1580 = vpop.f32.mrf.mxu0
      %v1581 = vadd.f32 0.0, %v1580
      %v1582 = vpop.f32.mrf.mxu0
      %v1583 = vpop.f32.mrf.mxu0
      %v1584 = vadd.f32 0.0, %v1583
      %v1585 = vpop.f32.mrf.mxu0
      %1586 = vdwg.mxu0
      %1587 = vmatprep.subr.bf16.mxu0 0
      %1588 = vmatpush1.bf16.msra.mxu0 0
      %1589 = vmatprep.subr.bf16.mxu0 0
      %1590 = vmatpush1.bf16.msra.mxu0 0
      %1591 = vmatprep.subr.bf16.mxu0 0
      %1592 = vmatpush1.bf16.msra.mxu0 0
      %1593 = vmatprep.subr.bf16.mxu0 0
      %1594 = vmatpush1.bf16.msra.mxu0 0
      %1595 = vmatprep.subr.bf16.mxu0 0
      %1596 = vmatpush1.bf16.msra.mxu0 0
      %1597 = vmatprep.subr.bf16.mxu0 0
      %1598 = vmatpush1.bf16.msra.mxu0 0
      %1599 = vmatprep.subr.bf16.mxu0 0
      %1600 = vmatpush1.bf16.msra.mxu0 0
      %1601 = vmatprep.subr.bf16.mxu0 0
      %1602 = vmatpush1.bf16.msra.mxu0 %v1419
      %1603 = vmatprep.subr.bf16.mxu0 0
      %1604 = vmatpush2.bf16.msra.mxu0 0
      %1605 = vmatprep.subr.bf16.mxu0 0
      %1606 = vmatpush2.bf16.msra.mxu0 0
      %1607 = vmatprep.subr.bf16.mxu0 0
      %1608 = vmatpush2.bf16.msra.mxu0 0
      %1609 = vmatprep.subr.bf16.mxu0 0
      %1610 = vmatpush2.bf16.msra.mxu0 0
      %1611 = vmatprep.subr.bf16.mxu0 0
      %1612 = vmatpush2.bf16.msra.mxu0 0
      %1613 = vmatprep.subr.bf16.mxu0 0
      %1614 = vmatpush2.bf16.msra.mxu0 0
      %1615 = vmatprep.subr.bf16.mxu0 0
      %1616 = vmatpush2.bf16.msra.mxu0 0
      %1617 = vmatprep.subr.bf16.mxu0 0
      %1618 = vmatpush2.bf16.msra.mxu0 0
      %1619 = vmatprep.mubr.bf16.mxu0 0
      %1620 = vmatmul.mubr.bf16.gmra.mxu0 %v1020
      %v1621 = vpop.f32.mrf.mxu0
      %v1622 = vadd.f32 0.0, %v1621
      %v1623 = vpop.f32.mrf.mxu0
      %v1624 = vpop.f32.mrf.mxu0
      %v1625 = vadd.f32 0.0, %v1624
      %v1626 = vpop.f32.mrf.mxu0
      %1627 = vdwg.mxu0
      %1628 = vmatprep.subr.bf16.mxu0 0
      %1629 = vmatpush1.bf16.msra.mxu0 0
      %1630 = vmatprep.subr.bf16.mxu0 0
      %1631 = vmatpush1.bf16.msra.mxu0 0
      %1632 = vmatprep.subr.bf16.mxu0 0
      %1633 = vmatpush1.bf16.msra.mxu0 0
      %1634 = vmatprep.subr.bf16.mxu0 0
      %1635 = vmatpush1.bf16.msra.mxu0 0
      %1636 = vmatprep.subr.bf16.mxu0 0
      %1637 = vmatpush1.bf16.msra.mxu0 0
      %1638 = vmatprep.subr.bf16.mxu0 0
      %1639 = vmatpush1.bf16.msra.mxu0 0
      %1640 = vmatprep.subr.bf16.mxu0 0
      %1641 = vmatpush1.bf16.msra.mxu0 0
      %1642 = vmatprep.subr.bf16.mxu0 0
      %1643 = vmatpush1.bf16.msra.mxu0 %v1420
      %1644 = vmatprep.subr.bf16.mxu0 0
      %1645 = vmatpush2.bf16.msra.mxu0 0
      %1646 = vmatprep.subr.bf16.mxu0 0
      %1647 = vmatpush2.bf16.msra.mxu0 0
      %1648 = vmatprep.subr.bf16.mxu0 0
      %1649 = vmatpush2.bf16.msra.mxu0 0
      %1650 = vmatprep.subr.bf16.mxu0 0
      %1651 = vmatpush2.bf16.msra.mxu0 0
      %1652 = vmatprep.subr.bf16.mxu0 0
      %1653 = vmatpush2.bf16.msra.mxu0 0
      %1654 = vmatprep.subr.bf16.mxu0 0
      %1655 = vmatpush2.bf16.msra.mxu0 0
      %1656 = vmatprep.subr.bf16.mxu0 0
      %1657 = vmatpush2.bf16.msra.mxu0 0
      %1658 = vmatprep.subr.bf16.mxu0 0
      %1659 = vmatpush2.bf16.msra.mxu0 0
      %1660 = vmatprep.mubr.bf16.mxu0 0
      %1661 = vmatmul.mubr.bf16.gmra.mxu0 %v1069
      %v1662 = vpop.f32.mrf.mxu0
      %v1663 = vadd.f32 0.0, %v1662
      %v1664 = vpop.f32.mrf.mxu0
      %v1665 = vpop.f32.mrf.mxu0
      %v1666 = vadd.f32 0.0, %v1665
      %v1667 = vpop.f32.mrf.mxu0
      %1668 = vdwg.mxu0
      %1669 = vmatprep.subr.bf16.mxu0 0
      %1670 = vmatpush1.bf16.msra.mxu0 0
      %1671 = vmatprep.subr.bf16.mxu0 0
      %1672 = vmatpush1.bf16.msra.mxu0 0
      %1673 = vmatprep.subr.bf16.mxu0 0
      %1674 = vmatpush1.bf16.msra.mxu0 0
      %1675 = vmatprep.subr.bf16.mxu0 0
      %1676 = vmatpush1.bf16.msra.mxu0 0
      %1677 = vmatprep.subr.bf16.mxu0 0
      %1678 = vmatpush1.bf16.msra.mxu0 0
      %1679 = vmatprep.subr.bf16.mxu0 0
      %1680 = vmatpush1.bf16.msra.mxu0 0
      %1681 = vmatprep.subr.bf16.mxu0 0
      %1682 = vmatpush1.bf16.msra.mxu0 0
      %1683 = vmatprep.subr.bf16.mxu0 0
      %1684 = vmatpush1.bf16.msra.mxu0 %v1421
      %1685 = vmatprep.subr.bf16.mxu0 0
      %1686 = vmatpush2.bf16.msra.mxu0 0
      %1687 = vmatprep.subr.bf16.mxu0 0
      %1688 = vmatpush2.bf16.msra.mxu0 0
      %1689 = vmatprep.subr.bf16.mxu0 0
      %1690 = vmatpush2.bf16.msra.mxu0 0
      %1691 = vmatprep.subr.bf16.mxu0 0
      %1692 = vmatpush2.bf16.msra.mxu0 0
      %1693 = vmatprep.subr.bf16.mxu0 0
      %1694 = vmatpush2.bf16.msra.mxu0 0
      %1695 = vmatprep.subr.bf16.mxu0 0
      %1696 = vmatpush2.bf16.msra.mxu0 0
      %1697 = vmatprep.subr.bf16.mxu0 0
      %1698 = vmatpush2.bf16.msra.mxu0 0
      %1699 = vmatprep.subr.bf16.mxu0 0
      %1700 = vmatpush2.bf16.msra.mxu0 0
      %1701 = vmatprep.mubr.bf16.mxu0 0
      %1702 = vmatmul.mubr.bf16.gmra.mxu0 %v1118
      %v1703 = vpop.f32.mrf.mxu0
      %v1704 = vadd.f32 0.0, %v1703
      %v1705 = vpop.f32.mrf.mxu0
      %v1706 = vpop.f32.mrf.mxu0
      %v1707 = vadd.f32 0.0, %v1706
      %v1708 = vpop.f32.mrf.mxu0
      %1709 = vdwg.mxu0
      %1710 = vmatprep.subr.bf16.mxu0 0
      %1711 = vmatpush1.bf16.msra.mxu0 0
      %1712 = vmatprep.subr.bf16.mxu0 0
      %1713 = vmatpush1.bf16.msra.mxu0 0
      %1714 = vmatprep.subr.bf16.mxu0 0
      %1715 = vmatpush1.bf16.msra.mxu0 0
      %1716 = vmatprep.subr.bf16.mxu0 0
      %1717 = vmatpush1.bf16.msra.mxu0 0
      %1718 = vmatprep.subr.bf16.mxu0 0
      %1719 = vmatpush1.bf16.msra.mxu0 0
      %1720 = vmatprep.subr.bf16.mxu0 0
      %1721 = vmatpush1.bf16.msra.mxu0 0
      %1722 = vmatprep.subr.bf16.mxu0 0
      %1723 = vmatpush1.bf16.msra.mxu0 0
      %1724 = vmatprep.subr.bf16.mxu0 0
      %1725 = vmatpush1.bf16.msra.mxu0 %v1422
      %1726 = vmatprep.subr.bf16.mxu0 0
      %1727 = vmatpush2.bf16.msra.mxu0 0
      %1728 = vmatprep.subr.bf16.mxu0 0
      %1729 = vmatpush2.bf16.msra.mxu0 0
      %1730 = vmatprep.subr.bf16.mxu0 0
      %1731 = vmatpush2.bf16.msra.mxu0 0
      %1732 = vmatprep.subr.bf16.mxu0 0
      %1733 = vmatpush2.bf16.msra.mxu0 0
      %1734 = vmatprep.subr.bf16.mxu0 0
      %1735 = vmatpush2.bf16.msra.mxu0 0
      %1736 = vmatprep.subr.bf16.mxu0 0
      %1737 = vmatpush2.bf16.msra.mxu0 0
      %1738 = vmatprep.subr.bf16.mxu0 0
      %1739 = vmatpush2.bf16.msra.mxu0 0
      %1740 = vmatprep.subr.bf16.mxu0 0
      %1741 = vmatpush2.bf16.msra.mxu0 0
      %1742 = vmatprep.mubr.bf16.mxu0 0
      %1743 = vmatmul.mubr.bf16.gmra.mxu0 %v1167
      %v1744 = vpop.f32.mrf.mxu0
      %v1745 = vadd.f32 0.0, %v1744
      %v1746 = vpop.f32.mrf.mxu0
      %v1747 = vpop.f32.mrf.mxu0
      %v1748 = vadd.f32 0.0, %v1747
      %v1749 = vpop.f32.mrf.mxu0
      %1750 = vdwg.mxu0
      %v1751 = vlaneseq
      %v1752 = vshrl.u32 %v1751, 7
      %v1753 = vsub.s32 1, %v1752
      %v1754 = vrot.slane %v294, %v1753
      %v1755 = vadd.f32 %v1458, %v1754
      %v1756 = vadd.f32 %v1461, %v1754
      %v1757 = vadd.f32 %v1499, %v1754
      %v1758 = vadd.f32 %v1502, %v1754
      %v1759 = vadd.f32 %v1540, %v1754
      %v1760 = vadd.f32 %v1543, %v1754
      %v1761 = vadd.f32 %v1581, %v1754
      %v1762 = vadd.f32 %v1584, %v1754
      %v1763 = vadd.f32 %v1622, %v1754
      %v1764 = vadd.f32 %v1625, %v1754
      %v1765 = vadd.f32 %v1663, %v1754
      %v1766 = vadd.f32 %v1666, %v1754
      %v1767 = vadd.f32 %v1704, %v1754
      %v1768 = vadd.f32 %v1707, %v1754
      %v1769 = vadd.f32 %v1745, %v1754
      %v1770 = vadd.f32 %v1748, %v1754
      %v1771 = vmax.f32 %v1755, 0.0
      %v1772 = vmax.f32 %v1756, 0.0
      %v1773 = vmax.f32 %v1757, 0.0
      %v1774 = vmax.f32 %v1758, 0.0
      %v1775 = vmax.f32 %v1759, 0.0
      %v1776 = vmax.f32 %v1760, 0.0
      %v1777 = vmax.f32 %v1761, 0.0
      %v1778 = vmax.f32 %v1762, 0.0
      %v1779 = vmax.f32 %v1763, 0.0
      %v1780 = vmax.f32 %v1764, 0.0
      %v1781 = vmax.f32 %v1765, 0.0
      %v1782 = vmax.f32 %v1766, 0.0
      %v1783 = vmax.f32 %v1767, 0.0
      %v1784 = vmax.f32 %v1768, 0.0
      %v1785 = vmax.f32 %v1769, 0.0
      %v1786 = vmax.f32 %v1770, 0.0
      %v1787 = vpack.c.bf16 %v1772, %v1771
      %v1788 = vpack.c.bf16 %v1774, %v1773
      %v1789 = vpack.c.bf16 %v1776, %v1775
      %v1790 = vpack.c.bf16 %v1778, %v1777
      %v1791 = vpack.c.bf16 %v1780, %v1779
      %v1792 = vpack.c.bf16 %v1782, %v1781
      %v1793 = vpack.c.bf16 %v1784, %v1783
      %v1794 = vpack.c.bf16 %v1786, %v1785
      %s1795 = scalar_lea.vmem %s3, 64
      %v1796 = vld [vmem:[%s1795] sm:$0xf]
      %v1797 = vld [vmem:[%s1795 + $0x4] sm:$0xf]
      %v1798 = vld [vmem:[%s1795 + $0x8] sm:$0xf]
      %v1799 = vld [vmem:[%s1795 + $0xc] sm:$0xf]
      %v1800 = vld [vmem:[%s1795 + $0x10] sm:$0xf]
      %v1801 = vld [vmem:[%s1795 + $0x14] sm:$0xf]
      %v1802 = vld [vmem:[%s1795 + $0x18] sm:$0xf]
      %v1803 = vld [vmem:[%s1795 + $0x1c] sm:$0xf]
      %v1804 = vld [vmem:[%s1795 + $0x20] sm:$0xf]
      %v1805 = vld [vmem:[%s1795 + $0x24] sm:$0xf]
      %v1806 = vld [vmem:[%s1795 + $0x28] sm:$0xf]
      %v1807 = vld [vmem:[%s1795 + $0x2c] sm:$0xf]
      %v1808 = vld [vmem:[%s1795 + $0x30] sm:$0xf]
      %v1809 = vld [vmem:[%s1795 + $0x34] sm:$0xf]
      %v1810 = vld [vmem:[%s1795 + $0x38] sm:$0xf]
      %v1811 = vld [vmem:[%s1795 + $0x3c] sm:$0xf]
      %v1828 = vunpack.c.l.b16 %v1796
      %v1829 = vunpack.c.l.b16 %v1797
      %v1830 = vunpack.c.l.b16 %v1798
      %v1831 = vunpack.c.l.b16 %v1799
      %v1832 = vunpack.c.l.b16 %v1800
      %v1833 = vunpack.c.l.b16 %v1801
      %v1834 = vunpack.c.l.b16 %v1802
      %v1835 = vunpack.c.l.b16 %v1803
      %v1836 = vunpack.c.l.b16 %v1804
      %v1837 = vunpack.c.l.b16 %v1805
      %v1838 = vunpack.c.l.b16 %v1806
      %v1839 = vunpack.c.l.b16 %v1807
      %v1840 = vunpack.c.l.b16 %v1808
      %v1841 = vunpack.c.l.b16 %v1809
      %v1842 = vunpack.c.l.b16 %v1810
      %v1843 = vunpack.c.l.b16 %v1811
      %v1844 = vpack.c.b16 %v1829, %v1828
      %v1845 = vpack.c.b16 %v1831, %v1830
      %v1846 = vpack.c.b16 %v1833, %v1832
      %v1847 = vpack.c.b16 %v1835, %v1834
      %v1848 = vpack.c.b16 %v1837, %v1836
      %v1849 = vpack.c.b16 %v1839, %v1838
      %v1850 = vpack.c.b16 %v1841, %v1840
      %v1851 = vpack.c.b16 %v1843, %v1842
      %1860 = vmatprep.subr.bf16.mxu0 0
      %1861 = vmatpush1.bf16.msra.mxu0 %v1851
      %1862 = vmatprep.subr.bf16.mxu0 0
      %1863 = vmatpush1.bf16.msra.mxu0 %v1850
      %1864 = vmatprep.subr.bf16.mxu0 0
      %1865 = vmatpush1.bf16.msra.mxu0 %v1849
      %1866 = vmatprep.subr.bf16.mxu0 0
      %1867 = vmatpush1.bf16.msra.mxu0 %v1848
      %1868 = vmatprep.subr.bf16.mxu0 0
      %1869 = vmatpush1.bf16.msra.mxu0 %v1847
      %1870 = vmatprep.subr.bf16.mxu0 0
      %1871 = vmatpush1.bf16.msra.mxu0 %v1846
      %1872 = vmatprep.subr.bf16.mxu0 0
      %1873 = vmatpush1.bf16.msra.mxu0 %v1845
      %1874 = vmatprep.subr.bf16.mxu0 0
      %1875 = vmatpush1.bf16.msra.mxu0 %v1844
      %1876 = vmatprep.subr.bf16.mxu0 0
      %1877 = vmatpush2.bf16.msra.mxu0 0
      %1878 = vmatprep.subr.bf16.mxu0 0
      %1879 = vmatpush2.bf16.msra.mxu0 0
      %1880 = vmatprep.subr.bf16.mxu0 0
      %1881 = vmatpush2.bf16.msra.mxu0 0
      %1882 = vmatprep.subr.bf16.mxu0 0
      %1883 = vmatpush2.bf16.msra.mxu0 0
      %1884 = vmatprep.subr.bf16.mxu0 0
      %1885 = vmatpush2.bf16.msra.mxu0 0
      %1886 = vmatprep.subr.bf16.mxu0 0
      %1887 = vmatpush2.bf16.msra.mxu0 0
      %1888 = vmatprep.subr.bf16.mxu0 0
      %1889 = vmatpush2.bf16.msra.mxu0 0
      %1890 = vmatprep.subr.bf16.mxu0 0
      %1891 = vmatpush2.bf16.msra.mxu0 0
      %1892 = vmatprep.mubr.bf16.mxu0 0
      %1893 = vmatmul.mubr.bf16.gmra.mxu0 %v1787
      %v1894 = vpop.f32.mrf.mxu0
      %v1895 = vadd.f32 0.0, %v1894
      %v1896 = vpop.f32.mrf.mxu0
      %v1897 = vpop.f32.mrf.mxu0
      %v1898 = vadd.f32 0.0, %v1897
      %v1899 = vpop.f32.mrf.mxu0
      %1900 = vmatprep.mubr.bf16.mxu0 0
      %1901 = vmatmul.mubr.bf16.gmra.mxu0 %v1788
      %v1902 = vpop.f32.mrf.mxu0
      %v1903 = vadd.f32 0.0, %v1902
      %v1904 = vpop.f32.mrf.mxu0
      %v1905 = vpop.f32.mrf.mxu0
      %v1906 = vadd.f32 0.0, %v1905
      %v1907 = vpop.f32.mrf.mxu0
      %1908 = vmatprep.mubr.bf16.mxu0 0
      %1909 = vmatmul.mubr.bf16.gmra.mxu0 %v1789
      %v1910 = vpop.f32.mrf.mxu0
      %v1911 = vadd.f32 0.0, %v1910
      %v1912 = vpop.f32.mrf.mxu0
      %v1913 = vpop.f32.mrf.mxu0
      %v1914 = vadd.f32 0.0, %v1913
      %v1915 = vpop.f32.mrf.mxu0
      %1916 = vmatprep.mubr.bf16.mxu0 0
      %1917 = vmatmul.mubr.bf16.gmra.mxu0 %v1790
      %v1918 = vpop.f32.mrf.mxu0
      %v1919 = vadd.f32 0.0, %v1918
      %v1920 = vpop.f32.mrf.mxu0
      %v1921 = vpop.f32.mrf.mxu0
      %v1922 = vadd.f32 0.0, %v1921
      %v1923 = vpop.f32.mrf.mxu0
      %1924 = vmatprep.mubr.bf16.mxu0 0
      %1925 = vmatmul.mubr.bf16.gmra.mxu0 %v1791
      %v1926 = vpop.f32.mrf.mxu0
      %v1927 = vadd.f32 0.0, %v1926
      %v1928 = vpop.f32.mrf.mxu0
      %v1929 = vpop.f32.mrf.mxu0
      %v1930 = vadd.f32 0.0, %v1929
      %v1931 = vpop.f32.mrf.mxu0
      %1932 = vmatprep.mubr.bf16.mxu0 0
      %1933 = vmatmul.mubr.bf16.gmra.mxu0 %v1792
      %v1934 = vpop.f32.mrf.mxu0
      %v1935 = vadd.f32 0.0, %v1934
      %v1936 = vpop.f32.mrf.mxu0
      %v1937 = vpop.f32.mrf.mxu0
      %v1938 = vadd.f32 0.0, %v1937
      %v1939 = vpop.f32.mrf.mxu0
      %1940 = vmatprep.mubr.bf16.mxu0 0
      %1941 = vmatmul.mubr.bf16.gmra.mxu0 %v1793
      %v1942 = vpop.f32.mrf.mxu0
      %v1943 = vadd.f32 0.0, %v1942
      %v1944 = vpop.f32.mrf.mxu0
      %v1945 = vpop.f32.mrf.mxu0
      %v1946 = vadd.f32 0.0, %v1945
      %v1947 = vpop.f32.mrf.mxu0
      %1948 = vmatprep.mubr.bf16.mxu0 0
      %1949 = vmatmul.mubr.bf16.gmra.mxu0 %v1794
      %v1950 = vpop.f32.mrf.mxu0
      %v1951 = vadd.f32 0.0, %v1950
      %v1952 = vpop.f32.mrf.mxu0
      %v1953 = vpop.f32.mrf.mxu0
      %v1954 = vadd.f32 0.0, %v1953
      %v1955 = vpop.f32.mrf.mxu0
      %1956 = vdwg.mxu0
      %v1957 = vpack.c.bf16 %v1898, %v1895
      %v1958 = vpack.c.bf16 %v1906, %v1903
      %v1959 = vpack.c.bf16 %v1914, %v1911
      %v1960 = vpack.c.bf16 %v1922, %v1919
      %v1961 = vpack.c.bf16 %v1930, %v1927
      %v1962 = vpack.c.bf16 %v1938, %v1935
      %v1963 = vpack.c.bf16 %v1946, %v1943
      %v1964 = vpack.c.bf16 %v1954, %v1951
      %1965 = vmatprep.subr.bf16.mxu0 0
      %1966 = vmatpush1.bf16.msra.mxu0 0
      %1967 = vmatprep.subr.bf16.mxu0 0
      %1968 = vmatpush1.bf16.msra.mxu0 0
      %1969 = vmatprep.subr.bf16.mxu0 0
      %1970 = vmatpush1.bf16.msra.mxu0 0
      %1971 = vmatprep.subr.bf16.mxu0 0
      %1972 = vmatpush1.bf16.msra.mxu0 0
      %1973 = vmatprep.subr.bf16.mxu0 0
      %1974 = vmatpush1.bf16.msra.mxu0 0
      %1975 = vmatprep.subr.bf16.mxu0 0
      %1976 = vmatpush1.bf16.msra.mxu0 0
      %1977 = vmatprep.subr.bf16.mxu0 0
      %1978 = vmatpush1.bf16.msra.mxu0 0
      %1979 = vmatprep.subr.bf16.mxu0 0
      %1980 = vmatpush1.bf16.msra.mxu0 %v1957
      %1981 = vmatprep.subr.bf16.mxu0 0
      %1982 = vmatpush2.bf16.msra.mxu0 0
      %1983 = vmatprep.subr.bf16.mxu0 0
      %1984 = vmatpush2.bf16.msra.mxu0 0
      %1985 = vmatprep.subr.bf16.mxu0 0
      %1986 = vmatpush2.bf16.msra.mxu0 0
      %1987 = vmatprep.subr.bf16.mxu0 0
      %1988 = vmatpush2.bf16.msra.mxu0 0
      %1989 = vmatprep.subr.bf16.mxu0 0
      %1990 = vmatpush2.bf16.msra.mxu0 0
      %1991 = vmatprep.subr.bf16.mxu0 0
      %1992 = vmatpush2.bf16.msra.mxu0 0
      %1993 = vmatprep.subr.bf16.mxu0 0
      %1994 = vmatpush2.bf16.msra.mxu0 0
      %1995 = vmatprep.subr.bf16.mxu0 0
      %1996 = vmatpush2.bf16.msra.mxu0 0
      %1997 = vmatprep.mubr.bf16.mxu0 0
      %1998 = vmatmul.mubr.bf16.gmra.mxu0 %v824
      %v1999 = vpop.f32.mrf.mxu0
      %v2000 = vadd.f32 0.0, %v1999
      %v2001 = vpop.f32.mrf.mxu0
      %v2002 = vpop.f32.mrf.mxu0
      %v2003 = vadd.f32 0.0, %v2002
      %v2004 = vpop.f32.mrf.mxu0
      %2005 = vdwg.mxu0
      %2006 = vmatprep.subr.bf16.mxu0 0
      %2007 = vmatpush1.bf16.msra.mxu0 0
      %2008 = vmatprep.subr.bf16.mxu0 0
      %2009 = vmatpush1.bf16.msra.mxu0 0
      %2010 = vmatprep.subr.bf16.mxu0 0
      %2011 = vmatpush1.bf16.msra.mxu0 0
      %2012 = vmatprep.subr.bf16.mxu0 0
      %2013 = vmatpush1.bf16.msra.mxu0 0
      %2014 = vmatprep.subr.bf16.mxu0 0
      %2015 = vmatpush1.bf16.msra.mxu0 0
      %2016 = vmatprep.subr.bf16.mxu0 0
      %2017 = vmatpush1.bf16.msra.mxu0 0
      %2018 = vmatprep.subr.bf16.mxu0 0
      %2019 = vmatpush1.bf16.msra.mxu0 0
      %2020 = vmatprep.subr.bf16.mxu0 0
      %2021 = vmatpush1.bf16.msra.mxu0 %v1958
      %2022 = vmatprep.subr.bf16.mxu0 0
      %2023 = vmatpush2.bf16.msra.mxu0 0
      %2024 = vmatprep.subr.bf16.mxu0 0
      %2025 = vmatpush2.bf16.msra.mxu0 0
      %2026 = vmatprep.subr.bf16.mxu0 0
      %2027 = vmatpush2.bf16.msra.mxu0 0
      %2028 = vmatprep.subr.bf16.mxu0 0
      %2029 = vmatpush2.bf16.msra.mxu0 0
      %2030 = vmatprep.subr.bf16.mxu0 0
      %2031 = vmatpush2.bf16.msra.mxu0 0
      %2032 = vmatprep.subr.bf16.mxu0 0
      %2033 = vmatpush2.bf16.msra.mxu0 0
      %2034 = vmatprep.subr.bf16.mxu0 0
      %2035 = vmatpush2.bf16.msra.mxu0 0
      %2036 = vmatprep.subr.bf16.mxu0 0
      %2037 = vmatpush2.bf16.msra.mxu0 0
      %2038 = vmatprep.mubr.bf16.mxu0 0
      %2039 = vmatmul.mubr.bf16.gmra.mxu0 %v873
      %v2040 = vpop.f32.mrf.mxu0
      %v2041 = vadd.f32 0.0, %v2040
      %v2042 = vpop.f32.mrf.mxu0
      %v2043 = vpop.f32.mrf.mxu0
      %v2044 = vadd.f32 0.0, %v2043
      %v2045 = vpop.f32.mrf.mxu0
      %2046 = vdwg.mxu0
      %2047 = vmatprep.subr.bf16.mxu0 0
      %2048 = vmatpush1.bf16.msra.mxu0 0
      %2049 = vmatprep.subr.bf16.mxu0 0
      %2050 = vmatpush1.bf16.msra.mxu0 0
      %2051 = vmatprep.subr.bf16.mxu0 0
      %2052 = vmatpush1.bf16.msra.mxu0 0
      %2053 = vmatprep.subr.bf16.mxu0 0
      %2054 = vmatpush1.bf16.msra.mxu0 0
      %2055 = vmatprep.subr.bf16.mxu0 0
      %2056 = vmatpush1.bf16.msra.mxu0 0
      %2057 = vmatprep.subr.bf16.mxu0 0
      %2058 = vmatpush1.bf16.msra.mxu0 0
      %2059 = vmatprep.subr.bf16.mxu0 0
      %2060 = vmatpush1.bf16.msra.mxu0 0
      %2061 = vmatprep.subr.bf16.mxu0 0
      %2062 = vmatpush1.bf16.msra.mxu0 %v1959
      %2063 = vmatprep.subr.bf16.mxu0 0
      %2064 = vmatpush2.bf16.msra.mxu0 0
      %2065 = vmatprep.subr.bf16.mxu0 0
      %2066 = vmatpush2.bf16.msra.mxu0 0
      %2067 = vmatprep.subr.bf16.mxu0 0
      %2068 = vmatpush2.bf16.msra.mxu0 0
      %2069 = vmatprep.subr.bf16.mxu0 0
      %2070 = vmatpush2.bf16.msra.mxu0 0
      %2071 = vmatprep.subr.bf16.mxu0 0
      %2072 = vmatpush2.bf16.msra.mxu0 0
      %2073 = vmatprep.subr.bf16.mxu0 0
      %2074 = vmatpush2.bf16.msra.mxu0 0
      %2075 = vmatprep.subr.bf16.mxu0 0
      %2076 = vmatpush2.bf16.msra.mxu0 0
      %2077 = vmatprep.subr.bf16.mxu0 0
      %2078 = vmatpush2.bf16.msra.mxu0 0
      %2079 = vmatprep.mubr.bf16.mxu0 0
      %2080 = vmatmul.mubr.bf16.gmra.mxu0 %v922
      %v2081 = vpop.f32.mrf.mxu0
      %v2082 = vadd.f32 0.0, %v2081
      %v2083 = vpop.f32.mrf.mxu0
      %v2084 = vpop.f32.mrf.mxu0
      %v2085 = vadd.f32 0.0, %v2084
      %v2086 = vpop.f32.mrf.mxu0
      %2087 = vdwg.mxu0
      %2088 = vmatprep.subr.bf16.mxu0 0
      %2089 = vmatpush1.bf16.msra.mxu0 0
      %2090 = vmatprep.subr.bf16.mxu0 0
      %2091 = vmatpush1.bf16.msra.mxu0 0
      %2092 = vmatprep.subr.bf16.mxu0 0
      %2093 = vmatpush1.bf16.msra.mxu0 0
      %2094 = vmatprep.subr.bf16.mxu0 0
      %2095 = vmatpush1.bf16.msra.mxu0 0
      %2096 = vmatprep.subr.bf16.mxu0 0
      %2097 = vmatpush1.bf16.msra.mxu0 0
      %2098 = vmatprep.subr.bf16.mxu0 0
      %2099 = vmatpush1.bf16.msra.mxu0 0
      %2100 = vmatprep.subr.bf16.mxu0 0
      %2101 = vmatpush1.bf16.msra.mxu0 0
      %2102 = vmatprep.subr.bf16.mxu0 0
      %2103 = vmatpush1.bf16.msra.mxu0 %v1960
      %2104 = vmatprep.subr.bf16.mxu0 0
      %2105 = vmatpush2.bf16.msra.mxu0 0
      %2106 = vmatprep.subr.bf16.mxu0 0
      %2107 = vmatpush2.bf16.msra.mxu0 0
      %2108 = vmatprep.subr.bf16.mxu0 0
      %2109 = vmatpush2.bf16.msra.mxu0 0
      %2110 = vmatprep.subr.bf16.mxu0 0
      %2111 = vmatpush2.bf16.msra.mxu0 0
      %2112 = vmatprep.subr.bf16.mxu0 0
      %2113 = vmatpush2.bf16.msra.mxu0 0
      %2114 = vmatprep.subr.bf16.mxu0 0
      %2115 = vmatpush2.bf16.msra.mxu0 0
      %2116 = vmatprep.subr.bf16.mxu0 0
      %2117 = vmatpush2.bf16.msra.mxu0 0
      %2118 = vmatprep.subr.bf16.mxu0 0
      %2119 = vmatpush2.bf16.msra.mxu0 0
      %2120 = vmatprep.mubr.bf16.mxu0 0
      %2121 = vmatmul.mubr.bf16.gmra.mxu0 %v971
      %v2122 = vpop.f32.mrf.mxu0
      %v2123 = vadd.f32 0.0, %v2122
      %v2124 = vpop.f32.mrf.mxu0
      %v2125 = vpop.f32.mrf.mxu0
      %v2126 = vadd.f32 0.0, %v2125
      %v2127 = vpop.f32.mrf.mxu0
      %2128 = vdwg.mxu0
      %2129 = vmatprep.subr.bf16.mxu0 0
      %2130 = vmatpush1.bf16.msra.mxu0 0
      %2131 = vmatprep.subr.bf16.mxu0 0
      %2132 = vmatpush1.bf16.msra.mxu0 0
      %2133 = vmatprep.subr.bf16.mxu0 0
      %2134 = vmatpush1.bf16.msra.mxu0 0
      %2135 = vmatprep.subr.bf16.mxu0 0
      %2136 = vmatpush1.bf16.msra.mxu0 0
      %2137 = vmatprep.subr.bf16.mxu0 0
      %2138 = vmatpush1.bf16.msra.mxu0 0
      %2139 = vmatprep.subr.bf16.mxu0 0
      %2140 = vmatpush1.bf16.msra.mxu0 0
      %2141 = vmatprep.subr.bf16.mxu0 0
      %2142 = vmatpush1.bf16.msra.mxu0 0
      %2143 = vmatprep.subr.bf16.mxu0 0
      %2144 = vmatpush1.bf16.msra.mxu0 %v1961
      %2145 = vmatprep.subr.bf16.mxu0 0
      %2146 = vmatpush2.bf16.msra.mxu0 0
      %2147 = vmatprep.subr.bf16.mxu0 0
      %2148 = vmatpush2.bf16.msra.mxu0 0
      %2149 = vmatprep.subr.bf16.mxu0 0
      %2150 = vmatpush2.bf16.msra.mxu0 0
      %2151 = vmatprep.subr.bf16.mxu0 0
      %2152 = vmatpush2.bf16.msra.mxu0 0
      %2153 = vmatprep.subr.bf16.mxu0 0
      %2154 = vmatpush2.bf16.msra.mxu0 0
      %2155 = vmatprep.subr.bf16.mxu0 0
      %2156 = vmatpush2.bf16.msra.mxu0 0
      %2157 = vmatprep.subr.bf16.mxu0 0
      %2158 = vmatpush2.bf16.msra.mxu0 0
      %2159 = vmatprep.subr.bf16.mxu0 0
      %2160 = vmatpush2.bf16.msra.mxu0 0
      %2161 = vmatprep.mubr.bf16.mxu0 0
      %2162 = vmatmul.mubr.bf16.gmra.mxu0 %v1020
      %v2163 = vpop.f32.mrf.mxu0
      %v2164 = vadd.f32 0.0, %v2163
      %v2165 = vpop.f32.mrf.mxu0
      %v2166 = vpop.f32.mrf.mxu0
      %v2167 = vadd.f32 0.0, %v2166
      %v2168 = vpop.f32.mrf.mxu0
      %2169 = vdwg.mxu0
      %2170 = vmatprep.subr.bf16.mxu0 0
      %2171 = vmatpush1.bf16.msra.mxu0 0
      %2172 = vmatprep.subr.bf16.mxu0 0
      %2173 = vmatpush1.bf16.msra.mxu0 0
      %2174 = vmatprep.subr.bf16.mxu0 0
      %2175 = vmatpush1.bf16.msra.mxu0 0
      %2176 = vmatprep.subr.bf16.mxu0 0
      %2177 = vmatpush1.bf16.msra.mxu0 0
      %2178 = vmatprep.subr.bf16.mxu0 0
      %2179 = vmatpush1.bf16.msra.mxu0 0
      %2180 = vmatprep.subr.bf16.mxu0 0
      %2181 = vmatpush1.bf16.msra.mxu0 0
      %2182 = vmatprep.subr.bf16.mxu0 0
      %2183 = vmatpush1.bf16.msra.mxu0 0
      %2184 = vmatprep.subr.bf16.mxu0 0
      %2185 = vmatpush1.bf16.msra.mxu0 %v1962
      %2186 = vmatprep.subr.bf16.mxu0 0
      %2187 = vmatpush2.bf16.msra.mxu0 0
      %2188 = vmatprep.subr.bf16.mxu0 0
      %2189 = vmatpush2.bf16.msra.mxu0 0
      %2190 = vmatprep.subr.bf16.mxu0 0
      %2191 = vmatpush2.bf16.msra.mxu0 0
      %2192 = vmatprep.subr.bf16.mxu0 0
      %2193 = vmatpush2.bf16.msra.mxu0 0
      %2194 = vmatprep.subr.bf16.mxu0 0
      %2195 = vmatpush2.bf16.msra.mxu0 0
      %2196 = vmatprep.subr.bf16.mxu0 0
      %2197 = vmatpush2.bf16.msra.mxu0 0
      %2198 = vmatprep.subr.bf16.mxu0 0
      %2199 = vmatpush2.bf16.msra.mxu0 0
      %2200 = vmatprep.subr.bf16.mxu0 0
      %2201 = vmatpush2.bf16.msra.mxu0 0
      %2202 = vmatprep.mubr.bf16.mxu0 0
      %2203 = vmatmul.mubr.bf16.gmra.mxu0 %v1069
      %v2204 = vpop.f32.mrf.mxu0
      %v2205 = vadd.f32 0.0, %v2204
      %v2206 = vpop.f32.mrf.mxu0
      %v2207 = vpop.f32.mrf.mxu0
      %v2208 = vadd.f32 0.0, %v2207
      %v2209 = vpop.f32.mrf.mxu0
      %2210 = vdwg.mxu0
      %2211 = vmatprep.subr.bf16.mxu0 0
      %2212 = vmatpush1.bf16.msra.mxu0 0
      %2213 = vmatprep.subr.bf16.mxu0 0
      %2214 = vmatpush1.bf16.msra.mxu0 0
      %2215 = vmatprep.subr.bf16.mxu0 0
      %2216 = vmatpush1.bf16.msra.mxu0 0
      %2217 = vmatprep.subr.bf16.mxu0 0
      %2218 = vmatpush1.bf16.msra.mxu0 0
      %2219 = vmatprep.subr.bf16.mxu0 0
      %2220 = vmatpush1.bf16.msra.mxu0 0
      %2221 = vmatprep.subr.bf16.mxu0 0
      %2222 = vmatpush1.bf16.msra.mxu0 0
      %2223 = vmatprep.subr.bf16.mxu0 0
      %2224 = vmatpush1.bf16.msra.mxu0 0
      %2225 = vmatprep.subr.bf16.mxu0 0
      %2226 = vmatpush1.bf16.msra.mxu0 %v1963
      %2227 = vmatprep.subr.bf16.mxu0 0
      %2228 = vmatpush2.bf16.msra.mxu0 0
      %2229 = vmatprep.subr.bf16.mxu0 0
      %2230 = vmatpush2.bf16.msra.mxu0 0
      %2231 = vmatprep.subr.bf16.mxu0 0
      %2232 = vmatpush2.bf16.msra.mxu0 0
      %2233 = vmatprep.subr.bf16.mxu0 0
      %2234 = vmatpush2.bf16.msra.mxu0 0
      %2235 = vmatprep.subr.bf16.mxu0 0
      %2236 = vmatpush2.bf16.msra.mxu0 0
      %2237 = vmatprep.subr.bf16.mxu0 0
      %2238 = vmatpush2.bf16.msra.mxu0 0
      %2239 = vmatprep.subr.bf16.mxu0 0
      %2240 = vmatpush2.bf16.msra.mxu0 0
      %2241 = vmatprep.subr.bf16.mxu0 0
      %2242 = vmatpush2.bf16.msra.mxu0 0
      %2243 = vmatprep.mubr.bf16.mxu0 0
      %2244 = vmatmul.mubr.bf16.gmra.mxu0 %v1118
      %v2245 = vpop.f32.mrf.mxu0
      %v2246 = vadd.f32 0.0, %v2245
      %v2247 = vpop.f32.mrf.mxu0
      %v2248 = vpop.f32.mrf.mxu0
      %v2249 = vadd.f32 0.0, %v2248
      %v2250 = vpop.f32.mrf.mxu0
      %2251 = vdwg.mxu0
      %2252 = vmatprep.subr.bf16.mxu0 0
      %2253 = vmatpush1.bf16.msra.mxu0 0
      %2254 = vmatprep.subr.bf16.mxu0 0
      %2255 = vmatpush1.bf16.msra.mxu0 0
      %2256 = vmatprep.subr.bf16.mxu0 0
      %2257 = vmatpush1.bf16.msra.mxu0 0
      %2258 = vmatprep.subr.bf16.mxu0 0
      %2259 = vmatpush1.bf16.msra.mxu0 0
      %2260 = vmatprep.subr.bf16.mxu0 0
      %2261 = vmatpush1.bf16.msra.mxu0 0
      %2262 = vmatprep.subr.bf16.mxu0 0
      %2263 = vmatpush1.bf16.msra.mxu0 0
      %2264 = vmatprep.subr.bf16.mxu0 0
      %2265 = vmatpush1.bf16.msra.mxu0 0
      %2266 = vmatprep.subr.bf16.mxu0 0
      %2267 = vmatpush1.bf16.msra.mxu0 %v1964
      %2268 = vmatprep.subr.bf16.mxu0 0
      %2269 = vmatpush2.bf16.msra.mxu0 0
      %2270 = vmatprep.subr.bf16.mxu0 0
      %2271 = vmatpush2.bf16.msra.mxu0 0
      %2272 = vmatprep.subr.bf16.mxu0 0
      %2273 = vmatpush2.bf16.msra.mxu0 0
      %2274 = vmatprep.subr.bf16.mxu0 0
      %2275 = vmatpush2.bf16.msra.mxu0 0
      %2276 = vmatprep.subr.bf16.mxu0 0
      %2277 = vmatpush2.bf16.msra.mxu0 0
      %2278 = vmatprep.subr.bf16.mxu0 0
      %2279 = vmatpush2.bf16.msra.mxu0 0
      %2280 = vmatprep.subr.bf16.mxu0 0
      %2281 = vmatpush2.bf16.msra.mxu0 0
      %2282 = vmatprep.subr.bf16.mxu0 0
      %2283 = vmatpush2.bf16.msra.mxu0 0
      %2284 = vmatprep.mubr.bf16.mxu0 0
      %2285 = vmatmul.mubr.bf16.gmra.mxu0 %v1167
      %v2286 = vpop.f32.mrf.mxu0
      %v2287 = vadd.f32 0.0, %v2286
      %v2288 = vpop.f32.mrf.mxu0
      %v2289 = vpop.f32.mrf.mxu0
      %v2290 = vadd.f32 0.0, %v2289
      %v2291 = vpop.f32.mrf.mxu0
      %2292 = vdwg.mxu0
      %v2293 = vlaneseq
      %v2294 = vshrl.u32 %v2293, 7
      %v2295 = vsub.s32 2, %v2294
      %v2296 = vrot.slane %v294, %v2295
      %v2297 = vadd.f32 %v2000, %v2296
      %v2298 = vadd.f32 %v2003, %v2296
      %v2299 = vadd.f32 %v2041, %v2296
      %v2300 = vadd.f32 %v2044, %v2296
      %v2301 = vadd.f32 %v2082, %v2296
      %v2302 = vadd.f32 %v2085, %v2296
      %v2303 = vadd.f32 %v2123, %v2296
      %v2304 = vadd.f32 %v2126, %v2296
      %v2305 = vadd.f32 %v2164, %v2296
      %v2306 = vadd.f32 %v2167, %v2296
      %v2307 = vadd.f32 %v2205, %v2296
      %v2308 = vadd.f32 %v2208, %v2296
      %v2309 = vadd.f32 %v2246, %v2296
      %v2310 = vadd.f32 %v2249, %v2296
      %v2311 = vadd.f32 %v2287, %v2296
      %v2312 = vadd.f32 %v2290, %v2296
      %v2313 = vmax.f32 %v2297, 0.0
      %v2314 = vmax.f32 %v2298, 0.0
      %v2315 = vmax.f32 %v2299, 0.0
      %v2316 = vmax.f32 %v2300, 0.0
      %v2317 = vmax.f32 %v2301, 0.0
      %v2318 = vmax.f32 %v2302, 0.0
      %v2319 = vmax.f32 %v2303, 0.0
      %v2320 = vmax.f32 %v2304, 0.0
      %v2321 = vmax.f32 %v2305, 0.0
      %v2322 = vmax.f32 %v2306, 0.0
      %v2323 = vmax.f32 %v2307, 0.0
      %v2324 = vmax.f32 %v2308, 0.0
      %v2325 = vmax.f32 %v2309, 0.0
      %v2326 = vmax.f32 %v2310, 0.0
      %v2327 = vmax.f32 %v2311, 0.0
      %v2328 = vmax.f32 %v2312, 0.0
      %v2329 = vpack.c.bf16 %v2314, %v2313
      %v2330 = vpack.c.bf16 %v2316, %v2315
      %v2331 = vpack.c.bf16 %v2318, %v2317
      %v2332 = vpack.c.bf16 %v2320, %v2319
      %v2333 = vpack.c.bf16 %v2322, %v2321
      %v2334 = vpack.c.bf16 %v2324, %v2323
      %v2335 = vpack.c.bf16 %v2326, %v2325
      %v2336 = vpack.c.bf16 %v2328, %v2327
      %s2337 = scalar_lea.vmem %s3, 128
      %v2338 = vld [vmem:[%s2337] sm:$0xf]
      %v2339 = vld [vmem:[%s2337 + $0x4] sm:$0xf]
      %v2340 = vld [vmem:[%s2337 + $0x8] sm:$0xf]
      %v2341 = vld [vmem:[%s2337 + $0xc] sm:$0xf]
      %v2342 = vld [vmem:[%s2337 + $0x10] sm:$0xf]
      %v2343 = vld [vmem:[%s2337 + $0x14] sm:$0xf]
      %v2344 = vld [vmem:[%s2337 + $0x18] sm:$0xf]
      %v2345 = vld [vmem:[%s2337 + $0x1c] sm:$0xf]
      %v2346 = vld [vmem:[%s2337 + $0x20] sm:$0xf]
      %v2347 = vld [vmem:[%s2337 + $0x24] sm:$0xf]
      %v2348 = vld [vmem:[%s2337 + $0x28] sm:$0xf]
      %v2349 = vld [vmem:[%s2337 + $0x2c] sm:$0xf]
      %v2350 = vld [vmem:[%s2337 + $0x30] sm:$0xf]
      %v2351 = vld [vmem:[%s2337 + $0x34] sm:$0xf]
      %v2352 = vld [vmem:[%s2337 + $0x38] sm:$0xf]
      %v2353 = vld [vmem:[%s2337 + $0x3c] sm:$0xf]
      %v2370 = vunpack.c.l.b16 %v2338
      %v2371 = vunpack.c.l.b16 %v2339
      %v2372 = vunpack.c.l.b16 %v2340
      %v2373 = vunpack.c.l.b16 %v2341
      %v2374 = vunpack.c.l.b16 %v2342
      %v2375 = vunpack.c.l.b16 %v2343
      %v2376 = vunpack.c.l.b16 %v2344
      %v2377 = vunpack.c.l.b16 %v2345
      %v2378 = vunpack.c.l.b16 %v2346
      %v2379 = vunpack.c.l.b16 %v2347
      %v2380 = vunpack.c.l.b16 %v2348
      %v2381 = vunpack.c.l.b16 %v2349
      %v2382 = vunpack.c.l.b16 %v2350
      %v2383 = vunpack.c.l.b16 %v2351
      %v2384 = vunpack.c.l.b16 %v2352
      %v2385 = vunpack.c.l.b16 %v2353
      %v2386 = vpack.c.b16 %v2371, %v2370
      %v2387 = vpack.c.b16 %v2373, %v2372
      %v2388 = vpack.c.b16 %v2375, %v2374
      %v2389 = vpack.c.b16 %v2377, %v2376
      %v2390 = vpack.c.b16 %v2379, %v2378
      %v2391 = vpack.c.b16 %v2381, %v2380
      %v2392 = vpack.c.b16 %v2383, %v2382
      %v2393 = vpack.c.b16 %v2385, %v2384
      %2402 = vmatprep.subr.bf16.mxu0 0
      %2403 = vmatpush1.bf16.msra.mxu0 %v2393
      %2404 = vmatprep.subr.bf16.mxu0 0
      %2405 = vmatpush1.bf16.msra.mxu0 %v2392
      %2406 = vmatprep.subr.bf16.mxu0 0
      %2407 = vmatpush1.bf16.msra.mxu0 %v2391
      %2408 = vmatprep.subr.bf16.mxu0 0
      %2409 = vmatpush1.bf16.msra.mxu0 %v2390
      %2410 = vmatprep.subr.bf16.mxu0 0
      %2411 = vmatpush1.bf16.msra.mxu0 %v2389
      %2412 = vmatprep.subr.bf16.mxu0 0
      %2413 = vmatpush1.bf16.msra.mxu0 %v2388
      %2414 = vmatprep.subr.bf16.mxu0 0
      %2415 = vmatpush1.bf16.msra.mxu0 %v2387
      %2416 = vmatprep.subr.bf16.mxu0 0
      %2417 = vmatpush1.bf16.msra.mxu0 %v2386
      %2418 = vmatprep.subr.bf16.mxu0 0
      %2419 = vmatpush2.bf16.msra.mxu0 0
      %2420 = vmatprep.subr.bf16.mxu0 0
      %2421 = vmatpush2.bf16.msra.mxu0 0
      %2422 = vmatprep.subr.bf16.mxu0 0
      %2423 = vmatpush2.bf16.msra.mxu0 0
      %2424 = vmatprep.subr.bf16.mxu0 0
      %2425 = vmatpush2.bf16.msra.mxu0 0
      %2426 = vmatprep.subr.bf16.mxu0 0
      %2427 = vmatpush2.bf16.msra.mxu0 0
      %2428 = vmatprep.subr.bf16.mxu0 0
      %2429 = vmatpush2.bf16.msra.mxu0 0
      %2430 = vmatprep.subr.bf16.mxu0 0
      %2431 = vmatpush2.bf16.msra.mxu0 0
      %2432 = vmatprep.subr.bf16.mxu0 0
      %2433 = vmatpush2.bf16.msra.mxu0 0
      %2434 = vmatprep.mubr.bf16.mxu0 0
      %2435 = vmatmul.mubr.bf16.gmra.mxu0 %v2329
      %v2436 = vpop.f32.mrf.mxu0
      %v2437 = vadd.f32 0.0, %v2436
      %v2438 = vpop.f32.mrf.mxu0
      %v2439 = vpop.f32.mrf.mxu0
      %v2440 = vadd.f32 0.0, %v2439
      %v2441 = vpop.f32.mrf.mxu0
      %2442 = vmatprep.mubr.bf16.mxu0 0
      %2443 = vmatmul.mubr.bf16.gmra.mxu0 %v2330
      %v2444 = vpop.f32.mrf.mxu0
      %v2445 = vadd.f32 0.0, %v2444
      %v2446 = vpop.f32.mrf.mxu0
      %v2447 = vpop.f32.mrf.mxu0
      %v2448 = vadd.f32 0.0, %v2447
      %v2449 = vpop.f32.mrf.mxu0
      %2450 = vmatprep.mubr.bf16.mxu0 0
      %2451 = vmatmul.mubr.bf16.gmra.mxu0 %v2331
      %v2452 = vpop.f32.mrf.mxu0
      %v2453 = vadd.f32 0.0, %v2452
      %v2454 = vpop.f32.mrf.mxu0
      %v2455 = vpop.f32.mrf.mxu0
      %v2456 = vadd.f32 0.0, %v2455
      %v2457 = vpop.f32.mrf.mxu0
      %2458 = vmatprep.mubr.bf16.mxu0 0
      %2459 = vmatmul.mubr.bf16.gmra.mxu0 %v2332
      %v2460 = vpop.f32.mrf.mxu0
      %v2461 = vadd.f32 0.0, %v2460
      %v2462 = vpop.f32.mrf.mxu0
      %v2463 = vpop.f32.mrf.mxu0
      %v2464 = vadd.f32 0.0, %v2463
      %v2465 = vpop.f32.mrf.mxu0
      %2466 = vmatprep.mubr.bf16.mxu0 0
      %2467 = vmatmul.mubr.bf16.gmra.mxu0 %v2333
      %v2468 = vpop.f32.mrf.mxu0
      %v2469 = vadd.f32 0.0, %v2468
      %v2470 = vpop.f32.mrf.mxu0
      %v2471 = vpop.f32.mrf.mxu0
      %v2472 = vadd.f32 0.0, %v2471
      %v2473 = vpop.f32.mrf.mxu0
      %2474 = vmatprep.mubr.bf16.mxu0 0
      %2475 = vmatmul.mubr.bf16.gmra.mxu0 %v2334
      %v2476 = vpop.f32.mrf.mxu0
      %v2477 = vadd.f32 0.0, %v2476
      %v2478 = vpop.f32.mrf.mxu0
      %v2479 = vpop.f32.mrf.mxu0
      %v2480 = vadd.f32 0.0, %v2479
      %v2481 = vpop.f32.mrf.mxu0
      %2482 = vmatprep.mubr.bf16.mxu0 0
      %2483 = vmatmul.mubr.bf16.gmra.mxu0 %v2335
      %v2484 = vpop.f32.mrf.mxu0
      %v2485 = vadd.f32 0.0, %v2484
      %v2486 = vpop.f32.mrf.mxu0
      %v2487 = vpop.f32.mrf.mxu0
      %v2488 = vadd.f32 0.0, %v2487
      %v2489 = vpop.f32.mrf.mxu0
      %2490 = vmatprep.mubr.bf16.mxu0 0
      %2491 = vmatmul.mubr.bf16.gmra.mxu0 %v2336
      %v2492 = vpop.f32.mrf.mxu0
      %v2493 = vadd.f32 0.0, %v2492
      %v2494 = vpop.f32.mrf.mxu0
      %v2495 = vpop.f32.mrf.mxu0
      %v2496 = vadd.f32 0.0, %v2495
      %v2497 = vpop.f32.mrf.mxu0
      %2498 = vdwg.mxu0
      %v2499 = vpack.c.bf16 %v2440, %v2437
      %v2500 = vpack.c.bf16 %v2448, %v2445
      %v2501 = vpack.c.bf16 %v2456, %v2453
      %v2502 = vpack.c.bf16 %v2464, %v2461
      %v2503 = vpack.c.bf16 %v2472, %v2469
      %v2504 = vpack.c.bf16 %v2480, %v2477
      %v2505 = vpack.c.bf16 %v2488, %v2485
      %v2506 = vpack.c.bf16 %v2496, %v2493
      %2507 = vmatprep.subr.bf16.mxu0 0
      %2508 = vmatpush1.bf16.msra.mxu0 0
      %2509 = vmatprep.subr.bf16.mxu0 0
      %2510 = vmatpush1.bf16.msra.mxu0 0
      %2511 = vmatprep.subr.bf16.mxu0 0
      %2512 = vmatpush1.bf16.msra.mxu0 0
      %2513 = vmatprep.subr.bf16.mxu0 0
      %2514 = vmatpush1.bf16.msra.mxu0 0
      %2515 = vmatprep.subr.bf16.mxu0 0
      %2516 = vmatpush1.bf16.msra.mxu0 0
      %2517 = vmatprep.subr.bf16.mxu0 0
      %2518 = vmatpush1.bf16.msra.mxu0 0
      %2519 = vmatprep.subr.bf16.mxu0 0
      %2520 = vmatpush1.bf16.msra.mxu0 0
      %2521 = vmatprep.subr.bf16.mxu0 0
      %2522 = vmatpush1.bf16.msra.mxu0 %v2499
      %2523 = vmatprep.subr.bf16.mxu0 0
      %2524 = vmatpush2.bf16.msra.mxu0 0
      %2525 = vmatprep.subr.bf16.mxu0 0
      %2526 = vmatpush2.bf16.msra.mxu0 0
      %2527 = vmatprep.subr.bf16.mxu0 0
      %2528 = vmatpush2.bf16.msra.mxu0 0
      %2529 = vmatprep.subr.bf16.mxu0 0
      %2530 = vmatpush2.bf16.msra.mxu0 0
      %2531 = vmatprep.subr.bf16.mxu0 0
      %2532 = vmatpush2.bf16.msra.mxu0 0
      %2533 = vmatprep.subr.bf16.mxu0 0
      %2534 = vmatpush2.bf16.msra.mxu0 0
      %2535 = vmatprep.subr.bf16.mxu0 0
      %2536 = vmatpush2.bf16.msra.mxu0 0
      %2537 = vmatprep.subr.bf16.mxu0 0
      %2538 = vmatpush2.bf16.msra.mxu0 0
      %2539 = vmatprep.mubr.bf16.mxu0 0
      %2540 = vmatmul.mubr.bf16.gmra.mxu0 %v824
      %v2541 = vpop.f32.mrf.mxu0
      %v2542 = vadd.f32 0.0, %v2541
      %v2543 = vpop.f32.mrf.mxu0
      %v2544 = vpop.f32.mrf.mxu0
      %v2545 = vadd.f32 0.0, %v2544
      %v2546 = vpop.f32.mrf.mxu0
      %2547 = vdwg.mxu0
      %2548 = vmatprep.subr.bf16.mxu0 0
      %2549 = vmatpush1.bf16.msra.mxu0 0
      %2550 = vmatprep.subr.bf16.mxu0 0
      %2551 = vmatpush1.bf16.msra.mxu0 0
      %2552 = vmatprep.subr.bf16.mxu0 0
      %2553 = vmatpush1.bf16.msra.mxu0 0
      %2554 = vmatprep.subr.bf16.mxu0 0
      %2555 = vmatpush1.bf16.msra.mxu0 0
      %2556 = vmatprep.subr.bf16.mxu0 0
      %2557 = vmatpush1.bf16.msra.mxu0 0
      %2558 = vmatprep.subr.bf16.mxu0 0
      %2559 = vmatpush1.bf16.msra.mxu0 0
      %2560 = vmatprep.subr.bf16.mxu0 0
      %2561 = vmatpush1.bf16.msra.mxu0 0
      %2562 = vmatprep.subr.bf16.mxu0 0
      %2563 = vmatpush1.bf16.msra.mxu0 %v2500
      %2564 = vmatprep.subr.bf16.mxu0 0
      %2565 = vmatpush2.bf16.msra.mxu0 0
      %2566 = vmatprep.subr.bf16.mxu0 0
      %2567 = vmatpush2.bf16.msra.mxu0 0
      %2568 = vmatprep.subr.bf16.mxu0 0
      %2569 = vmatpush2.bf16.msra.mxu0 0
      %2570 = vmatprep.subr.bf16.mxu0 0
      %2571 = vmatpush2.bf16.msra.mxu0 0
      %2572 = vmatprep.subr.bf16.mxu0 0
      %2573 = vmatpush2.bf16.msra.mxu0 0
      %2574 = vmatprep.subr.bf16.mxu0 0
      %2575 = vmatpush2.bf16.msra.mxu0 0
      %2576 = vmatprep.subr.bf16.mxu0 0
      %2577 = vmatpush2.bf16.msra.mxu0 0
      %2578 = vmatprep.subr.bf16.mxu0 0
      %2579 = vmatpush2.bf16.msra.mxu0 0
      %2580 = vmatprep.mubr.bf16.mxu0 0
      %2581 = vmatmul.mubr.bf16.gmra.mxu0 %v873
      %v2582 = vpop.f32.mrf.mxu0
      %v2583 = vadd.f32 0.0, %v2582
      %v2584 = vpop.f32.mrf.mxu0
      %v2585 = vpop.f32.mrf.mxu0
      %v2586 = vadd.f32 0.0, %v2585
      %v2587 = vpop.f32.mrf.mxu0
      %2588 = vdwg.mxu0
      %2589 = vmatprep.subr.bf16.mxu0 0
      %2590 = vmatpush1.bf16.msra.mxu0 0
      %2591 = vmatprep.subr.bf16.mxu0 0
      %2592 = vmatpush1.bf16.msra.mxu0 0
      %2593 = vmatprep.subr.bf16.mxu0 0
      %2594 = vmatpush1.bf16.msra.mxu0 0
      %2595 = vmatprep.subr.bf16.mxu0 0
      %2596 = vmatpush1.bf16.msra.mxu0 0
      %2597 = vmatprep.subr.bf16.mxu0 0
      %2598 = vmatpush1.bf16.msra.mxu0 0
      %2599 = vmatprep.subr.bf16.mxu0 0
      %2600 = vmatpush1.bf16.msra.mxu0 0
      %2601 = vmatprep.subr.bf16.mxu0 0
      %2602 = vmatpush1.bf16.msra.mxu0 0
      %2603 = vmatprep.subr.bf16.mxu0 0
      %2604 = vmatpush1.bf16.msra.mxu0 %v2501
      %2605 = vmatprep.subr.bf16.mxu0 0
      %2606 = vmatpush2.bf16.msra.mxu0 0
      %2607 = vmatprep.subr.bf16.mxu0 0
      %2608 = vmatpush2.bf16.msra.mxu0 0
      %2609 = vmatprep.subr.bf16.mxu0 0
      %2610 = vmatpush2.bf16.msra.mxu0 0
      %2611 = vmatprep.subr.bf16.mxu0 0
      %2612 = vmatpush2.bf16.msra.mxu0 0
      %2613 = vmatprep.subr.bf16.mxu0 0
      %2614 = vmatpush2.bf16.msra.mxu0 0
      %2615 = vmatprep.subr.bf16.mxu0 0
      %2616 = vmatpush2.bf16.msra.mxu0 0
      %2617 = vmatprep.subr.bf16.mxu0 0
      %2618 = vmatpush2.bf16.msra.mxu0 0
      %2619 = vmatprep.subr.bf16.mxu0 0
      %2620 = vmatpush2.bf16.msra.mxu0 0
      %2621 = vmatprep.mubr.bf16.mxu0 0
      %2622 = vmatmul.mubr.bf16.gmra.mxu0 %v922
      %v2623 = vpop.f32.mrf.mxu0
      %v2624 = vadd.f32 0.0, %v2623
      %v2625 = vpop.f32.mrf.mxu0
      %v2626 = vpop.f32.mrf.mxu0
      %v2627 = vadd.f32 0.0, %v2626
      %v2628 = vpop.f32.mrf.mxu0
      %2629 = vdwg.mxu0
      %2630 = vmatprep.subr.bf16.mxu0 0
      %2631 = vmatpush1.bf16.msra.mxu0 0
      %2632 = vmatprep.subr.bf16.mxu0 0
      %2633 = vmatpush1.bf16.msra.mxu0 0
      %2634 = vmatprep.subr.bf16.mxu0 0
      %2635 = vmatpush1.bf16.msra.mxu0 0
      %2636 = vmatprep.subr.bf16.mxu0 0
      %2637 = vmatpush1.bf16.msra.mxu0 0
      %2638 = vmatprep.subr.bf16.mxu0 0
      %2639 = vmatpush1.bf16.msra.mxu0 0
      %2640 = vmatprep.subr.bf16.mxu0 0
      %2641 = vmatpush1.bf16.msra.mxu0 0
      %2642 = vmatprep.subr.bf16.mxu0 0
      %2643 = vmatpush1.bf16.msra.mxu0 0
      %2644 = vmatprep.subr.bf16.mxu0 0
      %2645 = vmatpush1.bf16.msra.mxu0 %v2502
      %2646 = vmatprep.subr.bf16.mxu0 0
      %2647 = vmatpush2.bf16.msra.mxu0 0
      %2648 = vmatprep.subr.bf16.mxu0 0
      %2649 = vmatpush2.bf16.msra.mxu0 0
      %2650 = vmatprep.subr.bf16.mxu0 0
      %2651 = vmatpush2.bf16.msra.mxu0 0
      %2652 = vmatprep.subr.bf16.mxu0 0
      %2653 = vmatpush2.bf16.msra.mxu0 0
      %2654 = vmatprep.subr.bf16.mxu0 0
      %2655 = vmatpush2.bf16.msra.mxu0 0
      %2656 = vmatprep.subr.bf16.mxu0 0
      %2657 = vmatpush2.bf16.msra.mxu0 0
      %2658 = vmatprep.subr.bf16.mxu0 0
      %2659 = vmatpush2.bf16.msra.mxu0 0
      %2660 = vmatprep.subr.bf16.mxu0 0
      %2661 = vmatpush2.bf16.msra.mxu0 0
      %2662 = vmatprep.mubr.bf16.mxu0 0
      %2663 = vmatmul.mubr.bf16.gmra.mxu0 %v971
      %v2664 = vpop.f32.mrf.mxu0
      %v2665 = vadd.f32 0.0, %v2664
      %v2666 = vpop.f32.mrf.mxu0
      %v2667 = vpop.f32.mrf.mxu0
      %v2668 = vadd.f32 0.0, %v2667
      %v2669 = vpop.f32.mrf.mxu0
      %2670 = vdwg.mxu0
      %2671 = vmatprep.subr.bf16.mxu0 0
      %2672 = vmatpush1.bf16.msra.mxu0 0
      %2673 = vmatprep.subr.bf16.mxu0 0
      %2674 = vmatpush1.bf16.msra.mxu0 0
      %2675 = vmatprep.subr.bf16.mxu0 0
      %2676 = vmatpush1.bf16.msra.mxu0 0
      %2677 = vmatprep.subr.bf16.mxu0 0
      %2678 = vmatpush1.bf16.msra.mxu0 0
      %2679 = vmatprep.subr.bf16.mxu0 0
      %2680 = vmatpush1.bf16.msra.mxu0 0
      %2681 = vmatprep.subr.bf16.mxu0 0
      %2682 = vmatpush1.bf16.msra.mxu0 0
      %2683 = vmatprep.subr.bf16.mxu0 0
      %2684 = vmatpush1.bf16.msra.mxu0 0
      %2685 = vmatprep.subr.bf16.mxu0 0
      %2686 = vmatpush1.bf16.msra.mxu0 %v2503
      %2687 = vmatprep.subr.bf16.mxu0 0
      %2688 = vmatpush2.bf16.msra.mxu0 0
      %2689 = vmatprep.subr.bf16.mxu0 0
      %2690 = vmatpush2.bf16.msra.mxu0 0
      %2691 = vmatprep.subr.bf16.mxu0 0
      %2692 = vmatpush2.bf16.msra.mxu0 0
      %2693 = vmatprep.subr.bf16.mxu0 0
      %2694 = vmatpush2.bf16.msra.mxu0 0
      %2695 = vmatprep.subr.bf16.mxu0 0
      %2696 = vmatpush2.bf16.msra.mxu0 0
      %2697 = vmatprep.subr.bf16.mxu0 0
      %2698 = vmatpush2.bf16.msra.mxu0 0
      %2699 = vmatprep.subr.bf16.mxu0 0
      %2700 = vmatpush2.bf16.msra.mxu0 0
      %2701 = vmatprep.subr.bf16.mxu0 0
      %2702 = vmatpush2.bf16.msra.mxu0 0
      %2703 = vmatprep.mubr.bf16.mxu0 0
      %2704 = vmatmul.mubr.bf16.gmra.mxu0 %v1020
      %v2705 = vpop.f32.mrf.mxu0
      %v2706 = vadd.f32 0.0, %v2705
      %v2707 = vpop.f32.mrf.mxu0
      %v2708 = vpop.f32.mrf.mxu0
      %v2709 = vadd.f32 0.0, %v2708
      %v2710 = vpop.f32.mrf.mxu0
      %2711 = vdwg.mxu0
      %2712 = vmatprep.subr.bf16.mxu0 0
      %2713 = vmatpush1.bf16.msra.mxu0 0
      %2714 = vmatprep.subr.bf16.mxu0 0
      %2715 = vmatpush1.bf16.msra.mxu0 0
      %2716 = vmatprep.subr.bf16.mxu0 0
      %2717 = vmatpush1.bf16.msra.mxu0 0
      %2718 = vmatprep.subr.bf16.mxu0 0
      %2719 = vmatpush1.bf16.msra.mxu0 0
      %2720 = vmatprep.subr.bf16.mxu0 0
      %2721 = vmatpush1.bf16.msra.mxu0 0
      %2722 = vmatprep.subr.bf16.mxu0 0
      %2723 = vmatpush1.bf16.msra.mxu0 0
      %2724 = vmatprep.subr.bf16.mxu0 0
      %2725 = vmatpush1.bf16.msra.mxu0 0
      %2726 = vmatprep.subr.bf16.mxu0 0
      %2727 = vmatpush1.bf16.msra.mxu0 %v2504
      %2728 = vmatprep.subr.bf16.mxu0 0
      %2729 = vmatpush2.bf16.msra.mxu0 0
      %2730 = vmatprep.subr.bf16.mxu0 0
      %2731 = vmatpush2.bf16.msra.mxu0 0
      %2732 = vmatprep.subr.bf16.mxu0 0
      %2733 = vmatpush2.bf16.msra.mxu0 0
      %2734 = vmatprep.subr.bf16.mxu0 0
      %2735 = vmatpush2.bf16.msra.mxu0 0
      %2736 = vmatprep.subr.bf16.mxu0 0
      %2737 = vmatpush2.bf16.msra.mxu0 0
      %2738 = vmatprep.subr.bf16.mxu0 0
      %2739 = vmatpush2.bf16.msra.mxu0 0
      %2740 = vmatprep.subr.bf16.mxu0 0
      %2741 = vmatpush2.bf16.msra.mxu0 0
      %2742 = vmatprep.subr.bf16.mxu0 0
      %2743 = vmatpush2.bf16.msra.mxu0 0
      %2744 = vmatprep.mubr.bf16.mxu0 0
      %2745 = vmatmul.mubr.bf16.gmra.mxu0 %v1069
      %v2746 = vpop.f32.mrf.mxu0
      %v2747 = vadd.f32 0.0, %v2746
      %v2748 = vpop.f32.mrf.mxu0
      %v2749 = vpop.f32.mrf.mxu0
      %v2750 = vadd.f32 0.0, %v2749
      %v2751 = vpop.f32.mrf.mxu0
      %2752 = vdwg.mxu0
      %2753 = vmatprep.subr.bf16.mxu0 0
      %2754 = vmatpush1.bf16.msra.mxu0 0
      %2755 = vmatprep.subr.bf16.mxu0 0
      %2756 = vmatpush1.bf16.msra.mxu0 0
      %2757 = vmatprep.subr.bf16.mxu0 0
      %2758 = vmatpush1.bf16.msra.mxu0 0
      %2759 = vmatprep.subr.bf16.mxu0 0
      %2760 = vmatpush1.bf16.msra.mxu0 0
      %2761 = vmatprep.subr.bf16.mxu0 0
      %2762 = vmatpush1.bf16.msra.mxu0 0
      %2763 = vmatprep.subr.bf16.mxu0 0
      %2764 = vmatpush1.bf16.msra.mxu0 0
      %2765 = vmatprep.subr.bf16.mxu0 0
      %2766 = vmatpush1.bf16.msra.mxu0 0
      %2767 = vmatprep.subr.bf16.mxu0 0
      %2768 = vmatpush1.bf16.msra.mxu0 %v2505
      %2769 = vmatprep.subr.bf16.mxu0 0
      %2770 = vmatpush2.bf16.msra.mxu0 0
      %2771 = vmatprep.subr.bf16.mxu0 0
      %2772 = vmatpush2.bf16.msra.mxu0 0
      %2773 = vmatprep.subr.bf16.mxu0 0
      %2774 = vmatpush2.bf16.msra.mxu0 0
      %2775 = vmatprep.subr.bf16.mxu0 0
      %2776 = vmatpush2.bf16.msra.mxu0 0
      %2777 = vmatprep.subr.bf16.mxu0 0
      %2778 = vmatpush2.bf16.msra.mxu0 0
      %2779 = vmatprep.subr.bf16.mxu0 0
      %2780 = vmatpush2.bf16.msra.mxu0 0
      %2781 = vmatprep.subr.bf16.mxu0 0
      %2782 = vmatpush2.bf16.msra.mxu0 0
      %2783 = vmatprep.subr.bf16.mxu0 0
      %2784 = vmatpush2.bf16.msra.mxu0 0
      %2785 = vmatprep.mubr.bf16.mxu0 0
      %2786 = vmatmul.mubr.bf16.gmra.mxu0 %v1118
      %v2787 = vpop.f32.mrf.mxu0
      %v2788 = vadd.f32 0.0, %v2787
      %v2789 = vpop.f32.mrf.mxu0
      %v2790 = vpop.f32.mrf.mxu0
      %v2791 = vadd.f32 0.0, %v2790
      %v2792 = vpop.f32.mrf.mxu0
      %2793 = vdwg.mxu0
      %2794 = vmatprep.subr.bf16.mxu0 0
      %2795 = vmatpush1.bf16.msra.mxu0 0
      %2796 = vmatprep.subr.bf16.mxu0 0
      %2797 = vmatpush1.bf16.msra.mxu0 0
      %2798 = vmatprep.subr.bf16.mxu0 0
      %2799 = vmatpush1.bf16.msra.mxu0 0
      %2800 = vmatprep.subr.bf16.mxu0 0
      %2801 = vmatpush1.bf16.msra.mxu0 0
      %2802 = vmatprep.subr.bf16.mxu0 0
      %2803 = vmatpush1.bf16.msra.mxu0 0
      %2804 = vmatprep.subr.bf16.mxu0 0
      %2805 = vmatpush1.bf16.msra.mxu0 0
      %2806 = vmatprep.subr.bf16.mxu0 0
      %2807 = vmatpush1.bf16.msra.mxu0 0
      %2808 = vmatprep.subr.bf16.mxu0 0
      %2809 = vmatpush1.bf16.msra.mxu0 %v2506
      %2810 = vmatprep.subr.bf16.mxu0 0
      %2811 = vmatpush2.bf16.msra.mxu0 0
      %2812 = vmatprep.subr.bf16.mxu0 0
      %2813 = vmatpush2.bf16.msra.mxu0 0
      %2814 = vmatprep.subr.bf16.mxu0 0
      %2815 = vmatpush2.bf16.msra.mxu0 0
      %2816 = vmatprep.subr.bf16.mxu0 0
      %2817 = vmatpush2.bf16.msra.mxu0 0
      %2818 = vmatprep.subr.bf16.mxu0 0
      %2819 = vmatpush2.bf16.msra.mxu0 0
      %2820 = vmatprep.subr.bf16.mxu0 0
      %2821 = vmatpush2.bf16.msra.mxu0 0
      %2822 = vmatprep.subr.bf16.mxu0 0
      %2823 = vmatpush2.bf16.msra.mxu0 0
      %2824 = vmatprep.subr.bf16.mxu0 0
      %2825 = vmatpush2.bf16.msra.mxu0 0
      %2826 = vmatprep.mubr.bf16.mxu0 0
      %2827 = vmatmul.mubr.bf16.gmra.mxu0 %v1167
      %v2828 = vpop.f32.mrf.mxu0
      %v2829 = vadd.f32 0.0, %v2828
      %v2830 = vpop.f32.mrf.mxu0
      %v2831 = vpop.f32.mrf.mxu0
      %v2832 = vadd.f32 0.0, %v2831
      %v2833 = vpop.f32.mrf.mxu0
      %2834 = vdwg.mxu0
      %v2835 = vlaneseq
      %v2836 = vshrl.u32 %v2835, 7
      %v2837 = vsub.s32 3, %v2836
      %v2838 = vrot.slane %v294, %v2837
      %v2839 = vadd.f32 %v2542, %v2838
      %v2840 = vadd.f32 %v2545, %v2838
      %v2841 = vadd.f32 %v2583, %v2838
      %v2842 = vadd.f32 %v2586, %v2838
      %v2843 = vadd.f32 %v2624, %v2838
      %v2844 = vadd.f32 %v2627, %v2838
      %v2845 = vadd.f32 %v2665, %v2838
      %v2846 = vadd.f32 %v2668, %v2838
      %v2847 = vadd.f32 %v2706, %v2838
      %v2848 = vadd.f32 %v2709, %v2838
      %v2849 = vadd.f32 %v2747, %v2838
      %v2850 = vadd.f32 %v2750, %v2838
      %v2851 = vadd.f32 %v2788, %v2838
      %v2852 = vadd.f32 %v2791, %v2838
      %v2853 = vadd.f32 %v2829, %v2838
      %v2854 = vadd.f32 %v2832, %v2838
      %v2855 = vmax.f32 %v2839, 0.0
      %v2856 = vmax.f32 %v2840, 0.0
      %v2857 = vmax.f32 %v2841, 0.0
      %v2858 = vmax.f32 %v2842, 0.0
      %v2859 = vmax.f32 %v2843, 0.0
      %v2860 = vmax.f32 %v2844, 0.0
      %v2861 = vmax.f32 %v2845, 0.0
      %v2862 = vmax.f32 %v2846, 0.0
      %v2863 = vmax.f32 %v2847, 0.0
      %v2864 = vmax.f32 %v2848, 0.0
      %v2865 = vmax.f32 %v2849, 0.0
      %v2866 = vmax.f32 %v2850, 0.0
      %v2867 = vmax.f32 %v2851, 0.0
      %v2868 = vmax.f32 %v2852, 0.0
      %v2869 = vmax.f32 %v2853, 0.0
      %v2870 = vmax.f32 %v2854, 0.0
      %v2871 = vpack.c.bf16 %v2856, %v2855
      %v2872 = vpack.c.bf16 %v2858, %v2857
      %v2873 = vpack.c.bf16 %v2860, %v2859
      %v2874 = vpack.c.bf16 %v2862, %v2861
      %v2875 = vpack.c.bf16 %v2864, %v2863
      %v2876 = vpack.c.bf16 %v2866, %v2865
      %v2877 = vpack.c.bf16 %v2868, %v2867
      %v2878 = vpack.c.bf16 %v2870, %v2869
      %s2879 = scalar_lea.vmem %s3, 192
      %v2880 = vld [vmem:[%s2879] sm:$0xf]
      %v2881 = vld [vmem:[%s2879 + $0x4] sm:$0xf]
      %v2882 = vld [vmem:[%s2879 + $0x8] sm:$0xf]
      %v2883 = vld [vmem:[%s2879 + $0xc] sm:$0xf]
      %v2884 = vld [vmem:[%s2879 + $0x10] sm:$0xf]
      %v2885 = vld [vmem:[%s2879 + $0x14] sm:$0xf]
      %v2886 = vld [vmem:[%s2879 + $0x18] sm:$0xf]
      %v2887 = vld [vmem:[%s2879 + $0x1c] sm:$0xf]
      %v2888 = vld [vmem:[%s2879 + $0x20] sm:$0xf]
      %v2889 = vld [vmem:[%s2879 + $0x24] sm:$0xf]
      %v2890 = vld [vmem:[%s2879 + $0x28] sm:$0xf]
      %v2891 = vld [vmem:[%s2879 + $0x2c] sm:$0xf]
      %v2892 = vld [vmem:[%s2879 + $0x30] sm:$0xf]
      %v2893 = vld [vmem:[%s2879 + $0x34] sm:$0xf]
      %v2894 = vld [vmem:[%s2879 + $0x38] sm:$0xf]
      %v2895 = vld [vmem:[%s2879 + $0x3c] sm:$0xf]
      %v2912 = vunpack.c.l.b16 %v2880
      %v2913 = vunpack.c.l.b16 %v2881
      %v2914 = vunpack.c.l.b16 %v2882
      %v2915 = vunpack.c.l.b16 %v2883
      %v2916 = vunpack.c.l.b16 %v2884
      %v2917 = vunpack.c.l.b16 %v2885
      %v2918 = vunpack.c.l.b16 %v2886
      %v2919 = vunpack.c.l.b16 %v2887
      %v2920 = vunpack.c.l.b16 %v2888
      %v2921 = vunpack.c.l.b16 %v2889
      %v2922 = vunpack.c.l.b16 %v2890
      %v2923 = vunpack.c.l.b16 %v2891
      %v2924 = vunpack.c.l.b16 %v2892
      %v2925 = vunpack.c.l.b16 %v2893
      %v2926 = vunpack.c.l.b16 %v2894
      %v2927 = vunpack.c.l.b16 %v2895
      %v2928 = vpack.c.b16 %v2913, %v2912
      %v2929 = vpack.c.b16 %v2915, %v2914
      %v2930 = vpack.c.b16 %v2917, %v2916
      %v2931 = vpack.c.b16 %v2919, %v2918
      %v2932 = vpack.c.b16 %v2921, %v2920
      %v2933 = vpack.c.b16 %v2923, %v2922
      %v2934 = vpack.c.b16 %v2925, %v2924
      %v2935 = vpack.c.b16 %v2927, %v2926
      %2944 = vmatprep.subr.bf16.mxu0 0
      %2945 = vmatpush1.bf16.msra.mxu0 %v2935
      %2946 = vmatprep.subr.bf16.mxu0 0
      %2947 = vmatpush1.bf16.msra.mxu0 %v2934
      %2948 = vmatprep.subr.bf16.mxu0 0
      %2949 = vmatpush1.bf16.msra.mxu0 %v2933
      %2950 = vmatprep.subr.bf16.mxu0 0
      %2951 = vmatpush1.bf16.msra.mxu0 %v2932
      %2952 = vmatprep.subr.bf16.mxu0 0
      %2953 = vmatpush1.bf16.msra.mxu0 %v2931
      %2954 = vmatprep.subr.bf16.mxu0 0
      %2955 = vmatpush1.bf16.msra.mxu0 %v2930
      %2956 = vmatprep.subr.bf16.mxu0 0
      %2957 = vmatpush1.bf16.msra.mxu0 %v2929
      %2958 = vmatprep.subr.bf16.mxu0 0
      %2959 = vmatpush1.bf16.msra.mxu0 %v2928
      %2960 = vmatprep.subr.bf16.mxu0 0
      %2961 = vmatpush2.bf16.msra.mxu0 0
      %2962 = vmatprep.subr.bf16.mxu0 0
      %2963 = vmatpush2.bf16.msra.mxu0 0
      %2964 = vmatprep.subr.bf16.mxu0 0
      %2965 = vmatpush2.bf16.msra.mxu0 0
      %2966 = vmatprep.subr.bf16.mxu0 0
      %2967 = vmatpush2.bf16.msra.mxu0 0
      %2968 = vmatprep.subr.bf16.mxu0 0
      %2969 = vmatpush2.bf16.msra.mxu0 0
      %2970 = vmatprep.subr.bf16.mxu0 0
      %2971 = vmatpush2.bf16.msra.mxu0 0
      %2972 = vmatprep.subr.bf16.mxu0 0
      %2973 = vmatpush2.bf16.msra.mxu0 0
      %2974 = vmatprep.subr.bf16.mxu0 0
      %2975 = vmatpush2.bf16.msra.mxu0 0
      %2976 = vmatprep.mubr.bf16.mxu0 0
      %2977 = vmatmul.mubr.bf16.gmra.mxu0 %v2871
      %v2978 = vpop.f32.mrf.mxu0
      %v2979 = vadd.f32 0.0, %v2978
      %v2980 = vpop.f32.mrf.mxu0
      %v2981 = vpop.f32.mrf.mxu0
      %v2982 = vadd.f32 0.0, %v2981
      %v2983 = vpop.f32.mrf.mxu0
      %2984 = vmatprep.mubr.bf16.mxu0 0
      %2985 = vmatmul.mubr.bf16.gmra.mxu0 %v2872
      %v2986 = vpop.f32.mrf.mxu0
      %v2987 = vadd.f32 0.0, %v2986
      %v2988 = vpop.f32.mrf.mxu0
      %v2989 = vpop.f32.mrf.mxu0
      %v2990 = vadd.f32 0.0, %v2989
      %v2991 = vpop.f32.mrf.mxu0
      %2992 = vmatprep.mubr.bf16.mxu0 0
      %2993 = vmatmul.mubr.bf16.gmra.mxu0 %v2873
      %v2994 = vpop.f32.mrf.mxu0
      %v2995 = vadd.f32 0.0, %v2994
      %v2996 = vpop.f32.mrf.mxu0
      %v2997 = vpop.f32.mrf.mxu0
      %v2998 = vadd.f32 0.0, %v2997
      %v2999 = vpop.f32.mrf.mxu0
      %3000 = vmatprep.mubr.bf16.mxu0 0
      %3001 = vmatmul.mubr.bf16.gmra.mxu0 %v2874
      %v3002 = vpop.f32.mrf.mxu0
      %v3003 = vadd.f32 0.0, %v3002
      %v3004 = vpop.f32.mrf.mxu0
      %v3005 = vpop.f32.mrf.mxu0
      %v3006 = vadd.f32 0.0, %v3005
      %v3007 = vpop.f32.mrf.mxu0
      %3008 = vmatprep.mubr.bf16.mxu0 0
      %3009 = vmatmul.mubr.bf16.gmra.mxu0 %v2875
      %v3010 = vpop.f32.mrf.mxu0
      %v3011 = vadd.f32 0.0, %v3010
      %v3012 = vpop.f32.mrf.mxu0
      %v3013 = vpop.f32.mrf.mxu0
      %v3014 = vadd.f32 0.0, %v3013
      %v3015 = vpop.f32.mrf.mxu0
      %3016 = vmatprep.mubr.bf16.mxu0 0
      %3017 = vmatmul.mubr.bf16.gmra.mxu0 %v2876
      %v3018 = vpop.f32.mrf.mxu0
      %v3019 = vadd.f32 0.0, %v3018
      %v3020 = vpop.f32.mrf.mxu0
      %v3021 = vpop.f32.mrf.mxu0
      %v3022 = vadd.f32 0.0, %v3021
      %v3023 = vpop.f32.mrf.mxu0
      %3024 = vmatprep.mubr.bf16.mxu0 0
      %3025 = vmatmul.mubr.bf16.gmra.mxu0 %v2877
      %v3026 = vpop.f32.mrf.mxu0
      %v3027 = vadd.f32 0.0, %v3026
      %v3028 = vpop.f32.mrf.mxu0
      %v3029 = vpop.f32.mrf.mxu0
      %v3030 = vadd.f32 0.0, %v3029
      %v3031 = vpop.f32.mrf.mxu0
      %3032 = vmatprep.mubr.bf16.mxu0 0
      %3033 = vmatmul.mubr.bf16.gmra.mxu0 %v2878
      %v3034 = vpop.f32.mrf.mxu0
      %v3035 = vadd.f32 0.0, %v3034
      %v3036 = vpop.f32.mrf.mxu0
      %v3037 = vpop.f32.mrf.mxu0
      %v3038 = vadd.f32 0.0, %v3037
      %v3039 = vpop.f32.mrf.mxu0
      %3040 = vdwg.mxu0
      %v3041 = vpack.c.bf16 %v2982, %v2979
      %v3042 = vpack.c.bf16 %v2990, %v2987
      %v3043 = vpack.c.bf16 %v2998, %v2995
      %v3044 = vpack.c.bf16 %v3006, %v3003
      %v3045 = vpack.c.bf16 %v3014, %v3011
      %v3046 = vpack.c.bf16 %v3022, %v3019
      %v3047 = vpack.c.bf16 %v3030, %v3027
      %v3048 = vpack.c.bf16 %v3038, %v3035
      %3049 = vmatprep.subr.bf16.mxu0 0
      %3050 = vmatpush1.bf16.msra.mxu0 0
      %3051 = vmatprep.subr.bf16.mxu0 0
      %3052 = vmatpush1.bf16.msra.mxu0 0
      %3053 = vmatprep.subr.bf16.mxu0 0
      %3054 = vmatpush1.bf16.msra.mxu0 0
      %3055 = vmatprep.subr.bf16.mxu0 0
      %3056 = vmatpush1.bf16.msra.mxu0 0
      %3057 = vmatprep.subr.bf16.mxu0 0
      %3058 = vmatpush1.bf16.msra.mxu0 0
      %3059 = vmatprep.subr.bf16.mxu0 0
      %3060 = vmatpush1.bf16.msra.mxu0 0
      %3061 = vmatprep.subr.bf16.mxu0 0
      %3062 = vmatpush1.bf16.msra.mxu0 0
      %3063 = vmatprep.subr.bf16.mxu0 0
      %3064 = vmatpush1.bf16.msra.mxu0 %v3041
      %3065 = vmatprep.subr.bf16.mxu0 0
      %3066 = vmatpush2.bf16.msra.mxu0 0
      %3067 = vmatprep.subr.bf16.mxu0 0
      %3068 = vmatpush2.bf16.msra.mxu0 0
      %3069 = vmatprep.subr.bf16.mxu0 0
      %3070 = vmatpush2.bf16.msra.mxu0 0
      %3071 = vmatprep.subr.bf16.mxu0 0
      %3072 = vmatpush2.bf16.msra.mxu0 0
      %3073 = vmatprep.subr.bf16.mxu0 0
      %3074 = vmatpush2.bf16.msra.mxu0 0
      %3075 = vmatprep.subr.bf16.mxu0 0
      %3076 = vmatpush2.bf16.msra.mxu0 0
      %3077 = vmatprep.subr.bf16.mxu0 0
      %3078 = vmatpush2.bf16.msra.mxu0 0
      %3079 = vmatprep.subr.bf16.mxu0 0
      %3080 = vmatpush2.bf16.msra.mxu0 0
      %3081 = vmatprep.mubr.bf16.mxu0 0
      %3082 = vmatmul.mubr.bf16.gmra.mxu0 %v824
      %v3083 = vpop.f32.mrf.mxu0
      %v3084 = vadd.f32 0.0, %v3083
      %v3085 = vpop.f32.mrf.mxu0
      %v3086 = vpop.f32.mrf.mxu0
      %v3087 = vadd.f32 0.0, %v3086
      %v3088 = vpop.f32.mrf.mxu0
      %3089 = vdwg.mxu0
      %3090 = vmatprep.subr.bf16.mxu0 0
      %3091 = vmatpush1.bf16.msra.mxu0 0
      %3092 = vmatprep.subr.bf16.mxu0 0
      %3093 = vmatpush1.bf16.msra.mxu0 0
      %3094 = vmatprep.subr.bf16.mxu0 0
      %3095 = vmatpush1.bf16.msra.mxu0 0
      %3096 = vmatprep.subr.bf16.mxu0 0
      %3097 = vmatpush1.bf16.msra.mxu0 0
      %3098 = vmatprep.subr.bf16.mxu0 0
      %3099 = vmatpush1.bf16.msra.mxu0 0
      %3100 = vmatprep.subr.bf16.mxu0 0
      %3101 = vmatpush1.bf16.msra.mxu0 0
      %3102 = vmatprep.subr.bf16.mxu0 0
      %3103 = vmatpush1.bf16.msra.mxu0 0
      %3104 = vmatprep.subr.bf16.mxu0 0
      %3105 = vmatpush1.bf16.msra.mxu0 %v3042
      %3106 = vmatprep.subr.bf16.mxu0 0
      %3107 = vmatpush2.bf16.msra.mxu0 0
      %3108 = vmatprep.subr.bf16.mxu0 0
      %3109 = vmatpush2.bf16.msra.mxu0 0
      %3110 = vmatprep.subr.bf16.mxu0 0
      %3111 = vmatpush2.bf16.msra.mxu0 0
      %3112 = vmatprep.subr.bf16.mxu0 0
      %3113 = vmatpush2.bf16.msra.mxu0 0
      %3114 = vmatprep.subr.bf16.mxu0 0
      %3115 = vmatpush2.bf16.msra.mxu0 0
      %3116 = vmatprep.subr.bf16.mxu0 0
      %3117 = vmatpush2.bf16.msra.mxu0 0
      %3118 = vmatprep.subr.bf16.mxu0 0
      %3119 = vmatpush2.bf16.msra.mxu0 0
      %3120 = vmatprep.subr.bf16.mxu0 0
      %3121 = vmatpush2.bf16.msra.mxu0 0
      %3122 = vmatprep.mubr.bf16.mxu0 0
      %3123 = vmatmul.mubr.bf16.gmra.mxu0 %v873
      %v3124 = vpop.f32.mrf.mxu0
      %v3125 = vadd.f32 0.0, %v3124
      %v3126 = vpop.f32.mrf.mxu0
      %v3127 = vpop.f32.mrf.mxu0
      %v3128 = vadd.f32 0.0, %v3127
      %v3129 = vpop.f32.mrf.mxu0
      %3130 = vdwg.mxu0
      %3131 = vmatprep.subr.bf16.mxu0 0
      %3132 = vmatpush1.bf16.msra.mxu0 0
      %3133 = vmatprep.subr.bf16.mxu0 0
      %3134 = vmatpush1.bf16.msra.mxu0 0
      %3135 = vmatprep.subr.bf16.mxu0 0
      %3136 = vmatpush1.bf16.msra.mxu0 0
      %3137 = vmatprep.subr.bf16.mxu0 0
      %3138 = vmatpush1.bf16.msra.mxu0 0
      %3139 = vmatprep.subr.bf16.mxu0 0
      %3140 = vmatpush1.bf16.msra.mxu0 0
      %3141 = vmatprep.subr.bf16.mxu0 0
      %3142 = vmatpush1.bf16.msra.mxu0 0
      %3143 = vmatprep.subr.bf16.mxu0 0
      %3144 = vmatpush1.bf16.msra.mxu0 0
      %3145 = vmatprep.subr.bf16.mxu0 0
      %3146 = vmatpush1.bf16.msra.mxu0 %v3043
      %3147 = vmatprep.subr.bf16.mxu0 0
      %3148 = vmatpush2.bf16.msra.mxu0 0
      %3149 = vmatprep.subr.bf16.mxu0 0
      %3150 = vmatpush2.bf16.msra.mxu0 0
      %3151 = vmatprep.subr.bf16.mxu0 0
      %3152 = vmatpush2.bf16.msra.mxu0 0
      %3153 = vmatprep.subr.bf16.mxu0 0
      %3154 = vmatpush2.bf16.msra.mxu0 0
      %3155 = vmatprep.subr.bf16.mxu0 0
      %3156 = vmatpush2.bf16.msra.mxu0 0
      %3157 = vmatprep.subr.bf16.mxu0 0
      %3158 = vmatpush2.bf16.msra.mxu0 0
      %3159 = vmatprep.subr.bf16.mxu0 0
      %3160 = vmatpush2.bf16.msra.mxu0 0
      %3161 = vmatprep.subr.bf16.mxu0 0
      %3162 = vmatpush2.bf16.msra.mxu0 0
      %3163 = vmatprep.mubr.bf16.mxu0 0
      %3164 = vmatmul.mubr.bf16.gmra.mxu0 %v922
      %v3165 = vpop.f32.mrf.mxu0
      %v3166 = vadd.f32 0.0, %v3165
      %v3167 = vpop.f32.mrf.mxu0
      %v3168 = vpop.f32.mrf.mxu0
      %v3169 = vadd.f32 0.0, %v3168
      %v3170 = vpop.f32.mrf.mxu0
      %3171 = vdwg.mxu0
      %3172 = vmatprep.subr.bf16.mxu0 0
      %3173 = vmatpush1.bf16.msra.mxu0 0
      %3174 = vmatprep.subr.bf16.mxu0 0
      %3175 = vmatpush1.bf16.msra.mxu0 0
      %3176 = vmatprep.subr.bf16.mxu0 0
      %3177 = vmatpush1.bf16.msra.mxu0 0
      %3178 = vmatprep.subr.bf16.mxu0 0
      %3179 = vmatpush1.bf16.msra.mxu0 0
      %3180 = vmatprep.subr.bf16.mxu0 0
      %3181 = vmatpush1.bf16.msra.mxu0 0
      %3182 = vmatprep.subr.bf16.mxu0 0
      %3183 = vmatpush1.bf16.msra.mxu0 0
      %3184 = vmatprep.subr.bf16.mxu0 0
      %3185 = vmatpush1.bf16.msra.mxu0 0
      %3186 = vmatprep.subr.bf16.mxu0 0
      %3187 = vmatpush1.bf16.msra.mxu0 %v3044
      %3188 = vmatprep.subr.bf16.mxu0 0
      %3189 = vmatpush2.bf16.msra.mxu0 0
      %3190 = vmatprep.subr.bf16.mxu0 0
      %3191 = vmatpush2.bf16.msra.mxu0 0
      %3192 = vmatprep.subr.bf16.mxu0 0
      %3193 = vmatpush2.bf16.msra.mxu0 0
      %3194 = vmatprep.subr.bf16.mxu0 0
      %3195 = vmatpush2.bf16.msra.mxu0 0
      %3196 = vmatprep.subr.bf16.mxu0 0
      %3197 = vmatpush2.bf16.msra.mxu0 0
      %3198 = vmatprep.subr.bf16.mxu0 0
      %3199 = vmatpush2.bf16.msra.mxu0 0
      %3200 = vmatprep.subr.bf16.mxu0 0
      %3201 = vmatpush2.bf16.msra.mxu0 0
      %3202 = vmatprep.subr.bf16.mxu0 0
      %3203 = vmatpush2.bf16.msra.mxu0 0
      %3204 = vmatprep.mubr.bf16.mxu0 0
      %3205 = vmatmul.mubr.bf16.gmra.mxu0 %v971
      %v3206 = vpop.f32.mrf.mxu0
      %v3207 = vadd.f32 0.0, %v3206
      %v3208 = vpop.f32.mrf.mxu0
      %v3209 = vpop.f32.mrf.mxu0
      %v3210 = vadd.f32 0.0, %v3209
      %v3211 = vpop.f32.mrf.mxu0
      %3212 = vdwg.mxu0
      %3213 = vmatprep.subr.bf16.mxu0 0
      %3214 = vmatpush1.bf16.msra.mxu0 0
      %3215 = vmatprep.subr.bf16.mxu0 0
      %3216 = vmatpush1.bf16.msra.mxu0 0
      %3217 = vmatprep.subr.bf16.mxu0 0
      %3218 = vmatpush1.bf16.msra.mxu0 0
      %3219 = vmatprep.subr.bf16.mxu0 0
      %3220 = vmatpush1.bf16.msra.mxu0 0
      %3221 = vmatprep.subr.bf16.mxu0 0
      %3222 = vmatpush1.bf16.msra.mxu0 0
      %3223 = vmatprep.subr.bf16.mxu0 0
      %3224 = vmatpush1.bf16.msra.mxu0 0
      %3225 = vmatprep.subr.bf16.mxu0 0
      %3226 = vmatpush1.bf16.msra.mxu0 0
      %3227 = vmatprep.subr.bf16.mxu0 0
      %3228 = vmatpush1.bf16.msra.mxu0 %v3045
      %3229 = vmatprep.subr.bf16.mxu0 0
      %3230 = vmatpush2.bf16.msra.mxu0 0
      %3231 = vmatprep.subr.bf16.mxu0 0
      %3232 = vmatpush2.bf16.msra.mxu0 0
      %3233 = vmatprep.subr.bf16.mxu0 0
      %3234 = vmatpush2.bf16.msra.mxu0 0
      %3235 = vmatprep.subr.bf16.mxu0 0
      %3236 = vmatpush2.bf16.msra.mxu0 0
      %3237 = vmatprep.subr.bf16.mxu0 0
      %3238 = vmatpush2.bf16.msra.mxu0 0
      %3239 = vmatprep.subr.bf16.mxu0 0
      %3240 = vmatpush2.bf16.msra.mxu0 0
      %3241 = vmatprep.subr.bf16.mxu0 0
      %3242 = vmatpush2.bf16.msra.mxu0 0
      %3243 = vmatprep.subr.bf16.mxu0 0
      %3244 = vmatpush2.bf16.msra.mxu0 0
      %3245 = vmatprep.mubr.bf16.mxu0 0
      %3246 = vmatmul.mubr.bf16.gmra.mxu0 %v1020
      %v3247 = vpop.f32.mrf.mxu0
      %v3248 = vadd.f32 0.0, %v3247
      %v3249 = vpop.f32.mrf.mxu0
      %v3250 = vpop.f32.mrf.mxu0
      %v3251 = vadd.f32 0.0, %v3250
      %v3252 = vpop.f32.mrf.mxu0
      %3253 = vdwg.mxu0
      %3254 = vmatprep.subr.bf16.mxu0 0
      %3255 = vmatpush1.bf16.msra.mxu0 0
      %3256 = vmatprep.subr.bf16.mxu0 0
      %3257 = vmatpush1.bf16.msra.mxu0 0
      %3258 = vmatprep.subr.bf16.mxu0 0
      %3259 = vmatpush1.bf16.msra.mxu0 0
      %3260 = vmatprep.subr.bf16.mxu0 0
      %3261 = vmatpush1.bf16.msra.mxu0 0
      %3262 = vmatprep.subr.bf16.mxu0 0
      %3263 = vmatpush1.bf16.msra.mxu0 0
      %3264 = vmatprep.subr.bf16.mxu0 0
      %3265 = vmatpush1.bf16.msra.mxu0 0
      %3266 = vmatprep.subr.bf16.mxu0 0
      %3267 = vmatpush1.bf16.msra.mxu0 0
      %3268 = vmatprep.subr.bf16.mxu0 0
      %3269 = vmatpush1.bf16.msra.mxu0 %v3046
      %3270 = vmatprep.subr.bf16.mxu0 0
      %3271 = vmatpush2.bf16.msra.mxu0 0
      %3272 = vmatprep.subr.bf16.mxu0 0
      %3273 = vmatpush2.bf16.msra.mxu0 0
      %3274 = vmatprep.subr.bf16.mxu0 0
      %3275 = vmatpush2.bf16.msra.mxu0 0
      %3276 = vmatprep.subr.bf16.mxu0 0
      %3277 = vmatpush2.bf16.msra.mxu0 0
      %3278 = vmatprep.subr.bf16.mxu0 0
      %3279 = vmatpush2.bf16.msra.mxu0 0
      %3280 = vmatprep.subr.bf16.mxu0 0
      %3281 = vmatpush2.bf16.msra.mxu0 0
      %3282 = vmatprep.subr.bf16.mxu0 0
      %3283 = vmatpush2.bf16.msra.mxu0 0
      %3284 = vmatprep.subr.bf16.mxu0 0
      %3285 = vmatpush2.bf16.msra.mxu0 0
      %3286 = vmatprep.mubr.bf16.mxu0 0
      %3287 = vmatmul.mubr.bf16.gmra.mxu0 %v1069
      %v3288 = vpop.f32.mrf.mxu0
      %v3289 = vadd.f32 0.0, %v3288
      %v3290 = vpop.f32.mrf.mxu0
      %v3291 = vpop.f32.mrf.mxu0
      %v3292 = vadd.f32 0.0, %v3291
      %v3293 = vpop.f32.mrf.mxu0
      %3294 = vdwg.mxu0
      %3295 = vmatprep.subr.bf16.mxu0 0
      %3296 = vmatpush1.bf16.msra.mxu0 0
      %3297 = vmatprep.subr.bf16.mxu0 0
      %3298 = vmatpush1.bf16.msra.mxu0 0
      %3299 = vmatprep.subr.bf16.mxu0 0
      %3300 = vmatpush1.bf16.msra.mxu0 0
      %3301 = vmatprep.subr.bf16.mxu0 0
      %3302 = vmatpush1.bf16.msra.mxu0 0
      %3303 = vmatprep.subr.bf16.mxu0 0
      %3304 = vmatpush1.bf16.msra.mxu0 0
      %3305 = vmatprep.subr.bf16.mxu0 0
      %3306 = vmatpush1.bf16.msra.mxu0 0
      %3307 = vmatprep.subr.bf16.mxu0 0
      %3308 = vmatpush1.bf16.msra.mxu0 0
      %3309 = vmatprep.subr.bf16.mxu0 0
      %3310 = vmatpush1.bf16.msra.mxu0 %v3047
      %3311 = vmatprep.subr.bf16.mxu0 0
      %3312 = vmatpush2.bf16.msra.mxu0 0
      %3313 = vmatprep.subr.bf16.mxu0 0
      %3314 = vmatpush2.bf16.msra.mxu0 0
      %3315 = vmatprep.subr.bf16.mxu0 0
      %3316 = vmatpush2.bf16.msra.mxu0 0
      %3317 = vmatprep.subr.bf16.mxu0 0
      %3318 = vmatpush2.bf16.msra.mxu0 0
      %3319 = vmatprep.subr.bf16.mxu0 0
      %3320 = vmatpush2.bf16.msra.mxu0 0
      %3321 = vmatprep.subr.bf16.mxu0 0
      %3322 = vmatpush2.bf16.msra.mxu0 0
      %3323 = vmatprep.subr.bf16.mxu0 0
      %3324 = vmatpush2.bf16.msra.mxu0 0
      %3325 = vmatprep.subr.bf16.mxu0 0
      %3326 = vmatpush2.bf16.msra.mxu0 0
      %3327 = vmatprep.mubr.bf16.mxu0 0
      %3328 = vmatmul.mubr.bf16.gmra.mxu0 %v1118
      %v3329 = vpop.f32.mrf.mxu0
      %v3330 = vadd.f32 0.0, %v3329
      %v3331 = vpop.f32.mrf.mxu0
      %v3332 = vpop.f32.mrf.mxu0
      %v3333 = vadd.f32 0.0, %v3332
      %v3334 = vpop.f32.mrf.mxu0
      %3335 = vdwg.mxu0
      %3336 = vmatprep.subr.bf16.mxu0 0
      %3337 = vmatpush1.bf16.msra.mxu0 0
      %3338 = vmatprep.subr.bf16.mxu0 0
      %3339 = vmatpush1.bf16.msra.mxu0 0
      %3340 = vmatprep.subr.bf16.mxu0 0
      %3341 = vmatpush1.bf16.msra.mxu0 0
      %3342 = vmatprep.subr.bf16.mxu0 0
      %3343 = vmatpush1.bf16.msra.mxu0 0
      %3344 = vmatprep.subr.bf16.mxu0 0
      %3345 = vmatpush1.bf16.msra.mxu0 0
      %3346 = vmatprep.subr.bf16.mxu0 0
      %3347 = vmatpush1.bf16.msra.mxu0 0
      %3348 = vmatprep.subr.bf16.mxu0 0
      %3349 = vmatpush1.bf16.msra.mxu0 0
      %3350 = vmatprep.subr.bf16.mxu0 0
      %3351 = vmatpush1.bf16.msra.mxu0 %v3048
      %3352 = vmatprep.subr.bf16.mxu0 0
      %3353 = vmatpush2.bf16.msra.mxu0 0
      %3354 = vmatprep.subr.bf16.mxu0 0
      %3355 = vmatpush2.bf16.msra.mxu0 0
      %3356 = vmatprep.subr.bf16.mxu0 0
      %3357 = vmatpush2.bf16.msra.mxu0 0
      %3358 = vmatprep.subr.bf16.mxu0 0
      %3359 = vmatpush2.bf16.msra.mxu0 0
      %3360 = vmatprep.subr.bf16.mxu0 0
      %3361 = vmatpush2.bf16.msra.mxu0 0
      %3362 = vmatprep.subr.bf16.mxu0 0
      %3363 = vmatpush2.bf16.msra.mxu0 0
      %3364 = vmatprep.subr.bf16.mxu0 0
      %3365 = vmatpush2.bf16.msra.mxu0 0
      %3366 = vmatprep.subr.bf16.mxu0 0
      %3367 = vmatpush2.bf16.msra.mxu0 0
      %3368 = vmatprep.mubr.bf16.mxu0 0
      %3369 = vmatmul.mubr.bf16.gmra.mxu0 %v1167
      %v3370 = vpop.f32.mrf.mxu0
      %v3371 = vadd.f32 0.0, %v3370
      %v3372 = vpop.f32.mrf.mxu0
      %v3373 = vpop.f32.mrf.mxu0
      %v3374 = vadd.f32 0.0, %v3373
      %v3375 = vpop.f32.mrf.mxu0
      %3376 = vdwg.mxu0
      %v3377 = vlaneseq
      %v3378 = vshrl.u32 %v3377, 7
      %v3379 = vsub.s32 4, %v3378
      %v3380 = vrot.slane %v294, %v3379
      %v3381 = vadd.f32 %v3084, %v3380
      %v3382 = vadd.f32 %v3087, %v3380
      %v3383 = vadd.f32 %v3125, %v3380
      %v3384 = vadd.f32 %v3128, %v3380
      %v3385 = vadd.f32 %v3166, %v3380
      %v3386 = vadd.f32 %v3169, %v3380
      %v3387 = vadd.f32 %v3207, %v3380
      %v3388 = vadd.f32 %v3210, %v3380
      %v3389 = vadd.f32 %v3248, %v3380
      %v3390 = vadd.f32 %v3251, %v3380
      %v3391 = vadd.f32 %v3289, %v3380
      %v3392 = vadd.f32 %v3292, %v3380
      %v3393 = vadd.f32 %v3330, %v3380
      %v3394 = vadd.f32 %v3333, %v3380
      %v3395 = vadd.f32 %v3371, %v3380
      %v3396 = vadd.f32 %v3374, %v3380
      %v3397 = vpack.c.bf16 %v3382, %v3381
      %v3398 = vpack.c.bf16 %v3384, %v3383
      %v3399 = vpack.c.bf16 %v3386, %v3385
      %v3400 = vpack.c.bf16 %v3388, %v3387
      %v3401 = vpack.c.bf16 %v3390, %v3389
      %v3402 = vpack.c.bf16 %v3392, %v3391
      %v3403 = vpack.c.bf16 %v3394, %v3393
      %v3404 = vpack.c.bf16 %v3396, %v3395
      %v3413 = vunpack.c.l.b16 %v3397
      %v3414 = vunpack.c.h.b16 %v3397
      %v3415 = vunpack.c.l.b16 %v3398
      %v3416 = vunpack.c.h.b16 %v3398
      %v3417 = vunpack.c.l.b16 %v3399
      %v3418 = vunpack.c.h.b16 %v3399
      %v3419 = vunpack.c.l.b16 %v3400
      %v3420 = vunpack.c.h.b16 %v3400
      %v3421 = vunpack.c.l.b16 %v3401
      %v3422 = vunpack.c.h.b16 %v3401
      %v3423 = vunpack.c.l.b16 %v3402
      %v3424 = vunpack.c.h.b16 %v3402
      %v3425 = vunpack.c.l.b16 %v3403
      %v3426 = vunpack.c.h.b16 %v3403
      %v3427 = vunpack.c.l.b16 %v3404
      %v3428 = vunpack.c.h.b16 %v3404
      %v3429 = vpack.c.b16 %v3413, %v3413
      %v3430 = vpack.c.b16 %v3414, %v3414
      %v3431 = vpack.c.b16 %v3415, %v3415
      %v3432 = vpack.c.b16 %v3416, %v3416
      %v3433 = vpack.c.b16 %v3417, %v3417
      %v3434 = vpack.c.b16 %v3418, %v3418
      %v3435 = vpack.c.b16 %v3419, %v3419
      %v3436 = vpack.c.b16 %v3420, %v3420
      %v3437 = vpack.c.b16 %v3421, %v3421
      %v3438 = vpack.c.b16 %v3422, %v3422
      %v3439 = vpack.c.b16 %v3423, %v3423
      %v3440 = vpack.c.b16 %v3424, %v3424
      %v3441 = vpack.c.b16 %v3425, %v3425
      %v3442 = vpack.c.b16 %v3426, %v3426
      %v3443 = vpack.c.b16 %v3427, %v3427
      %v3444 = vpack.c.b16 %v3428, %v3428
      %3461 = vst [vmem:[%s244] sm:$0xf] %v3429
      %3462 = vst [vmem:[%s244 + $0x4] sm:$0xf] %v3430
      %3463 = vst [vmem:[%s244 + $0x8] sm:$0xf] %v3431
      %3464 = vst [vmem:[%s244 + $0xc] sm:$0xf] %v3432
      %3465 = vst [vmem:[%s244 + $0x10] sm:$0xf] %v3433
      %3466 = vst [vmem:[%s244 + $0x14] sm:$0xf] %v3434
      %3467 = vst [vmem:[%s244 + $0x18] sm:$0xf] %v3435
      %3468 = vst [vmem:[%s244 + $0x1c] sm:$0xf] %v3436
      %3469 = vst [vmem:[%s244 + $0x20] sm:$0xf] %v3437
      %3470 = vst [vmem:[%s244 + $0x24] sm:$0xf] %v3438
      %3471 = vst [vmem:[%s244 + $0x28] sm:$0xf] %v3439
      %3472 = vst [vmem:[%s244 + $0x2c] sm:$0xf] %v3440
      %3473 = vst [vmem:[%s244 + $0x30] sm:$0xf] %v3441
      %3474 = vst [vmem:[%s244 + $0x34] sm:$0xf] %v3442
      %3475 = vst [vmem:[%s244 + $0x38] sm:$0xf] %v3443
      %3476 = vst [vmem:[%s244 + $0x3c] sm:$0xf] %v3444
      %p3477 = scmp.lt.s32.totalorder %s16, 1
      %s3478 = scalar_select %p3477, %s16, 1
      %s3479 = smul.addr %s3478, 16
      %s3480 = smul.addr %s3479, 4
      %s3481 = scalar_lea.vmem %s5, %s3480
      // Predicated region
      $region41: #{gcn_forward_pallas.1} parent=39 // pred_check
        %p3482 = pneg %p149
      $region42: #{gcn_forward_pallas.1} parent=39 // pred_check_branch
        %3484 = sbr.rel (%p3482) target = $region44
      $region43: #{gcn_forward_pallas.1} parent=39 // pred_region
        _
      $region44: #{gcn_forward_pallas.1} parent=39 // pred_fallthru
        _
    $region40: #{gcn_forward_pallas.1} parent=5 // pred_fallthru
      _
    %p3485 = scmp.le.s32.totalorder 2, %s11
    // Predicated region
    $region45: #{gcn_forward_pallas.1} parent=5 // pred_check
      %p3486 = pneg %p3485
    $region46: #{gcn_forward_pallas.1} parent=5 // pred_check_branch
      %3488 = sbr.rel (%p3486) target = $region48
    $region47: #{gcn_forward_pallas.1} parent=5 // pred_region
      %s3489 = ssub.s32 %s11, 2
      // Predicated region
      $region49: #{gcn_forward_pallas.1} parent=47 // pred_check
        %p3490 = pneg %p155
      $region50: #{gcn_forward_pallas.1} parent=47 // pred_check_branch
        %3492 = sbr.rel (%p3490) target = $region52
      $region51: #{gcn_forward_pallas.1} parent=47 // pred_region
        %p3493 = scmp.lt.s32.totalorder %s17, 1
        %s3494 = scalar_select %p3493, %s17, 1
        %s3495 = smul.addr %s3494, 16
        %s3496 = smul.addr %s3495, 4
        %s3497 = scalar_lea.vmem %s5, %s3496
      $region52: #{gcn_forward_pallas.1} parent=47 // pred_fallthru
        _
    $region48: #{gcn_forward_pallas.1} parent=5 // pred_fallthru
      _
  $region6: #{gcn_forward_pallas.1} parent=0 // loop_footer
    %s15 = sadd.s32 1, %s11
  $region7: #{gcn_forward_pallas.1} parent=0 // loop_footer_branch
    %10 = sbr.rel target = $region3
  $region8: #{gcn_forward_pallas.1} parent=0 // loop_exit
    _

</llo_original>
